<compile_context>
chip_gen: v6e
topology: v6e:2x2x1
jax: 0.10.0
libtpu: 0.0.40
codegen_flags: <defaults>
</compile_context>

<pallas_src>
import jax
import jax.numpy as jnp
from jax import lax
from jax.experimental import pallas as pl
from jax.experimental.pallas import tpu as pltpu

# clamp constants from the PyTorch module (clamp_min then clamp_max)
CLAMP_MIN_1 = 0.4226538
CLAMP_MAX_1 = 0.38730868
CLAMP_MIN_2 = 0.85527596
CLAMP_MAX_2 = 0.45974174

KH, KW = 7, 7
C_IN, C_MID, C_OUT = 3, 8, 8
STRIDE = 1
PADDING = 0
K_IM2COL = C_IN * KH * KW  # 147


def fused_conv_kernel(x_ref, w1_ref, b1_ref, w2_ref, b2_ref, o_ref):
    # x_ref : (NB, C_IN, H, W)        -- raw NCHW block (no wrapper transpose)
    # w1_ref: (C_MID, K_IM2COL)       -- w1.reshape(C_MID, -1), k = c*49+kh*7+kw
    # b1_ref: (C_MID, 1)
    # w2_ref: (C_OUT, C_MID)
    # b2_ref: (C_OUT, 1)
    # o_ref : (NB, C_OUT, Ho*Wo)      -- channel-major, lane-dense last dim
    NB = x_ref.shape[0]
    H, W = x_ref.shape[2], x_ref.shape[3]
    Ho = (H - KH) // STRIDE + 1
    Wo = (W - KW) // STRIDE + 1
    R = Ho * Wo

    x = x_ref[...]  # (NB, C_IN, H, W)

    # ---- transposed im2col: P[k=(c,kh,kw), (n,i,j)] = x[n, c, i+kh, j+kw] ----
    # 21 sublane band slices + cheap lane-offset window slices; the single big
    # reshape below is the one im2col relayout.
    patches = []
    for c in range(C_IN):
        for kh in range(KH):
            band = x[:, c, kh:kh + Ho, :]              # (NB, Ho, W), lane-dense
            for kw in range(KW):
                patches.append(band[:, :, kw:kw + Wo])  # (NB, Ho, Wo)
    p = jnp.stack(patches, axis=0)                      # (147, NB, Ho, Wo)
    p = p.reshape(K_IM2COL, NB * R)                     # (147, NB*R)

    # ---- conv1 as ONE K=147 matmul (f32 accumulation) ----
    y = jnp.dot(w1_ref[...], p, preferred_element_type=jnp.float32)  # (C_MID, NB*R)
    y = y + b1_ref[...]
    y = jnp.maximum(y, CLAMP_MIN_1)   # clamp_min
    y = jnp.minimum(y, CLAMP_MAX_1)   # clamp_max

    # ---- 1x1 conv == channel matmul ----
    z = jnp.dot(w2_ref[...], y, preferred_element_type=jnp.float32)  # (C_OUT, NB*R)
    z = z + b2_ref[...]
    z = jnp.maximum(z, CLAMP_MIN_2)
    z = jnp.minimum(z, CLAMP_MAX_2)

    # ---- lane-dense store: (C_OUT, R) slab per image ----
    for n in range(NB):
        o_ref[n] = z[:, n * R:(n + 1) * R].astype(o_ref.dtype)


def model_forward(x_nchw, w1, b1, w2, b2, *, batch_block=None):
    """x_nchw: (N, 3, H, W) float32. Returns (N, 8, Ho, Wo) float32 (NCHW)."""
    N, C, H, W = x_nchw.shape
    assert C == C_IN
    Ho = (H - KH) // STRIDE + 1
    Wo = (W - KW) // STRIDE + 1
    R = Ho * Wo

    if batch_block is None:
        # >= 2 grid steps when possible so both v7x TensorCores get work;
        # larger NB can be passed explicitly to amortize per-step overhead.
        batch_block = 1 if N >= 2 else N
    NB = batch_block
    assert N % NB == 0, "batch must be divisible by batch_block"

    # Weight/bias re-layouts are trivial (no HBM-sized transposes anywhere).
    w1_mat = w1.reshape(C_MID, K_IM2COL)     # (8, 147), k = c*49 + kh*7 + kw
    w2_mat = w2[:, :, 0, 0]                  # (C_OUT, C_MID)
    b1_col = b1.reshape(C_MID, 1)
    b2_col = b2.reshape(C_OUT, 1)

    out_flat = pl.pallas_call(
        fused_conv_kernel,
        out_shape=jax.ShapeDtypeStruct((N, C_OUT, R), jnp.float32),
        grid_spec=pltpu.PrefetchScalarGridSpec(
            num_scalar_prefetch=0,
            grid=(N // NB,),
            in_specs=[
                pl.BlockSpec((NB, C_IN, H, W), lambda n: (n, 0, 0, 0)),
                pl.BlockSpec((C_MID, K_IM2COL), lambda n: (0, 0)),
                pl.BlockSpec((C_MID, 1), lambda n: (0, 0)),
                pl.BlockSpec((C_OUT, C_MID), lambda n: (0, 0)),
                pl.BlockSpec((C_OUT, 1), lambda n: (0, 0)),
            ],
            out_specs=pl.BlockSpec((NB, C_OUT, R), lambda n: (n, 0, 0)),
        ),
        compiler_params=pltpu.CompilerParams(
            dimension_semantics=("parallel",),
            vmem_limit_bytes=64 * 1024 * 1024,
        ),
    )(x_nchw, w1_mat, b1_col, w2_mat, b2_col)

    # Free, contiguous reshape back to NCHW (no transpose).
    return out_flat.reshape(N, C_OUT, Ho, Wo)


def reference_forward(x_nchw, w1, b1, w2, b2):
    """Pure-JAX reference (NCHW, same semantics as the PyTorch module)."""
    y = lax.conv_general_dilated(
        x_nchw, w1, window_strides=(STRIDE, STRIDE), padding="VALID",
        dimension_numbers=("NCHW", "OIHW", "NCHW"))
    y = y + b1.reshape(1, C_MID, 1, 1)
    y = jnp.maximum(y, CLAMP_MIN_1)
    y = jnp.minimum(y, CLAMP_MAX_1)
    z = lax.conv_general_dilated(
        y, w2, window_strides=(1, 1), padding="VALID",
        dimension_numbers=("NCHW", "OIHW", "NCHW"))
    z = z + b2.reshape(1, C_OUT, 1, 1)
    z = jnp.maximum(z, CLAMP_MIN_2)
    z = jnp.minimum(z, CLAMP_MAX_2)
    return z


if __name__ == "__main__":
    key = jax.random.PRNGKey(0)
    k_x, k_w1, k_b1, k_w2, k_b2 = jax.random.split(key, 5)

    # small shapes consistent with the module (NCHW input, 3 in-channels)
    N, H, W = 2, 16, 16
    x = jax.random.normal(k_x, (N, C_IN, H, W), dtype=jnp.float32)

    # deterministic parameter init (PyTorch Conv2d shapes: OIHW weights, O bias)
    fan1 = C_IN * KH * KW
    w1 = jax.random.uniform(k_w1, (C_MID, C_IN, KH, KW), jnp.float32,
                            -1.0 / fan1 ** 0.5, 1.0 / fan1 ** 0.5)
    b1 = jax.random.uniform(k_b1, (C_MID,), jnp.float32,
                            -1.0 / fan1 ** 0.5, 1.0 / fan1 ** 0.5)
    fan2 = C_MID * 1 * 1
    w2 = jax.random.uniform(k_w2, (C_OUT, C_MID, 1, 1), jnp.float32,
                            -1.0 / fan2 ** 0.5, 1.0 / fan2 ** 0.5)
    b2 = jax.random.uniform(k_b2, (C_OUT,), jnp.float32,
                            -1.0 / fan2 ** 0.5, 1.0 / fan2 ** 0.5)

    out = jax.block_until_ready(model_forward(x, w1, b1, w2, b2))
    ref = jax.block_until_ready(reference_forward(x, w1, b1, w2, b2))

    assert out.shape == ref.shape == (N, C_OUT, H - KH + 1, W - KW + 1)
    assert jnp.allclose(out, ref, atol=1e-5, rtol=1e-5)

    print("KERNEL_OK")
</pallas_src>

<mosaic_0001>
module attributes {stable_mosaic.version = 11 : i64} {
  func.func @fused_conv_kernel(%arg0: i32, %arg1: memref<1x3x16x16xf32, #tpu.memory_space<vmem>>, %arg2: memref<8x147xf32, #tpu.memory_space<vmem>>, %arg3: memref<8x1xf32, #tpu.memory_space<vmem>>, %arg4: memref<8x8xf32, #tpu.memory_space<vmem>>, %arg5: memref<8x1xf32, #tpu.memory_space<vmem>>, %arg6: memref<1x8x100xf32, #tpu.memory_space<vmem>>) attributes {dimension_semantics = [#tpu.dimension_semantics<parallel>], iteration_bounds = array<i64: 2>, scalar_prefetch = 0 : i64, scratch_operands = 0 : i64, tpu.core_type = #tpu.core_type<tc>, window_params = [{transform_indices = @transform_0, window_bounds = array<i64: 1, 3, 16, 16>}, {pipeline_mode = #tpu.pipeline_mode<synchronous>, transform_indices = @transform_1, window_bounds = array<i64: 8, 147>}, {pipeline_mode = #tpu.pipeline_mode<synchronous>, transform_indices = @transform_2, window_bounds = array<i64: 8, 1>}, {pipeline_mode = #tpu.pipeline_mode<synchronous>, transform_indices = @transform_3, window_bounds = array<i64: 8, 8>}, {pipeline_mode = #tpu.pipeline_mode<synchronous>, transform_indices = @transform_4, window_bounds = array<i64: 8, 1>}, {transform_indices = @transform_5, window_bounds = array<i64: 1, 8, 100>}]} {
    %c0 = arith.constant 0 : index
    %c0_0 = arith.constant 0 : index
    %c0_1 = arith.constant 0 : index
    %c0_2 = arith.constant 0 : index
    %0 = vector.load %arg1[%c0, %c0_0, %c0_1, %c0_2] : memref<1x3x16x16xf32, #tpu.memory_space<vmem>>, vector<1x3x16x16xf32>
    %1 = vector.extract_strided_slice %0 {offsets = [0, 0, 0, 0], sizes = [1, 1, 10, 16], strides = [1, 1, 1, 1]} : vector<1x3x16x16xf32> to vector<1x1x10x16xf32>
    %2 = vector.shape_cast %1 : vector<1x1x10x16xf32> to vector<1x10x16xf32>
    %3 = vector.extract_strided_slice %2 {offsets = [0, 0, 0], sizes = [1, 10, 10], strides = [1, 1, 1]} : vector<1x10x16xf32> to vector<1x10x10xf32>
    %4 = vector.extract_strided_slice %2 {offsets = [0, 0, 1], sizes = [1, 10, 10], strides = [1, 1, 1]} : vector<1x10x16xf32> to vector<1x10x10xf32>
    %5 = vector.extract_strided_slice %2 {offsets = [0, 0, 2], sizes = [1, 10, 10], strides = [1, 1, 1]} : vector<1x10x16xf32> to vector<1x10x10xf32>
    %6 = vector.extract_strided_slice %2 {offsets = [0, 0, 3], sizes = [1, 10, 10], strides = [1, 1, 1]} : vector<1x10x16xf32> to vector<1x10x10xf32>
    %7 = vector.extract_strided_slice %2 {offsets = [0, 0, 4], sizes = [1, 10, 10], strides = [1, 1, 1]} : vector<1x10x16xf32> to vector<1x10x10xf32>
    %8 = vector.extract_strided_slice %2 {offsets = [0, 0, 5], sizes = [1, 10, 10], strides = [1, 1, 1]} : vector<1x10x16xf32> to vector<1x10x10xf32>
    %9 = vector.extract_strided_slice %2 {offsets = [0, 0, 6], sizes = [1, 10, 10], strides = [1, 1, 1]} : vector<1x10x16xf32> to vector<1x10x10xf32>
    %10 = vector.extract_strided_slice %0 {offsets = [0, 0, 1, 0], sizes = [1, 1, 10, 16], strides = [1, 1, 1, 1]} : vector<1x3x16x16xf32> to vector<1x1x10x16xf32>
    %11 = vector.shape_cast %10 : vector<1x1x10x16xf32> to vector<1x10x16xf32>
    %12 = vector.extract_strided_slice %11 {offsets = [0, 0, 0], sizes = [1, 10, 10], strides = [1, 1, 1]} : vector<1x10x16xf32> to vector<1x10x10xf32>
    %13 = vector.extract_strided_slice %11 {offsets = [0, 0, 1], sizes = [1, 10, 10], strides = [1, 1, 1]} : vector<1x10x16xf32> to vector<1x10x10xf32>
    %14 = vector.extract_strided_slice %11 {offsets = [0, 0, 2], sizes = [1, 10, 10], strides = [1, 1, 1]} : vector<1x10x16xf32> to vector<1x10x10xf32>
    %15 = vector.extract_strided_slice %11 {offsets = [0, 0, 3], sizes = [1, 10, 10], strides = [1, 1, 1]} : vector<1x10x16xf32> to vector<1x10x10xf32>
    %16 = vector.extract_strided_slice %11 {offsets = [0, 0, 4], sizes = [1, 10, 10], strides = [1, 1, 1]} : vector<1x10x16xf32> to vector<1x10x10xf32>
    %17 = vector.extract_strided_slice %11 {offsets = [0, 0, 5], sizes = [1, 10, 10], strides = [1, 1, 1]} : vector<1x10x16xf32> to vector<1x10x10xf32>
    %18 = vector.extract_strided_slice %11 {offsets = [0, 0, 6], sizes = [1, 10, 10], strides = [1, 1, 1]} : vector<1x10x16xf32> to vector<1x10x10xf32>
    %19 = vector.extract_strided_slice %0 {offsets = [0, 0, 2, 0], sizes = [1, 1, 10, 16], strides = [1, 1, 1, 1]} : vector<1x3x16x16xf32> to vector<1x1x10x16xf32>
    %20 = vector.shape_cast %19 : vector<1x1x10x16xf32> to vector<1x10x16xf32>
    %21 = vector.extract_strided_slice %20 {offsets = [0, 0, 0], sizes = [1, 10, 10], strides = [1, 1, 1]} : vector<1x10x16xf32> to vector<1x10x10xf32>
    %22 = vector.extract_strided_slice %20 {offsets = [0, 0, 1], sizes = [1, 10, 10], strides = [1, 1, 1]} : vector<1x10x16xf32> to vector<1x10x10xf32>
    %23 = vector.extract_strided_slice %20 {offsets = [0, 0, 2], sizes = [1, 10, 10], strides = [1, 1, 1]} : vector<1x10x16xf32> to vector<1x10x10xf32>
    %24 = vector.extract_strided_slice %20 {offsets = [0, 0, 3], sizes = [1, 10, 10], strides = [1, 1, 1]} : vector<1x10x16xf32> to vector<1x10x10xf32>
    %25 = vector.extract_strided_slice %20 {offsets = [0, 0, 4], sizes = [1, 10, 10], strides = [1, 1, 1]} : vector<1x10x16xf32> to vector<1x10x10xf32>
    %26 = vector.extract_strided_slice %20 {offsets = [0, 0, 5], sizes = [1, 10, 10], strides = [1, 1, 1]} : vector<1x10x16xf32> to vector<1x10x10xf32>
    %27 = vector.extract_strided_slice %20 {offsets = [0, 0, 6], sizes = [1, 10, 10], strides = [1, 1, 1]} : vector<1x10x16xf32> to vector<1x10x10xf32>
    %28 = vector.extract_strided_slice %0 {offsets = [0, 0, 3, 0], sizes = [1, 1, 10, 16], strides = [1, 1, 1, 1]} : vector<1x3x16x16xf32> to vector<1x1x10x16xf32>
    %29 = vector.shape_cast %28 : vector<1x1x10x16xf32> to vector<1x10x16xf32>
    %30 = vector.extract_strided_slice %29 {offsets = [0, 0, 0], sizes = [1, 10, 10], strides = [1, 1, 1]} : vector<1x10x16xf32> to vector<1x10x10xf32>
    %31 = vector.extract_strided_slice %29 {offsets = [0, 0, 1], sizes = [1, 10, 10], strides = [1, 1, 1]} : vector<1x10x16xf32> to vector<1x10x10xf32>
    %32 = vector.extract_strided_slice %29 {offsets = [0, 0, 2], sizes = [1, 10, 10], strides = [1, 1, 1]} : vector<1x10x16xf32> to vector<1x10x10xf32>
    %33 = vector.extract_strided_slice %29 {offsets = [0, 0, 3], sizes = [1, 10, 10], strides = [1, 1, 1]} : vector<1x10x16xf32> to vector<1x10x10xf32>
    %34 = vector.extract_strided_slice %29 {offsets = [0, 0, 4], sizes = [1, 10, 10], strides = [1, 1, 1]} : vector<1x10x16xf32> to vector<1x10x10xf32>
    %35 = vector.extract_strided_slice %29 {offsets = [0, 0, 5], sizes = [1, 10, 10], strides = [1, 1, 1]} : vector<1x10x16xf32> to vector<1x10x10xf32>
    %36 = vector.extract_strided_slice %29 {offsets = [0, 0, 6], sizes = [1, 10, 10], strides = [1, 1, 1]} : vector<1x10x16xf32> to vector<1x10x10xf32>
    %37 = vector.extract_strided_slice %0 {offsets = [0, 0, 4, 0], sizes = [1, 1, 10, 16], strides = [1, 1, 1, 1]} : vector<1x3x16x16xf32> to vector<1x1x10x16xf32>
    %38 = vector.shape_cast %37 : vector<1x1x10x16xf32> to vector<1x10x16xf32>
    %39 = vector.extract_strided_slice %38 {offsets = [0, 0, 0], sizes = [1, 10, 10], strides = [1, 1, 1]} : vector<1x10x16xf32> to vector<1x10x10xf32>
    %40 = vector.extract_strided_slice %38 {offsets = [0, 0, 1], sizes = [1, 10, 10], strides = [1, 1, 1]} : vector<1x10x16xf32> to vector<1x10x10xf32>
    %41 = vector.extract_strided_slice %38 {offsets = [0, 0, 2], sizes = [1, 10, 10], strides = [1, 1, 1]} : vector<1x10x16xf32> to vector<1x10x10xf32>
    %42 = vector.extract_strided_slice %38 {offsets = [0, 0, 3], sizes = [1, 10, 10], strides = [1, 1, 1]} : vector<1x10x16xf32> to vector<1x10x10xf32>
    %43 = vector.extract_strided_slice %38 {offsets = [0, 0, 4], sizes = [1, 10, 10], strides = [1, 1, 1]} : vector<1x10x16xf32> to vector<1x10x10xf32>
    %44 = vector.extract_strided_slice %38 {offsets = [0, 0, 5], sizes = [1, 10, 10], strides = [1, 1, 1]} : vector<1x10x16xf32> to vector<1x10x10xf32>
    %45 = vector.extract_strided_slice %38 {offsets = [0, 0, 6], sizes = [1, 10, 10], strides = [1, 1, 1]} : vector<1x10x16xf32> to vector<1x10x10xf32>
    %46 = vector.extract_strided_slice %0 {offsets = [0, 0, 5, 0], sizes = [1, 1, 10, 16], strides = [1, 1, 1, 1]} : vector<1x3x16x16xf32> to vector<1x1x10x16xf32>
    %47 = vector.shape_cast %46 : vector<1x1x10x16xf32> to vector<1x10x16xf32>
    %48 = vector.extract_strided_slice %47 {offsets = [0, 0, 0], sizes = [1, 10, 10], strides = [1, 1, 1]} : vector<1x10x16xf32> to vector<1x10x10xf32>
    %49 = vector.extract_strided_slice %47 {offsets = [0, 0, 1], sizes = [1, 10, 10], strides = [1, 1, 1]} : vector<1x10x16xf32> to vector<1x10x10xf32>
    %50 = vector.extract_strided_slice %47 {offsets = [0, 0, 2], sizes = [1, 10, 10], strides = [1, 1, 1]} : vector<1x10x16xf32> to vector<1x10x10xf32>
    %51 = vector.extract_strided_slice %47 {offsets = [0, 0, 3], sizes = [1, 10, 10], strides = [1, 1, 1]} : vector<1x10x16xf32> to vector<1x10x10xf32>
    %52 = vector.extract_strided_slice %47 {offsets = [0, 0, 4], sizes = [1, 10, 10], strides = [1, 1, 1]} : vector<1x10x16xf32> to vector<1x10x10xf32>
    %53 = vector.extract_strided_slice %47 {offsets = [0, 0, 5], sizes = [1, 10, 10], strides = [1, 1, 1]} : vector<1x10x16xf32> to vector<1x10x10xf32>
    %54 = vector.extract_strided_slice %47 {offsets = [0, 0, 6], sizes = [1, 10, 10], strides = [1, 1, 1]} : vector<1x10x16xf32> to vector<1x10x10xf32>
    %55 = vector.extract_strided_slice %0 {offsets = [0, 0, 6, 0], sizes = [1, 1, 10, 16], strides = [1, 1, 1, 1]} : vector<1x3x16x16xf32> to vector<1x1x10x16xf32>
    %56 = vector.shape_cast %55 : vector<1x1x10x16xf32> to vector<1x10x16xf32>
    %57 = vector.extract_strided_slice %56 {offsets = [0, 0, 0], sizes = [1, 10, 10], strides = [1, 1, 1]} : vector<1x10x16xf32> to vector<1x10x10xf32>
    %58 = vector.extract_strided_slice %56 {offsets = [0, 0, 1], sizes = [1, 10, 10], strides = [1, 1, 1]} : vector<1x10x16xf32> to vector<1x10x10xf32>
    %59 = vector.extract_strided_slice %56 {offsets = [0, 0, 2], sizes = [1, 10, 10], strides = [1, 1, 1]} : vector<1x10x16xf32> to vector<1x10x10xf32>
    %60 = vector.extract_strided_slice %56 {offsets = [0, 0, 3], sizes = [1, 10, 10], strides = [1, 1, 1]} : vector<1x10x16xf32> to vector<1x10x10xf32>
    %61 = vector.extract_strided_slice %56 {offsets = [0, 0, 4], sizes = [1, 10, 10], strides = [1, 1, 1]} : vector<1x10x16xf32> to vector<1x10x10xf32>
    %62 = vector.extract_strided_slice %56 {offsets = [0, 0, 5], sizes = [1, 10, 10], strides = [1, 1, 1]} : vector<1x10x16xf32> to vector<1x10x10xf32>
    %63 = vector.extract_strided_slice %56 {offsets = [0, 0, 6], sizes = [1, 10, 10], strides = [1, 1, 1]} : vector<1x10x16xf32> to vector<1x10x10xf32>
    %64 = vector.extract_strided_slice %0 {offsets = [0, 1, 0, 0], sizes = [1, 1, 10, 16], strides = [1, 1, 1, 1]} : vector<1x3x16x16xf32> to vector<1x1x10x16xf32>
    %65 = vector.shape_cast %64 : vector<1x1x10x16xf32> to vector<1x10x16xf32>
    %66 = vector.extract_strided_slice %65 {offsets = [0, 0, 0], sizes = [1, 10, 10], strides = [1, 1, 1]} : vector<1x10x16xf32> to vector<1x10x10xf32>
    %67 = vector.extract_strided_slice %65 {offsets = [0, 0, 1], sizes = [1, 10, 10], strides = [1, 1, 1]} : vector<1x10x16xf32> to vector<1x10x10xf32>
    %68 = vector.extract_strided_slice %65 {offsets = [0, 0, 2], sizes = [1, 10, 10], strides = [1, 1, 1]} : vector<1x10x16xf32> to vector<1x10x10xf32>
    %69 = vector.extract_strided_slice %65 {offsets = [0, 0, 3], sizes = [1, 10, 10], strides = [1, 1, 1]} : vector<1x10x16xf32> to vector<1x10x10xf32>
    %70 = vector.extract_strided_slice %65 {offsets = [0, 0, 4], sizes = [1, 10, 10], strides = [1, 1, 1]} : vector<1x10x16xf32> to vector<1x10x10xf32>
    %71 = vector.extract_strided_slice %65 {offsets = [0, 0, 5], sizes = [1, 10, 10], strides = [1, 1, 1]} : vector<1x10x16xf32> to vector<1x10x10xf32>
    %72 = vector.extract_strided_slice %65 {offsets = [0, 0, 6], sizes = [1, 10, 10], strides = [1, 1, 1]} : vector<1x10x16xf32> to vector<1x10x10xf32>
    %73 = vector.extract_strided_slice %0 {offsets = [0, 1, 1, 0], sizes = [1, 1, 10, 16], strides = [1, 1, 1, 1]} : vector<1x3x16x16xf32> to vector<1x1x10x16xf32>
    %74 = vector.shape_cast %73 : vector<1x1x10x16xf32> to vector<1x10x16xf32>
    %75 = vector.extract_strided_slice %74 {offsets = [0, 0, 0], sizes = [1, 10, 10], strides = [1, 1, 1]} : vector<1x10x16xf32> to vector<1x10x10xf32>
    %76 = vector.extract_strided_slice %74 {offsets = [0, 0, 1], sizes = [1, 10, 10], strides = [1, 1, 1]} : vector<1x10x16xf32> to vector<1x10x10xf32>
    %77 = vector.extract_strided_slice %74 {offsets = [0, 0, 2], sizes = [1, 10, 10], strides = [1, 1, 1]} : vector<1x10x16xf32> to vector<1x10x10xf32>
    %78 = vector.extract_strided_slice %74 {offsets = [0, 0, 3], sizes = [1, 10, 10], strides = [1, 1, 1]} : vector<1x10x16xf32> to vector<1x10x10xf32>
    %79 = vector.extract_strided_slice %74 {offsets = [0, 0, 4], sizes = [1, 10, 10], strides = [1, 1, 1]} : vector<1x10x16xf32> to vector<1x10x10xf32>
    %80 = vector.extract_strided_slice %74 {offsets = [0, 0, 5], sizes = [1, 10, 10], strides = [1, 1, 1]} : vector<1x10x16xf32> to vector<1x10x10xf32>
    %81 = vector.extract_strided_slice %74 {offsets = [0, 0, 6], sizes = [1, 10, 10], strides = [1, 1, 1]} : vector<1x10x16xf32> to vector<1x10x10xf32>
    %82 = vector.extract_strided_slice %0 {offsets = [0, 1, 2, 0], sizes = [1, 1, 10, 16], strides = [1, 1, 1, 1]} : vector<1x3x16x16xf32> to vector<1x1x10x16xf32>
    %83 = vector.shape_cast %82 : vector<1x1x10x16xf32> to vector<1x10x16xf32>
    %84 = vector.extract_strided_slice %83 {offsets = [0, 0, 0], sizes = [1, 10, 10], strides = [1, 1, 1]} : vector<1x10x16xf32> to vector<1x10x10xf32>
    %85 = vector.extract_strided_slice %83 {offsets = [0, 0, 1], sizes = [1, 10, 10], strides = [1, 1, 1]} : vector<1x10x16xf32> to vector<1x10x10xf32>
    %86 = vector.extract_strided_slice %83 {offsets = [0, 0, 2], sizes = [1, 10, 10], strides = [1, 1, 1]} : vector<1x10x16xf32> to vector<1x10x10xf32>
    %87 = vector.extract_strided_slice %83 {offsets = [0, 0, 3], sizes = [1, 10, 10], strides = [1, 1, 1]} : vector<1x10x16xf32> to vector<1x10x10xf32>
    %88 = vector.extract_strided_slice %83 {offsets = [0, 0, 4], sizes = [1, 10, 10], strides = [1, 1, 1]} : vector<1x10x16xf32> to vector<1x10x10xf32>
    %89 = vector.extract_strided_slice %83 {offsets = [0, 0, 5], sizes = [1, 10, 10], strides = [1, 1, 1]} : vector<1x10x16xf32> to vector<1x10x10xf32>
    %90 = vector.extract_strided_slice %83 {offsets = [0, 0, 6], sizes = [1, 10, 10], strides = [1, 1, 1]} : vector<1x10x16xf32> to vector<1x10x10xf32>
    %91 = vector.extract_strided_slice %0 {offsets = [0, 1, 3, 0], sizes = [1, 1, 10, 16], strides = [1, 1, 1, 1]} : vector<1x3x16x16xf32> to vector<1x1x10x16xf32>
    %92 = vector.shape_cast %91 : vector<1x1x10x16xf32> to vector<1x10x16xf32>
    %93 = vector.extract_strided_slice %92 {offsets = [0, 0, 0], sizes = [1, 10, 10], strides = [1, 1, 1]} : vector<1x10x16xf32> to vector<1x10x10xf32>
    %94 = vector.extract_strided_slice %92 {offsets = [0, 0, 1], sizes = [1, 10, 10], strides = [1, 1, 1]} : vector<1x10x16xf32> to vector<1x10x10xf32>
    %95 = vector.extract_strided_slice %92 {offsets = [0, 0, 2], sizes = [1, 10, 10], strides = [1, 1, 1]} : vector<1x10x16xf32> to vector<1x10x10xf32>
    %96 = vector.extract_strided_slice %92 {offsets = [0, 0, 3], sizes = [1, 10, 10], strides = [1, 1, 1]} : vector<1x10x16xf32> to vector<1x10x10xf32>
    %97 = vector.extract_strided_slice %92 {offsets = [0, 0, 4], sizes = [1, 10, 10], strides = [1, 1, 1]} : vector<1x10x16xf32> to vector<1x10x10xf32>
    %98 = vector.extract_strided_slice %92 {offsets = [0, 0, 5], sizes = [1, 10, 10], strides = [1, 1, 1]} : vector<1x10x16xf32> to vector<1x10x10xf32>
    %99 = vector.extract_strided_slice %92 {offsets = [0, 0, 6], sizes = [1, 10, 10], strides = [1, 1, 1]} : vector<1x10x16xf32> to vector<1x10x10xf32>
    %100 = vector.extract_strided_slice %0 {offsets = [0, 1, 4, 0], sizes = [1, 1, 10, 16], strides = [1, 1, 1, 1]} : vector<1x3x16x16xf32> to vector<1x1x10x16xf32>
    %101 = vector.shape_cast %100 : vector<1x1x10x16xf32> to vector<1x10x16xf32>
    %102 = vector.extract_strided_slice %101 {offsets = [0, 0, 0], sizes = [1, 10, 10], strides = [1, 1, 1]} : vector<1x10x16xf32> to vector<1x10x10xf32>
    %103 = vector.extract_strided_slice %101 {offsets = [0, 0, 1], sizes = [1, 10, 10], strides = [1, 1, 1]} : vector<1x10x16xf32> to vector<1x10x10xf32>
    %104 = vector.extract_strided_slice %101 {offsets = [0, 0, 2], sizes = [1, 10, 10], strides = [1, 1, 1]} : vector<1x10x16xf32> to vector<1x10x10xf32>
    %105 = vector.extract_strided_slice %101 {offsets = [0, 0, 3], sizes = [1, 10, 10], strides = [1, 1, 1]} : vector<1x10x16xf32> to vector<1x10x10xf32>
    %106 = vector.extract_strided_slice %101 {offsets = [0, 0, 4], sizes = [1, 10, 10], strides = [1, 1, 1]} : vector<1x10x16xf32> to vector<1x10x10xf32>
    %107 = vector.extract_strided_slice %101 {offsets = [0, 0, 5], sizes = [1, 10, 10], strides = [1, 1, 1]} : vector<1x10x16xf32> to vector<1x10x10xf32>
    %108 = vector.extract_strided_slice %101 {offsets = [0, 0, 6], sizes = [1, 10, 10], strides = [1, 1, 1]} : vector<1x10x16xf32> to vector<1x10x10xf32>
    %109 = vector.extract_strided_slice %0 {offsets = [0, 1, 5, 0], sizes = [1, 1, 10, 16], strides = [1, 1, 1, 1]} : vector<1x3x16x16xf32> to vector<1x1x10x16xf32>
    %110 = vector.shape_cast %109 : vector<1x1x10x16xf32> to vector<1x10x16xf32>
    %111 = vector.extract_strided_slice %110 {offsets = [0, 0, 0], sizes = [1, 10, 10], strides = [1, 1, 1]} : vector<1x10x16xf32> to vector<1x10x10xf32>
    %112 = vector.extract_strided_slice %110 {offsets = [0, 0, 1], sizes = [1, 10, 10], strides = [1, 1, 1]} : vector<1x10x16xf32> to vector<1x10x10xf32>
    %113 = vector.extract_strided_slice %110 {offsets = [0, 0, 2], sizes = [1, 10, 10], strides = [1, 1, 1]} : vector<1x10x16xf32> to vector<1x10x10xf32>
    %114 = vector.extract_strided_slice %110 {offsets = [0, 0, 3], sizes = [1, 10, 10], strides = [1, 1, 1]} : vector<1x10x16xf32> to vector<1x10x10xf32>
    %115 = vector.extract_strided_slice %110 {offsets = [0, 0, 4], sizes = [1, 10, 10], strides = [1, 1, 1]} : vector<1x10x16xf32> to vector<1x10x10xf32>
    %116 = vector.extract_strided_slice %110 {offsets = [0, 0, 5], sizes = [1, 10, 10], strides = [1, 1, 1]} : vector<1x10x16xf32> to vector<1x10x10xf32>
    %117 = vector.extract_strided_slice %110 {offsets = [0, 0, 6], sizes = [1, 10, 10], strides = [1, 1, 1]} : vector<1x10x16xf32> to vector<1x10x10xf32>
    %118 = vector.extract_strided_slice %0 {offsets = [0, 1, 6, 0], sizes = [1, 1, 10, 16], strides = [1, 1, 1, 1]} : vector<1x3x16x16xf32> to vector<1x1x10x16xf32>
    %119 = vector.shape_cast %118 : vector<1x1x10x16xf32> to vector<1x10x16xf32>
    %120 = vector.extract_strided_slice %119 {offsets = [0, 0, 0], sizes = [1, 10, 10], strides = [1, 1, 1]} : vector<1x10x16xf32> to vector<1x10x10xf32>
    %121 = vector.extract_strided_slice %119 {offsets = [0, 0, 1], sizes = [1, 10, 10], strides = [1, 1, 1]} : vector<1x10x16xf32> to vector<1x10x10xf32>
    %122 = vector.extract_strided_slice %119 {offsets = [0, 0, 2], sizes = [1, 10, 10], strides = [1, 1, 1]} : vector<1x10x16xf32> to vector<1x10x10xf32>
    %123 = vector.extract_strided_slice %119 {offsets = [0, 0, 3], sizes = [1, 10, 10], strides = [1, 1, 1]} : vector<1x10x16xf32> to vector<1x10x10xf32>
    %124 = vector.extract_strided_slice %119 {offsets = [0, 0, 4], sizes = [1, 10, 10], strides = [1, 1, 1]} : vector<1x10x16xf32> to vector<1x10x10xf32>
    %125 = vector.extract_strided_slice %119 {offsets = [0, 0, 5], sizes = [1, 10, 10], strides = [1, 1, 1]} : vector<1x10x16xf32> to vector<1x10x10xf32>
    %126 = vector.extract_strided_slice %119 {offsets = [0, 0, 6], sizes = [1, 10, 10], strides = [1, 1, 1]} : vector<1x10x16xf32> to vector<1x10x10xf32>
    %127 = vector.extract_strided_slice %0 {offsets = [0, 2, 0, 0], sizes = [1, 1, 10, 16], strides = [1, 1, 1, 1]} : vector<1x3x16x16xf32> to vector<1x1x10x16xf32>
    %128 = vector.shape_cast %127 : vector<1x1x10x16xf32> to vector<1x10x16xf32>
    %129 = vector.extract_strided_slice %128 {offsets = [0, 0, 0], sizes = [1, 10, 10], strides = [1, 1, 1]} : vector<1x10x16xf32> to vector<1x10x10xf32>
    %130 = vector.extract_strided_slice %128 {offsets = [0, 0, 1], sizes = [1, 10, 10], strides = [1, 1, 1]} : vector<1x10x16xf32> to vector<1x10x10xf32>
    %131 = vector.extract_strided_slice %128 {offsets = [0, 0, 2], sizes = [1, 10, 10], strides = [1, 1, 1]} : vector<1x10x16xf32> to vector<1x10x10xf32>
    %132 = vector.extract_strided_slice %128 {offsets = [0, 0, 3], sizes = [1, 10, 10], strides = [1, 1, 1]} : vector<1x10x16xf32> to vector<1x10x10xf32>
    %133 = vector.extract_strided_slice %128 {offsets = [0, 0, 4], sizes = [1, 10, 10], strides = [1, 1, 1]} : vector<1x10x16xf32> to vector<1x10x10xf32>
    %134 = vector.extract_strided_slice %128 {offsets = [0, 0, 5], sizes = [1, 10, 10], strides = [1, 1, 1]} : vector<1x10x16xf32> to vector<1x10x10xf32>
    %135 = vector.extract_strided_slice %128 {offsets = [0, 0, 6], sizes = [1, 10, 10], strides = [1, 1, 1]} : vector<1x10x16xf32> to vector<1x10x10xf32>
    %136 = vector.extract_strided_slice %0 {offsets = [0, 2, 1, 0], sizes = [1, 1, 10, 16], strides = [1, 1, 1, 1]} : vector<1x3x16x16xf32> to vector<1x1x10x16xf32>
    %137 = vector.shape_cast %136 : vector<1x1x10x16xf32> to vector<1x10x16xf32>
    %138 = vector.extract_strided_slice %137 {offsets = [0, 0, 0], sizes = [1, 10, 10], strides = [1, 1, 1]} : vector<1x10x16xf32> to vector<1x10x10xf32>
    %139 = vector.extract_strided_slice %137 {offsets = [0, 0, 1], sizes = [1, 10, 10], strides = [1, 1, 1]} : vector<1x10x16xf32> to vector<1x10x10xf32>
    %140 = vector.extract_strided_slice %137 {offsets = [0, 0, 2], sizes = [1, 10, 10], strides = [1, 1, 1]} : vector<1x10x16xf32> to vector<1x10x10xf32>
    %141 = vector.extract_strided_slice %137 {offsets = [0, 0, 3], sizes = [1, 10, 10], strides = [1, 1, 1]} : vector<1x10x16xf32> to vector<1x10x10xf32>
    %142 = vector.extract_strided_slice %137 {offsets = [0, 0, 4], sizes = [1, 10, 10], strides = [1, 1, 1]} : vector<1x10x16xf32> to vector<1x10x10xf32>
    %143 = vector.extract_strided_slice %137 {offsets = [0, 0, 5], sizes = [1, 10, 10], strides = [1, 1, 1]} : vector<1x10x16xf32> to vector<1x10x10xf32>
    %144 = vector.extract_strided_slice %137 {offsets = [0, 0, 6], sizes = [1, 10, 10], strides = [1, 1, 1]} : vector<1x10x16xf32> to vector<1x10x10xf32>
    %145 = vector.extract_strided_slice %0 {offsets = [0, 2, 2, 0], sizes = [1, 1, 10, 16], strides = [1, 1, 1, 1]} : vector<1x3x16x16xf32> to vector<1x1x10x16xf32>
    %146 = vector.shape_cast %145 : vector<1x1x10x16xf32> to vector<1x10x16xf32>
    %147 = vector.extract_strided_slice %146 {offsets = [0, 0, 0], sizes = [1, 10, 10], strides = [1, 1, 1]} : vector<1x10x16xf32> to vector<1x10x10xf32>
    %148 = vector.extract_strided_slice %146 {offsets = [0, 0, 1], sizes = [1, 10, 10], strides = [1, 1, 1]} : vector<1x10x16xf32> to vector<1x10x10xf32>
    %149 = vector.extract_strided_slice %146 {offsets = [0, 0, 2], sizes = [1, 10, 10], strides = [1, 1, 1]} : vector<1x10x16xf32> to vector<1x10x10xf32>
    %150 = vector.extract_strided_slice %146 {offsets = [0, 0, 3], sizes = [1, 10, 10], strides = [1, 1, 1]} : vector<1x10x16xf32> to vector<1x10x10xf32>
    %151 = vector.extract_strided_slice %146 {offsets = [0, 0, 4], sizes = [1, 10, 10], strides = [1, 1, 1]} : vector<1x10x16xf32> to vector<1x10x10xf32>
    %152 = vector.extract_strided_slice %146 {offsets = [0, 0, 5], sizes = [1, 10, 10], strides = [1, 1, 1]} : vector<1x10x16xf32> to vector<1x10x10xf32>
    %153 = vector.extract_strided_slice %146 {offsets = [0, 0, 6], sizes = [1, 10, 10], strides = [1, 1, 1]} : vector<1x10x16xf32> to vector<1x10x10xf32>
    %154 = vector.extract_strided_slice %0 {offsets = [0, 2, 3, 0], sizes = [1, 1, 10, 16], strides = [1, 1, 1, 1]} : vector<1x3x16x16xf32> to vector<1x1x10x16xf32>
    %155 = vector.shape_cast %154 : vector<1x1x10x16xf32> to vector<1x10x16xf32>
    %156 = vector.extract_strided_slice %155 {offsets = [0, 0, 0], sizes = [1, 10, 10], strides = [1, 1, 1]} : vector<1x10x16xf32> to vector<1x10x10xf32>
    %157 = vector.extract_strided_slice %155 {offsets = [0, 0, 1], sizes = [1, 10, 10], strides = [1, 1, 1]} : vector<1x10x16xf32> to vector<1x10x10xf32>
    %158 = vector.extract_strided_slice %155 {offsets = [0, 0, 2], sizes = [1, 10, 10], strides = [1, 1, 1]} : vector<1x10x16xf32> to vector<1x10x10xf32>
    %159 = vector.extract_strided_slice %155 {offsets = [0, 0, 3], sizes = [1, 10, 10], strides = [1, 1, 1]} : vector<1x10x16xf32> to vector<1x10x10xf32>
    %160 = vector.extract_strided_slice %155 {offsets = [0, 0, 4], sizes = [1, 10, 10], strides = [1, 1, 1]} : vector<1x10x16xf32> to vector<1x10x10xf32>
    %161 = vector.extract_strided_slice %155 {offsets = [0, 0, 5], sizes = [1, 10, 10], strides = [1, 1, 1]} : vector<1x10x16xf32> to vector<1x10x10xf32>
    %162 = vector.extract_strided_slice %155 {offsets = [0, 0, 6], sizes = [1, 10, 10], strides = [1, 1, 1]} : vector<1x10x16xf32> to vector<1x10x10xf32>
    %163 = vector.extract_strided_slice %0 {offsets = [0, 2, 4, 0], sizes = [1, 1, 10, 16], strides = [1, 1, 1, 1]} : vector<1x3x16x16xf32> to vector<1x1x10x16xf32>
    %164 = vector.shape_cast %163 : vector<1x1x10x16xf32> to vector<1x10x16xf32>
    %165 = vector.extract_strided_slice %164 {offsets = [0, 0, 0], sizes = [1, 10, 10], strides = [1, 1, 1]} : vector<1x10x16xf32> to vector<1x10x10xf32>
    %166 = vector.extract_strided_slice %164 {offsets = [0, 0, 1], sizes = [1, 10, 10], strides = [1, 1, 1]} : vector<1x10x16xf32> to vector<1x10x10xf32>
    %167 = vector.extract_strided_slice %164 {offsets = [0, 0, 2], sizes = [1, 10, 10], strides = [1, 1, 1]} : vector<1x10x16xf32> to vector<1x10x10xf32>
    %168 = vector.extract_strided_slice %164 {offsets = [0, 0, 3], sizes = [1, 10, 10], strides = [1, 1, 1]} : vector<1x10x16xf32> to vector<1x10x10xf32>
    %169 = vector.extract_strided_slice %164 {offsets = [0, 0, 4], sizes = [1, 10, 10], strides = [1, 1, 1]} : vector<1x10x16xf32> to vector<1x10x10xf32>
    %170 = vector.extract_strided_slice %164 {offsets = [0, 0, 5], sizes = [1, 10, 10], strides = [1, 1, 1]} : vector<1x10x16xf32> to vector<1x10x10xf32>
    %171 = vector.extract_strided_slice %164 {offsets = [0, 0, 6], sizes = [1, 10, 10], strides = [1, 1, 1]} : vector<1x10x16xf32> to vector<1x10x10xf32>
    %172 = vector.extract_strided_slice %0 {offsets = [0, 2, 5, 0], sizes = [1, 1, 10, 16], strides = [1, 1, 1, 1]} : vector<1x3x16x16xf32> to vector<1x1x10x16xf32>
    %173 = vector.shape_cast %172 : vector<1x1x10x16xf32> to vector<1x10x16xf32>
    %174 = vector.extract_strided_slice %173 {offsets = [0, 0, 0], sizes = [1, 10, 10], strides = [1, 1, 1]} : vector<1x10x16xf32> to vector<1x10x10xf32>
    %175 = vector.extract_strided_slice %173 {offsets = [0, 0, 1], sizes = [1, 10, 10], strides = [1, 1, 1]} : vector<1x10x16xf32> to vector<1x10x10xf32>
    %176 = vector.extract_strided_slice %173 {offsets = [0, 0, 2], sizes = [1, 10, 10], strides = [1, 1, 1]} : vector<1x10x16xf32> to vector<1x10x10xf32>
    %177 = vector.extract_strided_slice %173 {offsets = [0, 0, 3], sizes = [1, 10, 10], strides = [1, 1, 1]} : vector<1x10x16xf32> to vector<1x10x10xf32>
    %178 = vector.extract_strided_slice %173 {offsets = [0, 0, 4], sizes = [1, 10, 10], strides = [1, 1, 1]} : vector<1x10x16xf32> to vector<1x10x10xf32>
    %179 = vector.extract_strided_slice %173 {offsets = [0, 0, 5], sizes = [1, 10, 10], strides = [1, 1, 1]} : vector<1x10x16xf32> to vector<1x10x10xf32>
    %180 = vector.extract_strided_slice %173 {offsets = [0, 0, 6], sizes = [1, 10, 10], strides = [1, 1, 1]} : vector<1x10x16xf32> to vector<1x10x10xf32>
    %181 = vector.extract_strided_slice %0 {offsets = [0, 2, 6, 0], sizes = [1, 1, 10, 16], strides = [1, 1, 1, 1]} : vector<1x3x16x16xf32> to vector<1x1x10x16xf32>
    %182 = vector.shape_cast %181 : vector<1x1x10x16xf32> to vector<1x10x16xf32>
    %183 = vector.extract_strided_slice %182 {offsets = [0, 0, 0], sizes = [1, 10, 10], strides = [1, 1, 1]} : vector<1x10x16xf32> to vector<1x10x10xf32>
    %184 = vector.extract_strided_slice %182 {offsets = [0, 0, 1], sizes = [1, 10, 10], strides = [1, 1, 1]} : vector<1x10x16xf32> to vector<1x10x10xf32>
    %185 = vector.extract_strided_slice %182 {offsets = [0, 0, 2], sizes = [1, 10, 10], strides = [1, 1, 1]} : vector<1x10x16xf32> to vector<1x10x10xf32>
    %186 = vector.extract_strided_slice %182 {offsets = [0, 0, 3], sizes = [1, 10, 10], strides = [1, 1, 1]} : vector<1x10x16xf32> to vector<1x10x10xf32>
    %187 = vector.extract_strided_slice %182 {offsets = [0, 0, 4], sizes = [1, 10, 10], strides = [1, 1, 1]} : vector<1x10x16xf32> to vector<1x10x10xf32>
    %188 = vector.extract_strided_slice %182 {offsets = [0, 0, 5], sizes = [1, 10, 10], strides = [1, 1, 1]} : vector<1x10x16xf32> to vector<1x10x10xf32>
    %189 = vector.extract_strided_slice %182 {offsets = [0, 0, 6], sizes = [1, 10, 10], strides = [1, 1, 1]} : vector<1x10x16xf32> to vector<1x10x10xf32>
    %190 = vector.shape_cast %3 : vector<1x10x10xf32> to vector<1x1x10x10xf32>
    %191 = vector.shape_cast %4 : vector<1x10x10xf32> to vector<1x1x10x10xf32>
    %192 = vector.shape_cast %5 : vector<1x10x10xf32> to vector<1x1x10x10xf32>
    %193 = vector.shape_cast %6 : vector<1x10x10xf32> to vector<1x1x10x10xf32>
    %194 = vector.shape_cast %7 : vector<1x10x10xf32> to vector<1x1x10x10xf32>
    %195 = vector.shape_cast %8 : vector<1x10x10xf32> to vector<1x1x10x10xf32>
    %196 = vector.shape_cast %9 : vector<1x10x10xf32> to vector<1x1x10x10xf32>
    %197 = vector.shape_cast %12 : vector<1x10x10xf32> to vector<1x1x10x10xf32>
    %198 = vector.shape_cast %13 : vector<1x10x10xf32> to vector<1x1x10x10xf32>
    %199 = vector.shape_cast %14 : vector<1x10x10xf32> to vector<1x1x10x10xf32>
    %200 = vector.shape_cast %15 : vector<1x10x10xf32> to vector<1x1x10x10xf32>
    %201 = vector.shape_cast %16 : vector<1x10x10xf32> to vector<1x1x10x10xf32>
    %202 = vector.shape_cast %17 : vector<1x10x10xf32> to vector<1x1x10x10xf32>
    %203 = vector.shape_cast %18 : vector<1x10x10xf32> to vector<1x1x10x10xf32>
    %204 = vector.shape_cast %21 : vector<1x10x10xf32> to vector<1x1x10x10xf32>
    %205 = vector.shape_cast %22 : vector<1x10x10xf32> to vector<1x1x10x10xf32>
    %206 = vector.shape_cast %23 : vector<1x10x10xf32> to vector<1x1x10x10xf32>
    %207 = vector.shape_cast %24 : vector<1x10x10xf32> to vector<1x1x10x10xf32>
    %208 = vector.shape_cast %25 : vector<1x10x10xf32> to vector<1x1x10x10xf32>
    %209 = vector.shape_cast %26 : vector<1x10x10xf32> to vector<1x1x10x10xf32>
    %210 = vector.shape_cast %27 : vector<1x10x10xf32> to vector<1x1x10x10xf32>
    %211 = vector.shape_cast %30 : vector<1x10x10xf32> to vector<1x1x10x10xf32>
    %212 = vector.shape_cast %31 : vector<1x10x10xf32> to vector<1x1x10x10xf32>
    %213 = vector.shape_cast %32 : vector<1x10x10xf32> to vector<1x1x10x10xf32>
    %214 = vector.shape_cast %33 : vector<1x10x10xf32> to vector<1x1x10x10xf32>
    %215 = vector.shape_cast %34 : vector<1x10x10xf32> to vector<1x1x10x10xf32>
    %216 = vector.shape_cast %35 : vector<1x10x10xf32> to vector<1x1x10x10xf32>
    %217 = vector.shape_cast %36 : vector<1x10x10xf32> to vector<1x1x10x10xf32>
    %218 = vector.shape_cast %39 : vector<1x10x10xf32> to vector<1x1x10x10xf32>
    %219 = vector.shape_cast %40 : vector<1x10x10xf32> to vector<1x1x10x10xf32>
    %220 = vector.shape_cast %41 : vector<1x10x10xf32> to vector<1x1x10x10xf32>
    %221 = vector.shape_cast %42 : vector<1x10x10xf32> to vector<1x1x10x10xf32>
    %222 = vector.shape_cast %43 : vector<1x10x10xf32> to vector<1x1x10x10xf32>
    %223 = vector.shape_cast %44 : vector<1x10x10xf32> to vector<1x1x10x10xf32>
    %224 = vector.shape_cast %45 : vector<1x10x10xf32> to vector<1x1x10x10xf32>
    %225 = vector.shape_cast %48 : vector<1x10x10xf32> to vector<1x1x10x10xf32>
    %226 = vector.shape_cast %49 : vector<1x10x10xf32> to vector<1x1x10x10xf32>
    %227 = vector.shape_cast %50 : vector<1x10x10xf32> to vector<1x1x10x10xf32>
    %228 = vector.shape_cast %51 : vector<1x10x10xf32> to vector<1x1x10x10xf32>
    %229 = vector.shape_cast %52 : vector<1x10x10xf32> to vector<1x1x10x10xf32>
    %230 = vector.shape_cast %53 : vector<1x10x10xf32> to vector<1x1x10x10xf32>
    %231 = vector.shape_cast %54 : vector<1x10x10xf32> to vector<1x1x10x10xf32>
    %232 = vector.shape_cast %57 : vector<1x10x10xf32> to vector<1x1x10x10xf32>
    %233 = vector.shape_cast %58 : vector<1x10x10xf32> to vector<1x1x10x10xf32>
    %234 = vector.shape_cast %59 : vector<1x10x10xf32> to vector<1x1x10x10xf32>
    %235 = vector.shape_cast %60 : vector<1x10x10xf32> to vector<1x1x10x10xf32>
    %236 = vector.shape_cast %61 : vector<1x10x10xf32> to vector<1x1x10x10xf32>
    %237 = vector.shape_cast %62 : vector<1x10x10xf32> to vector<1x1x10x10xf32>
    %238 = vector.shape_cast %63 : vector<1x10x10xf32> to vector<1x1x10x10xf32>
    %239 = vector.shape_cast %66 : vector<1x10x10xf32> to vector<1x1x10x10xf32>
    %240 = vector.shape_cast %67 : vector<1x10x10xf32> to vector<1x1x10x10xf32>
    %241 = vector.shape_cast %68 : vector<1x10x10xf32> to vector<1x1x10x10xf32>
    %242 = vector.shape_cast %69 : vector<1x10x10xf32> to vector<1x1x10x10xf32>
    %243 = vector.shape_cast %70 : vector<1x10x10xf32> to vector<1x1x10x10xf32>
    %244 = vector.shape_cast %71 : vector<1x10x10xf32> to vector<1x1x10x10xf32>
    %245 = vector.shape_cast %72 : vector<1x10x10xf32> to vector<1x1x10x10xf32>
    %246 = vector.shape_cast %75 : vector<1x10x10xf32> to vector<1x1x10x10xf32>
    %247 = vector.shape_cast %76 : vector<1x10x10xf32> to vector<1x1x10x10xf32>
    %248 = vector.shape_cast %77 : vector<1x10x10xf32> to vector<1x1x10x10xf32>
    %249 = vector.shape_cast %78 : vector<1x10x10xf32> to vector<1x1x10x10xf32>
    %250 = vector.shape_cast %79 : vector<1x10x10xf32> to vector<1x1x10x10xf32>
    %251 = vector.shape_cast %80 : vector<1x10x10xf32> to vector<1x1x10x10xf32>
    %252 = vector.shape_cast %81 : vector<1x10x10xf32> to vector<1x1x10x10xf32>
    %253 = vector.shape_cast %84 : vector<1x10x10xf32> to vector<1x1x10x10xf32>
    %254 = vector.shape_cast %85 : vector<1x10x10xf32> to vector<1x1x10x10xf32>
    %255 = vector.shape_cast %86 : vector<1x10x10xf32> to vector<1x1x10x10xf32>
    %256 = vector.shape_cast %87 : vector<1x10x10xf32> to vector<1x1x10x10xf32>
    %257 = vector.shape_cast %88 : vector<1x10x10xf32> to vector<1x1x10x10xf32>
    %258 = vector.shape_cast %89 : vector<1x10x10xf32> to vector<1x1x10x10xf32>
    %259 = vector.shape_cast %90 : vector<1x10x10xf32> to vector<1x1x10x10xf32>
    %260 = vector.shape_cast %93 : vector<1x10x10xf32> to vector<1x1x10x10xf32>
    %261 = vector.shape_cast %94 : vector<1x10x10xf32> to vector<1x1x10x10xf32>
    %262 = vector.shape_cast %95 : vector<1x10x10xf32> to vector<1x1x10x10xf32>
    %263 = vector.shape_cast %96 : vector<1x10x10xf32> to vector<1x1x10x10xf32>
    %264 = vector.shape_cast %97 : vector<1x10x10xf32> to vector<1x1x10x10xf32>
    %265 = vector.shape_cast %98 : vector<1x10x10xf32> to vector<1x1x10x10xf32>
    %266 = vector.shape_cast %99 : vector<1x10x10xf32> to vector<1x1x10x10xf32>
    %267 = vector.shape_cast %102 : vector<1x10x10xf32> to vector<1x1x10x10xf32>
    %268 = vector.shape_cast %103 : vector<1x10x10xf32> to vector<1x1x10x10xf32>
    %269 = vector.shape_cast %104 : vector<1x10x10xf32> to vector<1x1x10x10xf32>
    %270 = vector.shape_cast %105 : vector<1x10x10xf32> to vector<1x1x10x10xf32>
    %271 = vector.shape_cast %106 : vector<1x10x10xf32> to vector<1x1x10x10xf32>
    %272 = vector.shape_cast %107 : vector<1x10x10xf32> to vector<1x1x10x10xf32>
    %273 = vector.shape_cast %108 : vector<1x10x10xf32> to vector<1x1x10x10xf32>
    %274 = vector.shape_cast %111 : vector<1x10x10xf32> to vector<1x1x10x10xf32>
    %275 = vector.shape_cast %112 : vector<1x10x10xf32> to vector<1x1x10x10xf32>
    %276 = vector.shape_cast %113 : vector<1x10x10xf32> to vector<1x1x10x10xf32>
    %277 = vector.shape_cast %114 : vector<1x10x10xf32> to vector<1x1x10x10xf32>
    %278 = vector.shape_cast %115 : vector<1x10x10xf32> to vector<1x1x10x10xf32>
    %279 = vector.shape_cast %116 : vector<1x10x10xf32> to vector<1x1x10x10xf32>
    %280 = vector.shape_cast %117 : vector<1x10x10xf32> to vector<1x1x10x10xf32>
    %281 = vector.shape_cast %120 : vector<1x10x10xf32> to vector<1x1x10x10xf32>
    %282 = vector.shape_cast %121 : vector<1x10x10xf32> to vector<1x1x10x10xf32>
    %283 = vector.shape_cast %122 : vector<1x10x10xf32> to vector<1x1x10x10xf32>
    %284 = vector.shape_cast %123 : vector<1x10x10xf32> to vector<1x1x10x10xf32>
    %285 = vector.shape_cast %124 : vector<1x10x10xf32> to vector<1x1x10x10xf32>
    %286 = vector.shape_cast %125 : vector<1x10x10xf32> to vector<1x1x10x10xf32>
    %287 = vector.shape_cast %126 : vector<1x10x10xf32> to vector<1x1x10x10xf32>
    %288 = vector.shape_cast %129 : vector<1x10x10xf32> to vector<1x1x10x10xf32>
    %289 = vector.shape_cast %130 : vector<1x10x10xf32> to vector<1x1x10x10xf32>
    %290 = vector.shape_cast %131 : vector<1x10x10xf32> to vector<1x1x10x10xf32>
    %291 = vector.shape_cast %132 : vector<1x10x10xf32> to vector<1x1x10x10xf32>
    %292 = vector.shape_cast %133 : vector<1x10x10xf32> to vector<1x1x10x10xf32>
    %293 = vector.shape_cast %134 : vector<1x10x10xf32> to vector<1x1x10x10xf32>
    %294 = vector.shape_cast %135 : vector<1x10x10xf32> to vector<1x1x10x10xf32>
    %295 = vector.shape_cast %138 : vector<1x10x10xf32> to vector<1x1x10x10xf32>
    %296 = vector.shape_cast %139 : vector<1x10x10xf32> to vector<1x1x10x10xf32>
    %297 = vector.shape_cast %140 : vector<1x10x10xf32> to vector<1x1x10x10xf32>
    %298 = vector.shape_cast %141 : vector<1x10x10xf32> to vector<1x1x10x10xf32>
    %299 = vector.shape_cast %142 : vector<1x10x10xf32> to vector<1x1x10x10xf32>
    %300 = vector.shape_cast %143 : vector<1x10x10xf32> to vector<1x1x10x10xf32>
    %301 = vector.shape_cast %144 : vector<1x10x10xf32> to vector<1x1x10x10xf32>
    %302 = vector.shape_cast %147 : vector<1x10x10xf32> to vector<1x1x10x10xf32>
    %303 = vector.shape_cast %148 : vector<1x10x10xf32> to vector<1x1x10x10xf32>
    %304 = vector.shape_cast %149 : vector<1x10x10xf32> to vector<1x1x10x10xf32>
    %305 = vector.shape_cast %150 : vector<1x10x10xf32> to vector<1x1x10x10xf32>
    %306 = vector.shape_cast %151 : vector<1x10x10xf32> to vector<1x1x10x10xf32>
    %307 = vector.shape_cast %152 : vector<1x10x10xf32> to vector<1x1x10x10xf32>
    %308 = vector.shape_cast %153 : vector<1x10x10xf32> to vector<1x1x10x10xf32>
    %309 = vector.shape_cast %156 : vector<1x10x10xf32> to vector<1x1x10x10xf32>
    %310 = vector.shape_cast %157 : vector<1x10x10xf32> to vector<1x1x10x10xf32>
    %311 = vector.shape_cast %158 : vector<1x10x10xf32> to vector<1x1x10x10xf32>
    %312 = vector.shape_cast %159 : vector<1x10x10xf32> to vector<1x1x10x10xf32>
    %313 = vector.shape_cast %160 : vector<1x10x10xf32> to vector<1x1x10x10xf32>
    %314 = vector.shape_cast %161 : vector<1x10x10xf32> to vector<1x1x10x10xf32>
    %315 = vector.shape_cast %162 : vector<1x10x10xf32> to vector<1x1x10x10xf32>
    %316 = vector.shape_cast %165 : vector<1x10x10xf32> to vector<1x1x10x10xf32>
    %317 = vector.shape_cast %166 : vector<1x10x10xf32> to vector<1x1x10x10xf32>
    %318 = vector.shape_cast %167 : vector<1x10x10xf32> to vector<1x1x10x10xf32>
    %319 = vector.shape_cast %168 : vector<1x10x10xf32> to vector<1x1x10x10xf32>
    %320 = vector.shape_cast %169 : vector<1x10x10xf32> to vector<1x1x10x10xf32>
    %321 = vector.shape_cast %170 : vector<1x10x10xf32> to vector<1x1x10x10xf32>
    %322 = vector.shape_cast %171 : vector<1x10x10xf32> to vector<1x1x10x10xf32>
    %323 = vector.shape_cast %174 : vector<1x10x10xf32> to vector<1x1x10x10xf32>
    %324 = vector.shape_cast %175 : vector<1x10x10xf32> to vector<1x1x10x10xf32>
    %325 = vector.shape_cast %176 : vector<1x10x10xf32> to vector<1x1x10x10xf32>
    %326 = vector.shape_cast %177 : vector<1x10x10xf32> to vector<1x1x10x10xf32>
    %327 = vector.shape_cast %178 : vector<1x10x10xf32> to vector<1x1x10x10xf32>
    %328 = vector.shape_cast %179 : vector<1x10x10xf32> to vector<1x1x10x10xf32>
    %329 = vector.shape_cast %180 : vector<1x10x10xf32> to vector<1x1x10x10xf32>
    %330 = vector.shape_cast %183 : vector<1x10x10xf32> to vector<1x1x10x10xf32>
    %331 = vector.shape_cast %184 : vector<1x10x10xf32> to vector<1x1x10x10xf32>
    %332 = vector.shape_cast %185 : vector<1x10x10xf32> to vector<1x1x10x10xf32>
    %333 = vector.shape_cast %186 : vector<1x10x10xf32> to vector<1x1x10x10xf32>
    %334 = vector.shape_cast %187 : vector<1x10x10xf32> to vector<1x1x10x10xf32>
    %335 = vector.shape_cast %188 : vector<1x10x10xf32> to vector<1x1x10x10xf32>
    %336 = vector.shape_cast %189 : vector<1x10x10xf32> to vector<1x1x10x10xf32>
    %337 = tpu.concatenate %190, %191, %192, %193, %194, %195, %196, %197, %198, %199, %200, %201, %202, %203, %204, %205 in 0 : vector<1x1x10x10xf32>, vector<1x1x10x10xf32>, vector<1x1x10x10xf32>, vector<1x1x10x10xf32>, vector<1x1x10x10xf32>, vector<1x1x10x10xf32>, vector<1x1x10x10xf32>, vector<1x1x10x10xf32>, vector<1x1x10x10xf32>, vector<1x1x10x10xf32>, vector<1x1x10x10xf32>, vector<1x1x10x10xf32>, vector<1x1x10x10xf32>, vector<1x1x10x10xf32>, vector<1x1x10x10xf32>, vector<1x1x10x10xf32> -> vector<16x1x10x10xf32>
    %338 = tpu.concatenate %206, %207, %208, %209, %210, %211, %212, %213, %214, %215, %216, %217, %218, %219, %220, %221 in 0 : vector<1x1x10x10xf32>, vector<1x1x10x10xf32>, vector<1x1x10x10xf32>, vector<1x1x10x10xf32>, vector<1x1x10x10xf32>, vector<1x1x10x10xf32>, vector<1x1x10x10xf32>, vector<1x1x10x10xf32>, vector<1x1x10x10xf32>, vector<1x1x10x10xf32>, vector<1x1x10x10xf32>, vector<1x1x10x10xf32>, vector<1x1x10x10xf32>, vector<1x1x10x10xf32>, vector<1x1x10x10xf32>, vector<1x1x10x10xf32> -> vector<16x1x10x10xf32>
    %339 = tpu.concatenate %222, %223, %224, %225, %226, %227, %228, %229, %230, %231, %232, %233, %234, %235, %236, %237 in 0 : vector<1x1x10x10xf32>, vector<1x1x10x10xf32>, vector<1x1x10x10xf32>, vector<1x1x10x10xf32>, vector<1x1x10x10xf32>, vector<1x1x10x10xf32>, vector<1x1x10x10xf32>, vector<1x1x10x10xf32>, vector<1x1x10x10xf32>, vector<1x1x10x10xf32>, vector<1x1x10x10xf32>, vector<1x1x10x10xf32>, vector<1x1x10x10xf32>, vector<1x1x10x10xf32>, vector<1x1x10x10xf32>, vector<1x1x10x10xf32> -> vector<16x1x10x10xf32>
    %340 = tpu.concatenate %238, %239, %240, %241, %242, %243, %244, %245, %246, %247, %248, %249, %250, %251, %252, %253 in 0 : vector<1x1x10x10xf32>, vector<1x1x10x10xf32>, vector<1x1x10x10xf32>, vector<1x1x10x10xf32>, vector<1x1x10x10xf32>, vector<1x1x10x10xf32>, vector<1x1x10x10xf32>, vector<1x1x10x10xf32>, vector<1x1x10x10xf32>, vector<1x1x10x10xf32>, vector<1x1x10x10xf32>, vector<1x1x10x10xf32>, vector<1x1x10x10xf32>, vector<1x1x10x10xf32>, vector<1x1x10x10xf32>, vector<1x1x10x10xf32> -> vector<16x1x10x10xf32>
    %341 = tpu.concatenate %254, %255, %256, %257, %258, %259, %260, %261, %262, %263, %264, %265, %266, %267, %268, %269 in 0 : vector<1x1x10x10xf32>, vector<1x1x10x10xf32>, vector<1x1x10x10xf32>, vector<1x1x10x10xf32>, vector<1x1x10x10xf32>, vector<1x1x10x10xf32>, vector<1x1x10x10xf32>, vector<1x1x10x10xf32>, vector<1x1x10x10xf32>, vector<1x1x10x10xf32>, vector<1x1x10x10xf32>, vector<1x1x10x10xf32>, vector<1x1x10x10xf32>, vector<1x1x10x10xf32>, vector<1x1x10x10xf32>, vector<1x1x10x10xf32> -> vector<16x1x10x10xf32>
    %342 = tpu.concatenate %270, %271, %272, %273, %274, %275, %276, %277, %278, %279, %280, %281, %282, %283, %284, %285 in 0 : vector<1x1x10x10xf32>, vector<1x1x10x10xf32>, vector<1x1x10x10xf32>, vector<1x1x10x10xf32>, vector<1x1x10x10xf32>, vector<1x1x10x10xf32>, vector<1x1x10x10xf32>, vector<1x1x10x10xf32>, vector<1x1x10x10xf32>, vector<1x1x10x10xf32>, vector<1x1x10x10xf32>, vector<1x1x10x10xf32>, vector<1x1x10x10xf32>, vector<1x1x10x10xf32>, vector<1x1x10x10xf32>, vector<1x1x10x10xf32> -> vector<16x1x10x10xf32>
    %343 = tpu.concatenate %286, %287, %288, %289, %290, %291, %292, %293, %294, %295, %296, %297, %298, %299, %300, %301 in 0 : vector<1x1x10x10xf32>, vector<1x1x10x10xf32>, vector<1x1x10x10xf32>, vector<1x1x10x10xf32>, vector<1x1x10x10xf32>, vector<1x1x10x10xf32>, vector<1x1x10x10xf32>, vector<1x1x10x10xf32>, vector<1x1x10x10xf32>, vector<1x1x10x10xf32>, vector<1x1x10x10xf32>, vector<1x1x10x10xf32>, vector<1x1x10x10xf32>, vector<1x1x10x10xf32>, vector<1x1x10x10xf32>, vector<1x1x10x10xf32> -> vector<16x1x10x10xf32>
    %344 = tpu.concatenate %302, %303, %304, %305, %306, %307, %308, %309, %310, %311, %312, %313, %314, %315, %316, %317 in 0 : vector<1x1x10x10xf32>, vector<1x1x10x10xf32>, vector<1x1x10x10xf32>, vector<1x1x10x10xf32>, vector<1x1x10x10xf32>, vector<1x1x10x10xf32>, vector<1x1x10x10xf32>, vector<1x1x10x10xf32>, vector<1x1x10x10xf32>, vector<1x1x10x10xf32>, vector<1x1x10x10xf32>, vector<1x1x10x10xf32>, vector<1x1x10x10xf32>, vector<1x1x10x10xf32>, vector<1x1x10x10xf32>, vector<1x1x10x10xf32> -> vector<16x1x10x10xf32>
    %345 = tpu.concatenate %318, %319, %320, %321, %322, %323, %324, %325, %326, %327, %328, %329, %330, %331, %332, %333 in 0 : vector<1x1x10x10xf32>, vector<1x1x10x10xf32>, vector<1x1x10x10xf32>, vector<1x1x10x10xf32>, vector<1x1x10x10xf32>, vector<1x1x10x10xf32>, vector<1x1x10x10xf32>, vector<1x1x10x10xf32>, vector<1x1x10x10xf32>, vector<1x1x10x10xf32>, vector<1x1x10x10xf32>, vector<1x1x10x10xf32>, vector<1x1x10x10xf32>, vector<1x1x10x10xf32>, vector<1x1x10x10xf32>, vector<1x1x10x10xf32> -> vector<16x1x10x10xf32>
    %346 = tpu.concatenate %334, %335, %336 in 0 : vector<1x1x10x10xf32>, vector<1x1x10x10xf32>, vector<1x1x10x10xf32> -> vector<3x1x10x10xf32>
    %347 = tpu.concatenate %337, %338, %339, %340, %341, %342, %343, %344, %345, %346 in 0 : vector<16x1x10x10xf32>, vector<16x1x10x10xf32>, vector<16x1x10x10xf32>, vector<16x1x10x10xf32>, vector<16x1x10x10xf32>, vector<16x1x10x10xf32>, vector<16x1x10x10xf32>, vector<16x1x10x10xf32>, vector<16x1x10x10xf32>, vector<3x1x10x10xf32> -> vector<147x1x10x10xf32>
    %348 = vector.shape_cast %347 : vector<147x1x10x10xf32> to vector<147x100xf32>
    %c0_3 = arith.constant 0 : index
    %c0_4 = arith.constant 0 : index
    %349 = vector.load %arg2[%c0_3, %c0_4] : memref<8x147xf32, #tpu.memory_space<vmem>>, vector<8x147xf32>
    %cst = arith.constant dense<0.000000e+00> : vector<8x100xf32>
    %350 = tpu.matmul %349, %348, %cst {dimension_numbers = #tpu.dot_dimension_numbers<[1], [0], [0], [1], [0, 0, 1, 1], [], []>} : vector<8x147xf32>, vector<147x100xf32>, vector<8x100xf32> -> vector<8x100xf32>
    %c0_5 = arith.constant 0 : index
    %c0_6 = arith.constant 0 : index
    %351 = vector.load %arg3[%c0_5, %c0_6] : memref<8x1xf32, #tpu.memory_space<vmem>>, vector<8x1xf32>
    %352 = vector.broadcast %351 : vector<8x1xf32> to vector<8x100xf32>
    %353 = arith.addf %350, %352 : vector<8x100xf32>
    %cst_7 = arith.constant 0.422653794 : f32
    %354 = vector.broadcast %cst_7 : f32 to vector<8x100xf32>
    %355 = arith.maximumf %353, %354 : vector<8x100xf32>
    %cst_8 = arith.constant 0.387308687 : f32
    %356 = vector.broadcast %cst_8 : f32 to vector<8x100xf32>
    %357 = arith.minimumf %355, %356 : vector<8x100xf32>
    %c0_9 = arith.constant 0 : index
    %c0_10 = arith.constant 0 : index
    %358 = vector.load %arg4[%c0_9, %c0_10] : memref<8x8xf32, #tpu.memory_space<vmem>>, vector<8x8xf32>
    %cst_11 = arith.constant dense<0.000000e+00> : vector<8x100xf32>
    %359 = tpu.matmul %358, %357, %cst_11 {dimension_numbers = #tpu.dot_dimension_numbers<[1], [0], [0], [1], [0, 0, 1, 1], [], []>} : vector<8x8xf32>, vector<8x100xf32>, vector<8x100xf32> -> vector<8x100xf32>
    %c0_12 = arith.constant 0 : index
    %c0_13 = arith.constant 0 : index
    %360 = vector.load %arg5[%c0_12, %c0_13] : memref<8x1xf32, #tpu.memory_space<vmem>>, vector<8x1xf32>
    %361 = vector.broadcast %360 : vector<8x1xf32> to vector<8x100xf32>
    %362 = arith.addf %359, %361 : vector<8x100xf32>
    %cst_14 = arith.constant 0.855275988 : f32
    %363 = vector.broadcast %cst_14 : f32 to vector<8x100xf32>
    %364 = arith.maximumf %362, %363 : vector<8x100xf32>
    %cst_15 = arith.constant 0.459741741 : f32
    %365 = vector.broadcast %cst_15 : f32 to vector<8x100xf32>
    %366 = arith.minimumf %364, %365 : vector<8x100xf32>
    %c0_16 = arith.constant 0 : index
    %c0_17 = arith.constant 0 : index
    %c0_18 = arith.constant 0 : index
    %367 = vector.load %arg6[%c0_16, %c0_17, %c0_18] : memref<1x8x100xf32, #tpu.memory_space<vmem>>, vector<1x8x100xf32>
    %368 = vector.shape_cast %367 : vector<1x8x100xf32> to vector<8x100xf32>
    %369 = vector.shape_cast %366 : vector<8x100xf32> to vector<1x8x100xf32>
    tpu.vector_store %arg6[%c0_16, %c0_17, %c0_18], %369 {strides = array<i32>} : memref<1x8x100xf32, #tpu.memory_space<vmem>>, vector<1x8x100xf32>,
    return
  }
  func.func @transform_0(%arg0: i32) -> (i32, i32, i32, i32) {
    %c0_i32 = arith.constant 0 : i32
    %c0_i32_0 = arith.constant 0 : i32
    %c0_i32_1 = arith.constant 0 : i32
    %c0_i32_2 = arith.constant 0 : i32
    return %arg0, %c0_i32, %c0_i32_0, %c0_i32_1 : i32, i32, i32, i32
  }
  func.func @transform_1(%arg0: i32) -> (i32, i32) {
    %c0_i32 = arith.constant 0 : i32
    %c0_i32_0 = arith.constant 0 : i32
    %c0_i32_1 = arith.constant 0 : i32
    return %c0_i32, %c0_i32_0 : i32, i32
  }
  func.func @transform_2(%arg0: i32) -> (i32, i32) {
    %c0_i32 = arith.constant 0 : i32
    %c0_i32_0 = arith.constant 0 : i32
    %c0_i32_1 = arith.constant 0 : i32
    return %c0_i32, %c0_i32_0 : i32, i32
  }
  func.func @transform_3(%arg0: i32) -> (i32, i32) {
    %c0_i32 = arith.constant 0 : i32
    %c0_i32_0 = arith.constant 0 : i32
    %c0_i32_1 = arith.constant 0 : i32
    return %c0_i32, %c0_i32_0 : i32, i32
  }
  func.func @transform_4(%arg0: i32) -> (i32, i32) {
    %c0_i32 = arith.constant 0 : i32
    %c0_i32_0 = arith.constant 0 : i32
    %c0_i32_1 = arith.constant 0 : i32
    return %c0_i32, %c0_i32_0 : i32, i32
  }
  func.func @transform_5(%arg0: i32) -> (i32, i32, i32) {
    %c0_i32 = arith.constant 0 : i32
    %c0_i32_0 = arith.constant 0 : i32
    %c0_i32_1 = arith.constant 0 : i32
    return %arg0, %c0_i32, %c0_i32_0 : i32, i32, i32
  }
}

</mosaic_0001>

<llo_original>
// kernel: tpu_custom_call.1
$region0: #{tpu_custom_call.1}
  #allocation0 [shape = 'u32[]', space=smem, size = 0x4, offset = 0x4, fixed_abs, tag = 'smem constant byte address 0x4 - core index']
  #allocation1 [shape = 'u32[144,128]{1,0:T(1,128)}', space=vmem, size = 0x12000, scoped, tag = 'internal scratch']
  %s0 = inlined_call_operand.hbm [shape: f32[2,3,16,16], index: 0, kind: input, shape index: {}]
  %s1 = inlined_call_operand.vmem [shape: f32[8,147], index: 1, kind: input, shape index: {}]
  %s2 = inlined_call_operand.vmem [shape: f32[8,1], index: 2, kind: input, shape index: {}]
  %s3 = inlined_call_operand.hbm [shape: f32[8,8], index: 3, kind: input, shape index: {}]
  %s4 = inlined_call_operand.vmem [shape: f32[8,1], index: 4, kind: input, shape index: {}]
  %s5 = inlined_call_operand.hbm [shape: f32[2,8,100], index: 5, kind: output, shape index: {}]
  %s6 = sld [smem:[#allocation0]]
  $region61: #{tpu_custom_call.1} parent=0
    _
  %s8 = ssub.s32 1, %s6
  %s9 = scalar_select 0, %s8, %s6
  $region1: #{tpu_custom_call.1} parent=0
    #allocation2 [shape = 'u8[49152]{0}', space=vmem, size = 0xc000, scoped, tag = 'input window, operand 0']
    #allocation3 [shape = 's32[2]{0}', space=sflag, size = 0x8, scoped, tag = 'scoped memory for tpu_custom_call.1']
    #allocation4 [shape = 's32[2]{0}', space=sflag, size = 0x8, scoped, tag = 'scoped memory for tpu_custom_call.1']
    #allocation5 [shape = 'u8[4096]{0}', space=vmem, size = 0x1000, scoped, tag = 'input window, operand 3, single buffered']
    #allocation6 [shape = 's32[1]{0}', space=sflag, size = 0x4, scoped, tag = 'scoped memory for tpu_custom_call.1']
    #allocation7 [shape = 'u8[8192]{0}', space=vmem, size = 0x2000, scoped, tag = 'output window, operand 0']
    %10 = vsyncpa [#allocation3], 0
    %s11 = scalar_lea.sflag [#allocation3], 1
    %12 = vsyncpa %s11, 0
    %13 = vsyncpa [#allocation6], 0
    %14 = vsyncpa [#allocation4], 0
    %s15 = scalar_lea.sflag [#allocation4], 1
    %16 = vsyncpa %s15, 0
    loop: start=0, step=1, limit=4
    $region2: #{tpu_custom_call.1} parent=1 // loop_pre_header
      _
    $region3: #{tpu_custom_call.1} parent=1 // loop_header
      %s18 = sphi 0, %s22
      %p19 = scmp.ge.s32.totalorder %s18, 4
      %s28 = sphi 0, %s30
      %s31 = sphi 0, %s28
      %s32 = sphi 0, %s31
      %s48 = sphi 0, %s32
      %s52 = sphi 0, %s52
      %s54 = sphi 0, %s52
      %s55 = sphi 0, %s54
      %s69 = sphi 0, %s55
      %s73 = sphi 0, %s73
      %s75 = sphi 0, %s73
      %s76 = sphi 0, %s75
      %s90 = sphi 0, %s76
      %s94 = sphi 0, %s94
      %s96 = sphi 0, %s94
      %s97 = sphi 0, %s96
      %s111 = sphi 0, %s97
      %s115 = sphi 0, %s115
      %s117 = sphi 0, %s115
      %s118 = sphi 0, %s117
      %s132 = sphi 0, %s118
      %s138 = sphi 0, %s140
      %s141 = sphi 0, %s138
      %s142 = sphi 0, %s141
      %s158 = sphi 0, %s142
    $region4: #{tpu_custom_call.1} parent=1 // loop_header_branch
      %21 = sbr.rel (%p19) target = $region8
    $region5: #{tpu_custom_call.1} parent=1 // loop_body
      %s23 = ssub.s32 %s18, 1
      %s24 = ssub.s32 %s18, 2
      %s25 = sadd.s32 %s18, 1
      %s26 = ssub.s32 %s18, %s25
      %p27 = scmp.eq.s32.totalorder %s26, 0
      %s29 = sadd.s32 %s28, 1
      %s30 = scalar_select %p27, %s28, %s29
      %p33 = pneg %p27
      %p34 = scmp.eq.s32.totalorder %s18, 1
      %p35 = por %p33, %p34
      %p36 = scmp.ne.s32.totalorder %s28, %s31
      %p37 = scmp.eq.s32.totalorder %s18, 0
      %p38 = por %p36, %p37
      %p39 = scmp.ne.s32.totalorder %s28, %s31
      %p40 = scmp.eq.s32.totalorder %s23, 1
      %p41 = por %p39, %p40
      %p42 = scmp.ne.s32.totalorder %s31, %s32
      %p43 = scmp.eq.s32.totalorder %s23, 0
      %p44 = por %p42, %p43
      %p45 = scmp.ne.s32.totalorder %s31, %s32
      %p46 = scmp.eq.s32.totalorder %s24, 1
      %p47 = por %p45, %p46
      %p49 = scmp.ne.s32.totalorder %s32, %s48
      %p50 = scmp.eq.s32.totalorder %s24, 0
      %p51 = por %p49, %p50
      %s53 = sadd.s32 %s52, 1
      %p56 = scmp.eq.s32.totalorder %s18, 1
      %p57 = scmp.ne.s32.totalorder %s52, %s54
      %p58 = scmp.eq.s32.totalorder %s18, 0
      %p59 = por %p57, %p58
      %p60 = scmp.ne.s32.totalorder %s52, %s54
      %p61 = scmp.eq.s32.totalorder %s23, 1
      %p62 = por %p60, %p61
      %p63 = scmp.ne.s32.totalorder %s54, %s55
      %p64 = scmp.eq.s32.totalorder %s23, 0
      %p65 = por %p63, %p64
      %p66 = scmp.ne.s32.totalorder %s54, %s55
      %p67 = scmp.eq.s32.totalorder %s24, 1
      %p68 = por %p66, %p67
      %p70 = scmp.ne.s32.totalorder %s55, %s69
      %p71 = scmp.eq.s32.totalorder %s24, 0
      %p72 = por %p70, %p71
      %s74 = sadd.s32 %s73, 1
      %p77 = scmp.eq.s32.totalorder %s18, 1
      %p78 = scmp.ne.s32.totalorder %s73, %s75
      %p79 = scmp.eq.s32.totalorder %s18, 0
      %p80 = por %p78, %p79
      %p81 = scmp.ne.s32.totalorder %s73, %s75
      %p82 = scmp.eq.s32.totalorder %s23, 1
      %p83 = por %p81, %p82
      %p84 = scmp.ne.s32.totalorder %s75, %s76
      %p85 = scmp.eq.s32.totalorder %s23, 0
      %p86 = por %p84, %p85
      %p87 = scmp.ne.s32.totalorder %s75, %s76
      %p88 = scmp.eq.s32.totalorder %s24, 1
      %p89 = por %p87, %p88
      %p91 = scmp.ne.s32.totalorder %s76, %s90
      %p92 = scmp.eq.s32.totalorder %s24, 0
      %p93 = por %p91, %p92
      %s95 = sadd.s32 %s94, 1
      %p98 = scmp.eq.s32.totalorder %s18, 1
      %p99 = scmp.ne.s32.totalorder %s94, %s96
      %p100 = scmp.eq.s32.totalorder %s18, 0
      %p101 = por %p99, %p100
      %p102 = scmp.ne.s32.totalorder %s94, %s96
      %p103 = scmp.eq.s32.totalorder %s23, 1
      %p104 = por %p102, %p103
      %p105 = scmp.ne.s32.totalorder %s96, %s97
      %p106 = scmp.eq.s32.totalorder %s23, 0
      %p107 = por %p105, %p106
      %p108 = scmp.ne.s32.totalorder %s96, %s97
      %p109 = scmp.eq.s32.totalorder %s24, 1
      %p110 = por %p108, %p109
      %p112 = scmp.ne.s32.totalorder %s97, %s111
      %p113 = scmp.eq.s32.totalorder %s24, 0
      %p114 = por %p112, %p113
      %s116 = sadd.s32 %s115, 1
      %p119 = scmp.eq.s32.totalorder %s18, 1
      %p120 = scmp.ne.s32.totalorder %s115, %s117
      %p121 = scmp.eq.s32.totalorder %s18, 0
      %p122 = por %p120, %p121
      %p123 = scmp.ne.s32.totalorder %s115, %s117
      %p124 = scmp.eq.s32.totalorder %s23, 1
      %p125 = por %p123, %p124
      %p126 = scmp.ne.s32.totalorder %s117, %s118
      %p127 = scmp.eq.s32.totalorder %s23, 0
      %p128 = por %p126, %p127
      %p129 = scmp.ne.s32.totalorder %s117, %s118
      %p130 = scmp.eq.s32.totalorder %s24, 1
      %p131 = por %p129, %p130
      %p133 = scmp.ne.s32.totalorder %s118, %s132
      %p134 = scmp.eq.s32.totalorder %s24, 0
      %p135 = por %p133, %p134
      %s136 = ssub.s32 %s18, %s25
      %p137 = scmp.eq.s32.totalorder %s136, 0
      %s139 = sadd.s32 %s138, 1
      %s140 = scalar_select %p137, %s138, %s139
      %p143 = pneg %p137
      %p144 = scmp.eq.s32.totalorder %s18, 1
      %p145 = por %p143, %p144
      %p146 = scmp.ne.s32.totalorder %s138, %s141
      %p147 = scmp.eq.s32.totalorder %s18, 0
      %p148 = por %p146, %p147
      %p149 = scmp.ne.s32.totalorder %s138, %s141
      %p150 = scmp.eq.s32.totalorder %s23, 1
      %p151 = por %p149, %p150
      %p152 = scmp.ne.s32.totalorder %s141, %s142
      %p153 = scmp.eq.s32.totalorder %s23, 0
      %p154 = por %p152, %p153
      %p155 = scmp.ne.s32.totalorder %s141, %s142
      %p156 = scmp.eq.s32.totalorder %s24, 1
      %p157 = por %p155, %p156
      %p159 = scmp.ne.s32.totalorder %s142, %s158
      %p160 = scmp.eq.s32.totalorder %s24, 0
      %p161 = por %p159, %p160
      %p162 = scmp.le.s32.totalorder 1, %s18
      %p163 = scmp.lt.s32.totalorder %s18, 3
      %p164 = pnand %p162, %p163
      %p165 = pneg %p164
      // Predicated region
      $region9: #{tpu_custom_call.1} parent=5 // pred_check
        _
      $region10: #{tpu_custom_call.1} parent=5 // pred_check_branch
        %167 = sbr.rel (%p164) target = $region12
      $region11: #{tpu_custom_call.1} parent=5 // pred_region
        %s168 = ssub.s32 %s18, 1
        // Predicated region
        $region13: #{tpu_custom_call.1} parent=11 // pred_check
          %p169 = pneg %p65
        $region14: #{tpu_custom_call.1} parent=11 // pred_check_branch
          %171 = sbr.rel (%p169) target = $region16
        $region15: #{tpu_custom_call.1} parent=11 // pred_region
          _
        $region16: #{tpu_custom_call.1} parent=11 // pred_fallthru
          _
        // Predicated region
        $region17: #{tpu_custom_call.1} parent=11 // pred_check
          %p172 = pneg %p86
        $region18: #{tpu_custom_call.1} parent=11 // pred_check_branch
          %174 = sbr.rel (%p172) target = $region20
        $region19: #{tpu_custom_call.1} parent=11 // pred_region
          _
        $region20: #{tpu_custom_call.1} parent=11 // pred_fallthru
          _
        // Predicated region
        $region21: #{tpu_custom_call.1} parent=11 // pred_check
          %p175 = pneg %p107
        $region22: #{tpu_custom_call.1} parent=11 // pred_check_branch
          %177 = sbr.rel (%p175) target = $region24
        $region23: #{tpu_custom_call.1} parent=11 // pred_region
          %s179 = ssub.s32 128, 128
          %180 = vsyncadd [#allocation6], %s179
          %s182 = sshll.u32 [#allocation5], 4
          %s183 = int_to_ptr.vmem [resolvable:$true] %s182
          %185 = dma.hbm_to_vmem [thread:$0]  %s3, 128, %s183, [#allocation6]
        $region24: #{tpu_custom_call.1} parent=11 // pred_fallthru
          _
        // Predicated region
        $region25: #{tpu_custom_call.1} parent=11 // pred_check
          %p186 = pneg %p128
        $region26: #{tpu_custom_call.1} parent=11 // pred_check_branch
          %188 = sbr.rel (%p186) target = $region28
        $region27: #{tpu_custom_call.1} parent=11 // pred_region
          _
        $region28: #{tpu_custom_call.1} parent=11 // pred_fallthru
          _
      $region12: #{tpu_custom_call.1} parent=5 // pred_fallthru
        _
      %p189 = scmp.lt.s32.totalorder %s18, 2
      // Predicated region
      $region29: #{tpu_custom_call.1} parent=5 // pred_check
        %p190 = pneg %p189
      $region30: #{tpu_custom_call.1} parent=5 // pred_check_branch
        %192 = sbr.rel (%p190) target = $region32
      $region31: #{tpu_custom_call.1} parent=5 // pred_region
        // Predicated region
        $region33: #{tpu_custom_call.1} parent=31 // pred_check
          %p193 = pneg %p38
        $region34: #{tpu_custom_call.1} parent=31 // pred_check_branch
          %195 = sbr.rel (%p193) target = $region36
        $region35: #{tpu_custom_call.1} parent=31 // pred_region
          %s196 = sand.u32 %s28, 1
          %s197 = scalar_lea.sflag [#allocation3], %s196
          %s198 = sand.u32 %s28, 1
          %s199 = smul.addr %s198, 48
          %s200 = scalar_lea.vmem [#allocation2], %s199
          %s202 = ssub.s32 768, 768
          %203 = vsyncadd %s197, %s202
          %s204 = smul.addr %s18, 6
          %s205 = smul.addr %s204, 128
          %s206 = scalar_lea.hbm %s0, %s205
          %s207 = sshll.u32 %s200, 4
          %s208 = int_to_ptr.vmem [resolvable:$true] %s207
          %213 = dma.hbm_to_vmem [thread:$0]  %s206, 768, %s208, %s197, 128, 128, 8
        $region36: #{tpu_custom_call.1} parent=31 // pred_fallthru
          _
      $region32: #{tpu_custom_call.1} parent=5 // pred_fallthru
        _
      %p214 = scmp.le.s32.totalorder 1, %s18
      %p215 = scmp.lt.s32.totalorder %s18, 3
      %p216 = pnand %p214, %p215
      %p217 = pneg %p216
      // Predicated region
      $region37: #{tpu_custom_call.1} parent=5 // pred_check
        _
      $region38: #{tpu_custom_call.1} parent=5 // pred_check_branch
        %219 = sbr.rel (%p216) target = $region40
      $region39: #{tpu_custom_call.1} parent=5 // pred_region
        %s220 = ssub.s32 %s18, 1
        %s221 = sand.u32 %s31, 1
        %s222 = scalar_lea.sflag [#allocation3], %s221
        %s223 = sand.u32 %s31, 1
        %s224 = smul.addr %s223, 48
        %s225 = scalar_lea.vmem [#allocation2], %s224
        // Predicated region
        $region41: #{tpu_custom_call.1} parent=39 // pred_check
          %p226 = pneg %p44
        $region42: #{tpu_custom_call.1} parent=39 // pred_check_branch
          %228 = sbr.rel (%p226) target = $region44
        $region43: #{tpu_custom_call.1} parent=39 // pred_region
          %229 = dma.done %s222, 768
        $region44: #{tpu_custom_call.1} parent=39 // pred_fallthru
          _
        // Predicated region
        $region45: #{tpu_custom_call.1} parent=39 // pred_check
          %p230 = pneg %p107
        $region46: #{tpu_custom_call.1} parent=39 // pred_check_branch
          %232 = sbr.rel (%p230) target = $region48
        $region47: #{tpu_custom_call.1} parent=39 // pred_region
          %233 = dma.done [#allocation6], 128
        $region48: #{tpu_custom_call.1} parent=39 // pred_fallthru
          _
        %s234 = sand.u32 %s31, 1
        %s235 = scalar_lea.sflag [#allocation3], %s234
        %s236 = sand.u32 %s31, 1
        %s237 = smul.addr %s236, 48
        %s238 = scalar_lea.vmem [#allocation2], %s237
        %p239 = pneg %p44
        %p240 = pneg %p41
        %p241 = pneg %p65
        %p242 = pneg %p62
        %p243 = pneg %p86
        %p244 = pneg %p83
        %p245 = pneg %p107
        %p246 = pneg %p104
        %p247 = pneg %p128
        %p248 = pneg %p125
        %p249 = pneg %p154
        %p250 = pneg %p151
        %s251 = sand.u32 %s141, 1
        %s252 = scalar_lea.sflag [#allocation4], %s251
        %s253 = sand.u32 %s141, 1
        %s254 = smul.addr %s253, 8
        %s255 = scalar_lea.vmem [#allocation7], %s254
        %v256 = vld [vmem:[%s225] sm:$0xff]
        %v257 = vld [vmem:[%s225 + $0x8] sm:$0xff]
        %v258 = vld [vmem:[%s225 + $0x10] sm:$0xff]
        %v259 = vld [vmem:[%s225 + $0x18] sm:$0xff]
        %v260 = vld [vmem:[%s225 + $0x20] sm:$0xff]
        %v261 = vld [vmem:[%s225 + $0x28] sm:$0xff]
        %264 = vrot.lane.b32.xlu0 %v256, 127
        %v265 = vpop.permute.xlu0 %264
        %266 = vrot.lane.b32.xlu0 %v257, 127
        %v267 = vpop.permute.xlu0 %266
        %270 = vrot.lane.b32.xlu0 %v256, 126
        %v271 = vpop.permute.xlu0 %270
        %272 = vrot.lane.b32.xlu0 %v257, 126
        %v273 = vpop.permute.xlu0 %272
        %276 = vrot.lane.b32.xlu0 %v256, 125
        %v277 = vpop.permute.xlu0 %276
        %278 = vrot.lane.b32.xlu0 %v257, 125
        %v279 = vpop.permute.xlu0 %278
        %282 = vrot.lane.b32.xlu0 %v256, 124
        %v283 = vpop.permute.xlu0 %282
        %284 = vrot.lane.b32.xlu0 %v257, 124
        %v285 = vpop.permute.xlu0 %284
        %288 = vrot.lane.b32.xlu0 %v256, 123
        %v289 = vpop.permute.xlu0 %288
        %290 = vrot.lane.b32.xlu0 %v257, 123
        %v291 = vpop.permute.xlu0 %290
        %294 = vrot.lane.b32.xlu0 %v256, 122
        %v295 = vpop.permute.xlu0 %294
        %296 = vrot.lane.b32.xlu0 %v257, 122
        %v297 = vpop.permute.xlu0 %296
        %vm300 = vcmask 1046528
        %v301 = vrot.slane %v256, 1
        %v302 = vrot.slane %v257, 1
        %v303 = vsel %vm300, %v301, %v302
        %306 = vrot.lane.b32.xlu0 %v303, 127
        %v307 = vpop.permute.xlu0 %306
        %308 = vrot.lane.b32.xlu0 %v302, 127
        %v309 = vpop.permute.xlu0 %308
        %312 = vrot.lane.b32.xlu0 %v303, 126
        %v313 = vpop.permute.xlu0 %312
        %314 = vrot.lane.b32.xlu0 %v302, 126
        %v315 = vpop.permute.xlu0 %314
        %318 = vrot.lane.b32.xlu0 %v303, 125
        %v319 = vpop.permute.xlu0 %318
        %320 = vrot.lane.b32.xlu0 %v302, 125
        %v321 = vpop.permute.xlu0 %320
        %324 = vrot.lane.b32.xlu0 %v303, 124
        %v325 = vpop.permute.xlu0 %324
        %326 = vrot.lane.b32.xlu0 %v302, 124
        %v327 = vpop.permute.xlu0 %326
        %330 = vrot.lane.b32.xlu0 %v303, 123
        %v331 = vpop.permute.xlu0 %330
        %332 = vrot.lane.b32.xlu0 %v302, 123
        %v333 = vpop.permute.xlu0 %332
        %336 = vrot.lane.b32.xlu0 %v303, 122
        %v337 = vpop.permute.xlu0 %336
        %338 = vrot.lane.b32.xlu0 %v302, 122
        %v339 = vpop.permute.xlu0 %338
        %vm342 = vcmask 1045504
        %v343 = vrot.slane %v256, 2
        %v344 = vrot.slane %v257, 2
        %v345 = vsel %vm342, %v343, %v344
        %348 = vrot.lane.b32.xlu0 %v345, 127
        %v349 = vpop.permute.xlu0 %348
        %350 = vrot.lane.b32.xlu0 %v344, 127
        %v351 = vpop.permute.xlu0 %350
        %354 = vrot.lane.b32.xlu0 %v303, 2
        %v355 = vpop.permute.xlu0 %354
        %356 = vrot.lane.b32.xlu0 %v302, 2
        %v357 = vpop.permute.xlu0 %356
        %358 = vrot.lane.b32.xlu0 %v303, 1
        %v359 = vpop.permute.xlu0 %358
        %360 = vrot.lane.b32.xlu0 %v302, 1
        %v361 = vpop.permute.xlu0 %360
        %362 = vrot.lane.b32.xlu0 %v345, 2
        %v363 = vpop.permute.xlu0 %362
        %364 = vrot.lane.b32.xlu0 %v344, 2
        %v365 = vpop.permute.xlu0 %364
        %366 = vrot.lane.b32.xlu0 %v345, 1
        %v367 = vpop.permute.xlu0 %366
        %368 = vrot.lane.b32.xlu0 %v344, 1
        %v369 = vpop.permute.xlu0 %368
        %370 = vrot.lane.b32.xlu0 %v303, 4
        %v371 = vpop.permute.xlu0 %370
        %372 = vrot.lane.b32.xlu0 %v302, 4
        %v373 = vpop.permute.xlu0 %372
        %374 = vrot.lane.b32.xlu0 %v303, 3
        %v375 = vpop.permute.xlu0 %374
        %376 = vrot.lane.b32.xlu0 %v302, 3
        %v377 = vpop.permute.xlu0 %376
        %378 = vrot.lane.b32.xlu0 %v345, 4
        %v379 = vpop.permute.xlu0 %378
        %380 = vrot.lane.b32.xlu0 %v344, 4
        %v381 = vpop.permute.xlu0 %380
        %382 = vrot.lane.b32.xlu0 %v345, 3
        %v383 = vpop.permute.xlu0 %382
        %384 = vrot.lane.b32.xlu0 %v344, 3
        %v385 = vpop.permute.xlu0 %384
        %v388 = vrot.slane %v258, 2
        %v389 = vrot.slane %v259, 2
        %v390 = vsel %vm342, %v388, %v389
        %391 = vrot.lane.b32.xlu0 %v388, 6
        %v392 = vpop.permute.xlu0 %391
        %393 = vrot.lane.b32.xlu0 %v390, 6
        %v394 = vpop.permute.xlu0 %393
        %395 = vrot.lane.b32.xlu0 %v388, 5
        %v396 = vpop.permute.xlu0 %395
        %397 = vrot.lane.b32.xlu0 %v390, 5
        %v398 = vpop.permute.xlu0 %397
        %399 = vrot.lane.b32.xlu0 %v388, 4
        %v400 = vpop.permute.xlu0 %399
        %401 = vrot.lane.b32.xlu0 %v390, 4
        %v402 = vpop.permute.xlu0 %401
        %403 = vrot.lane.b32.xlu0 %v388, 3
        %v404 = vpop.permute.xlu0 %403
        %405 = vrot.lane.b32.xlu0 %v390, 3
        %v406 = vpop.permute.xlu0 %405
        %407 = vrot.lane.b32.xlu0 %v388, 2
        %v408 = vpop.permute.xlu0 %407
        %409 = vrot.lane.b32.xlu0 %v390, 2
        %v410 = vpop.permute.xlu0 %409
        %411 = vrot.lane.b32.xlu0 %v388, 1
        %v412 = vpop.permute.xlu0 %411
        %413 = vrot.lane.b32.xlu0 %v390, 1
        %v414 = vpop.permute.xlu0 %413
        %vm415 = vcmask 1044480
        %v416 = vrot.slane %v258, 3
        %v417 = vrot.slane %v259, 3
        %v418 = vsel %vm415, %v416, %v417
        %419 = vrot.lane.b32.xlu0 %v416, 6
        %v420 = vpop.permute.xlu0 %419
        %421 = vrot.lane.b32.xlu0 %v418, 6
        %v422 = vpop.permute.xlu0 %421
        %423 = vrot.lane.b32.xlu0 %v416, 5
        %v424 = vpop.permute.xlu0 %423
        %425 = vrot.lane.b32.xlu0 %v418, 5
        %v426 = vpop.permute.xlu0 %425
        %427 = vrot.lane.b32.xlu0 %v416, 4
        %v428 = vpop.permute.xlu0 %427
        %429 = vrot.lane.b32.xlu0 %v418, 4
        %v430 = vpop.permute.xlu0 %429
        %431 = vrot.lane.b32.xlu0 %v416, 3
        %v432 = vpop.permute.xlu0 %431
        %433 = vrot.lane.b32.xlu0 %v418, 3
        %v434 = vpop.permute.xlu0 %433
        %435 = vrot.lane.b32.xlu0 %v416, 2
        %v436 = vpop.permute.xlu0 %435
        %437 = vrot.lane.b32.xlu0 %v418, 2
        %v438 = vpop.permute.xlu0 %437
        %439 = vrot.lane.b32.xlu0 %v416, 1
        %v440 = vpop.permute.xlu0 %439
        %441 = vrot.lane.b32.xlu0 %v418, 1
        %v442 = vpop.permute.xlu0 %441
        %vm443 = vcmask 1043456
        %v444 = vrot.slane %v258, 4
        %v445 = vrot.slane %v259, 4
        %v446 = vsel %vm443, %v444, %v445
        %447 = vrot.lane.b32.xlu0 %v444, 6
        %v448 = vpop.permute.xlu0 %447
        %449 = vrot.lane.b32.xlu0 %v446, 6
        %v450 = vpop.permute.xlu0 %449
        %451 = vrot.lane.b32.xlu0 %v258, 127
        %v452 = vpop.permute.xlu0 %451
        %453 = vrot.lane.b32.xlu0 %v259, 127
        %v454 = vpop.permute.xlu0 %453
        %455 = vrot.lane.b32.xlu0 %v258, 126
        %v456 = vpop.permute.xlu0 %455
        %457 = vrot.lane.b32.xlu0 %v259, 126
        %v458 = vpop.permute.xlu0 %457
        %459 = vrot.lane.b32.xlu0 %v258, 125
        %v460 = vpop.permute.xlu0 %459
        %461 = vrot.lane.b32.xlu0 %v259, 125
        %v462 = vpop.permute.xlu0 %461
        %463 = vrot.lane.b32.xlu0 %v258, 124
        %v464 = vpop.permute.xlu0 %463
        %465 = vrot.lane.b32.xlu0 %v259, 124
        %v466 = vpop.permute.xlu0 %465
        %467 = vrot.lane.b32.xlu0 %v258, 123
        %v468 = vpop.permute.xlu0 %467
        %469 = vrot.lane.b32.xlu0 %v259, 123
        %v470 = vpop.permute.xlu0 %469
        %v471 = vrot.slane %v258, 1
        %v472 = vrot.slane %v259, 1
        %v473 = vsel %vm300, %v471, %v472
        %474 = vrot.lane.b32.xlu0 %v473, 1
        %v475 = vpop.permute.xlu0 %474
        %476 = vrot.lane.b32.xlu0 %v472, 1
        %v477 = vpop.permute.xlu0 %476
        %478 = vrot.lane.b32.xlu0 %v473, 127
        %v479 = vpop.permute.xlu0 %478
        %480 = vrot.lane.b32.xlu0 %v472, 127
        %v481 = vpop.permute.xlu0 %480
        %482 = vrot.lane.b32.xlu0 %v473, 126
        %v483 = vpop.permute.xlu0 %482
        %484 = vrot.lane.b32.xlu0 %v472, 126
        %v485 = vpop.permute.xlu0 %484
        %486 = vrot.lane.b32.xlu0 %v473, 125
        %v487 = vpop.permute.xlu0 %486
        %488 = vrot.lane.b32.xlu0 %v472, 125
        %v489 = vpop.permute.xlu0 %488
        %490 = vrot.lane.b32.xlu0 %v473, 124
        %v491 = vpop.permute.xlu0 %490
        %492 = vrot.lane.b32.xlu0 %v472, 124
        %v493 = vpop.permute.xlu0 %492
        %494 = vrot.lane.b32.xlu0 %v473, 123
        %v495 = vpop.permute.xlu0 %494
        %496 = vrot.lane.b32.xlu0 %v472, 123
        %v497 = vpop.permute.xlu0 %496
        %498 = vrot.lane.b32.xlu0 %v389, 1
        %v499 = vpop.permute.xlu0 %498
        %500 = vrot.lane.b32.xlu0 %v390, 127
        %v501 = vpop.permute.xlu0 %500
        %502 = vrot.lane.b32.xlu0 %v389, 127
        %v503 = vpop.permute.xlu0 %502
        %504 = vrot.lane.b32.xlu0 %v473, 3
        %v505 = vpop.permute.xlu0 %504
        %506 = vrot.lane.b32.xlu0 %v472, 3
        %v507 = vpop.permute.xlu0 %506
        %508 = vrot.lane.b32.xlu0 %v473, 2
        %v509 = vpop.permute.xlu0 %508
        %510 = vrot.lane.b32.xlu0 %v472, 2
        %v511 = vpop.permute.xlu0 %510
        %512 = vrot.lane.b32.xlu0 %v389, 3
        %v513 = vpop.permute.xlu0 %512
        %514 = vrot.lane.b32.xlu0 %v389, 2
        %v515 = vpop.permute.xlu0 %514
        %v518 = vrot.slane %v260, 2
        %v519 = vrot.slane %v261, 2
        %v520 = vsel %vm342, %v518, %v519
        %521 = vrot.lane.b32.xlu0 %v518, 5
        %v522 = vpop.permute.xlu0 %521
        %523 = vrot.lane.b32.xlu0 %v520, 5
        %v524 = vpop.permute.xlu0 %523
        %525 = vrot.lane.b32.xlu0 %v518, 4
        %v526 = vpop.permute.xlu0 %525
        %527 = vrot.lane.b32.xlu0 %v520, 4
        %v528 = vpop.permute.xlu0 %527
        %529 = vrot.lane.b32.xlu0 %v518, 3
        %v530 = vpop.permute.xlu0 %529
        %531 = vrot.lane.b32.xlu0 %v520, 3
        %v532 = vpop.permute.xlu0 %531
        %533 = vrot.lane.b32.xlu0 %v518, 2
        %v534 = vpop.permute.xlu0 %533
        %535 = vrot.lane.b32.xlu0 %v520, 2
        %v536 = vpop.permute.xlu0 %535
        %537 = vrot.lane.b32.xlu0 %v518, 1
        %v538 = vpop.permute.xlu0 %537
        %539 = vrot.lane.b32.xlu0 %v520, 1
        %v540 = vpop.permute.xlu0 %539
        %541 = vrot.lane.b32.xlu0 %v518, 127
        %v542 = vpop.permute.xlu0 %541
        %543 = vrot.lane.b32.xlu0 %v520, 127
        %v544 = vpop.permute.xlu0 %543
        %v545 = vrot.slane %v260, 3
        %v546 = vrot.slane %v261, 3
        %v547 = vsel %vm415, %v545, %v546
        %548 = vrot.lane.b32.xlu0 %v545, 5
        %v549 = vpop.permute.xlu0 %548
        %550 = vrot.lane.b32.xlu0 %v547, 5
        %v551 = vpop.permute.xlu0 %550
        %552 = vrot.lane.b32.xlu0 %v545, 4
        %v553 = vpop.permute.xlu0 %552
        %554 = vrot.lane.b32.xlu0 %v547, 4
        %v555 = vpop.permute.xlu0 %554
        %556 = vrot.lane.b32.xlu0 %v545, 3
        %v557 = vpop.permute.xlu0 %556
        %558 = vrot.lane.b32.xlu0 %v547, 3
        %v559 = vpop.permute.xlu0 %558
        %560 = vrot.lane.b32.xlu0 %v545, 2
        %v561 = vpop.permute.xlu0 %560
        %562 = vrot.lane.b32.xlu0 %v547, 2
        %v563 = vpop.permute.xlu0 %562
        %564 = vrot.lane.b32.xlu0 %v545, 1
        %v565 = vpop.permute.xlu0 %564
        %566 = vrot.lane.b32.xlu0 %v547, 1
        %v567 = vpop.permute.xlu0 %566
        %568 = vrot.lane.b32.xlu0 %v545, 127
        %v569 = vpop.permute.xlu0 %568
        %570 = vrot.lane.b32.xlu0 %v547, 127
        %v571 = vpop.permute.xlu0 %570
        %572 = vrot.lane.b32.xlu0 %v260, 127
        %v573 = vpop.permute.xlu0 %572
        %574 = vrot.lane.b32.xlu0 %v261, 127
        %v575 = vpop.permute.xlu0 %574
        %576 = vrot.lane.b32.xlu0 %v260, 126
        %v577 = vpop.permute.xlu0 %576
        %578 = vrot.lane.b32.xlu0 %v261, 126
        %v579 = vpop.permute.xlu0 %578
        %580 = vrot.lane.b32.xlu0 %v260, 125
        %v581 = vpop.permute.xlu0 %580
        %582 = vrot.lane.b32.xlu0 %v261, 125
        %v583 = vpop.permute.xlu0 %582
        %584 = vrot.lane.b32.xlu0 %v260, 124
        %v585 = vpop.permute.xlu0 %584
        %586 = vrot.lane.b32.xlu0 %v261, 124
        %v587 = vpop.permute.xlu0 %586
        %588 = vrot.lane.b32.xlu0 %v260, 123
        %v589 = vpop.permute.xlu0 %588
        %590 = vrot.lane.b32.xlu0 %v261, 123
        %v591 = vpop.permute.xlu0 %590
        %592 = vrot.lane.b32.xlu0 %v260, 122
        %v593 = vpop.permute.xlu0 %592
        %594 = vrot.lane.b32.xlu0 %v261, 122
        %v595 = vpop.permute.xlu0 %594
        %v596 = vrot.slane %v260, 1
        %v597 = vrot.slane %v261, 1
        %v598 = vsel %vm300, %v596, %v597
        %599 = vrot.lane.b32.xlu0 %v598, 127
        %v600 = vpop.permute.xlu0 %599
        %601 = vrot.lane.b32.xlu0 %v597, 127
        %v602 = vpop.permute.xlu0 %601
        %603 = vrot.lane.b32.xlu0 %v598, 126
        %v604 = vpop.permute.xlu0 %603
        %605 = vrot.lane.b32.xlu0 %v597, 126
        %v606 = vpop.permute.xlu0 %605
        %607 = vrot.lane.b32.xlu0 %v598, 125
        %v608 = vpop.permute.xlu0 %607
        %609 = vrot.lane.b32.xlu0 %v597, 125
        %v610 = vpop.permute.xlu0 %609
        %611 = vrot.lane.b32.xlu0 %v598, 124
        %v612 = vpop.permute.xlu0 %611
        %613 = vrot.lane.b32.xlu0 %v597, 124
        %v614 = vpop.permute.xlu0 %613
        %615 = vrot.lane.b32.xlu0 %v598, 123
        %v616 = vpop.permute.xlu0 %615
        %617 = vrot.lane.b32.xlu0 %v597, 123
        %v618 = vpop.permute.xlu0 %617
        %619 = vrot.lane.b32.xlu0 %v598, 122
        %v620 = vpop.permute.xlu0 %619
        %621 = vrot.lane.b32.xlu0 %v597, 122
        %v622 = vpop.permute.xlu0 %621
        %623 = vrot.lane.b32.xlu0 %v519, 127
        %v624 = vpop.permute.xlu0 %623
        %625 = vrot.lane.b32.xlu0 %v598, 2
        %v626 = vpop.permute.xlu0 %625
        %627 = vrot.lane.b32.xlu0 %v597, 2
        %v628 = vpop.permute.xlu0 %627
        %629 = vrot.lane.b32.xlu0 %v598, 1
        %v630 = vpop.permute.xlu0 %629
        %631 = vrot.lane.b32.xlu0 %v597, 1
        %v632 = vpop.permute.xlu0 %631
        %633 = vrot.lane.b32.xlu0 %v519, 2
        %v634 = vpop.permute.xlu0 %633
        %635 = vrot.lane.b32.xlu0 %v519, 1
        %v636 = vpop.permute.xlu0 %635
        %v637 = vrot.slane %v265, 2
        %v638 = vrot.slane %v267, 2
        %v639 = vsel %vm342, %v637, %v638
        %v640 = vrot.slane %v271, 2
        %v641 = vrot.slane %v273, 2
        %v642 = vsel %vm342, %v640, %v641
        %v643 = vrot.slane %v277, 2
        %v644 = vrot.slane %v279, 2
        %v645 = vsel %vm342, %v643, %v644
        %v646 = vrot.slane %v283, 2
        %v647 = vrot.slane %v285, 2
        %v648 = vsel %vm342, %v646, %v647
        %v649 = vrot.slane %v355, 2
        %v650 = vrot.slane %v357, 2
        %v651 = vsel %vm342, %v649, %v650
        %v652 = vrot.slane %v359, 2
        %v653 = vrot.slane %v361, 2
        %v654 = vsel %vm342, %v652, %v653
        %v655 = vrot.slane %v303, 2
        %v656 = vrot.slane %v302, 2
        %v657 = vsel %vm342, %v655, %v656
        %v658 = vrot.slane %v307, 2
        %v659 = vrot.slane %v309, 2
        %v660 = vsel %vm342, %v658, %v659
        %v661 = vrot.slane %v313, 2
        %v662 = vrot.slane %v315, 2
        %v663 = vsel %vm342, %v661, %v662
        %v664 = vrot.slane %v319, 2
        %v665 = vrot.slane %v321, 2
        %v666 = vsel %vm342, %v664, %v665
        %v667 = vrot.slane %v325, 2
        %v668 = vrot.slane %v327, 2
        %v669 = vsel %vm342, %v667, %v668
        %v670 = vrot.slane %v363, 2
        %v671 = vrot.slane %v365, 2
        %v672 = vsel %vm342, %v670, %v671
        %v673 = vrot.slane %v367, 2
        %v674 = vrot.slane %v369, 2
        %v675 = vsel %vm342, %v673, %v674
        %v676 = vrot.slane %v345, 2
        %v677 = vrot.slane %v344, 2
        %v678 = vsel %vm342, %v676, %v677
        %v679 = vrot.slane %v349, 2
        %v680 = vrot.slane %v351, 2
        %v681 = vsel %vm342, %v679, %v680
        %682 = vrot.lane.b32.xlu0 %v345, 126
        %v683 = vpop.permute.xlu0 %682
        %684 = vrot.lane.b32.xlu0 %v344, 126
        %v685 = vpop.permute.xlu0 %684
        %686 = vrot.lane.b32.xlu0 %v639, 126
        %v687 = vpop.permute.xlu0 %686
        %688 = vrot.lane.b32.xlu0 %v638, 126
        %v689 = vpop.permute.xlu0 %688
        %690 = vrot.lane.b32.xlu0 %v642, 126
        %v691 = vpop.permute.xlu0 %690
        %692 = vrot.lane.b32.xlu0 %v641, 126
        %v693 = vpop.permute.xlu0 %692
        %694 = vrot.lane.b32.xlu0 %v645, 126
        %v695 = vpop.permute.xlu0 %694
        %696 = vrot.lane.b32.xlu0 %v644, 126
        %v697 = vpop.permute.xlu0 %696
        %698 = vrot.lane.b32.xlu0 %v648, 126
        %v699 = vpop.permute.xlu0 %698
        %700 = vrot.lane.b32.xlu0 %v647, 126
        %v701 = vpop.permute.xlu0 %700
        %702 = vrot.lane.b32.xlu0 %v651, 126
        %v703 = vpop.permute.xlu0 %702
        %704 = vrot.lane.b32.xlu0 %v650, 126
        %v705 = vpop.permute.xlu0 %704
        %706 = vrot.lane.b32.xlu0 %v654, 126
        %v707 = vpop.permute.xlu0 %706
        %708 = vrot.lane.b32.xlu0 %v653, 126
        %v709 = vpop.permute.xlu0 %708
        %710 = vrot.lane.b32.xlu0 %v657, 126
        %v711 = vpop.permute.xlu0 %710
        %712 = vrot.lane.b32.xlu0 %v656, 126
        %v713 = vpop.permute.xlu0 %712
        %714 = vrot.lane.b32.xlu0 %v660, 126
        %v715 = vpop.permute.xlu0 %714
        %716 = vrot.lane.b32.xlu0 %v659, 126
        %v717 = vpop.permute.xlu0 %716
        %718 = vrot.lane.b32.xlu0 %v663, 126
        %v719 = vpop.permute.xlu0 %718
        %720 = vrot.lane.b32.xlu0 %v662, 126
        %v721 = vpop.permute.xlu0 %720
        %722 = vrot.lane.b32.xlu0 %v666, 126
        %v723 = vpop.permute.xlu0 %722
        %724 = vrot.lane.b32.xlu0 %v665, 126
        %v725 = vpop.permute.xlu0 %724
        %726 = vrot.lane.b32.xlu0 %v669, 126
        %v727 = vpop.permute.xlu0 %726
        %728 = vrot.lane.b32.xlu0 %v668, 126
        %v729 = vpop.permute.xlu0 %728
        %730 = vrot.lane.b32.xlu0 %v672, 126
        %v731 = vpop.permute.xlu0 %730
        %732 = vrot.lane.b32.xlu0 %v671, 126
        %v733 = vpop.permute.xlu0 %732
        %734 = vrot.lane.b32.xlu0 %v675, 126
        %v735 = vpop.permute.xlu0 %734
        %736 = vrot.lane.b32.xlu0 %v674, 126
        %v737 = vpop.permute.xlu0 %736
        %738 = vrot.lane.b32.xlu0 %v678, 126
        %v739 = vpop.permute.xlu0 %738
        %740 = vrot.lane.b32.xlu0 %v677, 126
        %v741 = vpop.permute.xlu0 %740
        %742 = vrot.lane.b32.xlu0 %v681, 126
        %v743 = vpop.permute.xlu0 %742
        %744 = vrot.lane.b32.xlu0 %v680, 126
        %v745 = vpop.permute.xlu0 %744
        %v778 = vrot.slane %v256, 4
        %v779 = vrot.slane %v257, 4
        %v780 = vsel %vm443, %v778, %v779
        %v781 = vrot.slane %v265, 4
        %v782 = vrot.slane %v267, 4
        %v783 = vsel %vm443, %v781, %v782
        %v784 = vrot.slane %v271, 4
        %v785 = vrot.slane %v273, 4
        %v786 = vsel %vm443, %v784, %v785
        %v787 = vrot.slane %v371, 4
        %v788 = vrot.slane %v373, 4
        %v789 = vsel %vm443, %v787, %v788
        %v790 = vrot.slane %v375, 4
        %v791 = vrot.slane %v377, 4
        %v792 = vsel %vm443, %v790, %v791
        %v793 = vrot.slane %v355, 4
        %v794 = vrot.slane %v357, 4
        %v795 = vsel %vm443, %v793, %v794
        %v796 = vrot.slane %v359, 4
        %v797 = vrot.slane %v361, 4
        %v798 = vsel %vm443, %v796, %v797
        %v799 = vrot.slane %v303, 4
        %v800 = vrot.slane %v302, 4
        %v801 = vsel %vm443, %v799, %v800
        %v802 = vrot.slane %v307, 4
        %v803 = vrot.slane %v309, 4
        %v804 = vsel %vm443, %v802, %v803
        %v805 = vrot.slane %v313, 4
        %v806 = vrot.slane %v315, 4
        %v807 = vsel %vm443, %v805, %v806
        %v808 = vrot.slane %v379, 4
        %v809 = vrot.slane %v381, 4
        %v810 = vsel %vm443, %v808, %v809
        %v811 = vrot.slane %v383, 4
        %v812 = vrot.slane %v385, 4
        %v813 = vsel %vm443, %v811, %v812
        %v814 = vrot.slane %v363, 4
        %v815 = vrot.slane %v365, 4
        %v816 = vsel %vm443, %v814, %v815
        %v817 = vrot.slane %v367, 4
        %v818 = vrot.slane %v369, 4
        %v819 = vsel %vm443, %v817, %v818
        %v820 = vrot.slane %v345, 4
        %v821 = vrot.slane %v344, 4
        %v822 = vsel %vm443, %v820, %v821
        %v823 = vrot.slane %v349, 4
        %v824 = vrot.slane %v351, 4
        %v825 = vsel %vm443, %v823, %v824
        %826 = vrot.lane.b32.xlu0 %v780, 124
        %v827 = vpop.permute.xlu0 %826
        %828 = vrot.lane.b32.xlu0 %v779, 124
        %v829 = vpop.permute.xlu0 %828
        %830 = vrot.lane.b32.xlu0 %v783, 124
        %v831 = vpop.permute.xlu0 %830
        %832 = vrot.lane.b32.xlu0 %v782, 124
        %v833 = vpop.permute.xlu0 %832
        %834 = vrot.lane.b32.xlu0 %v786, 124
        %v835 = vpop.permute.xlu0 %834
        %836 = vrot.lane.b32.xlu0 %v785, 124
        %v837 = vpop.permute.xlu0 %836
        %838 = vrot.lane.b32.xlu0 %v789, 124
        %v839 = vpop.permute.xlu0 %838
        %840 = vrot.lane.b32.xlu0 %v788, 124
        %v841 = vpop.permute.xlu0 %840
        %842 = vrot.lane.b32.xlu0 %v792, 124
        %v843 = vpop.permute.xlu0 %842
        %844 = vrot.lane.b32.xlu0 %v791, 124
        %v845 = vpop.permute.xlu0 %844
        %846 = vrot.lane.b32.xlu0 %v795, 124
        %v847 = vpop.permute.xlu0 %846
        %848 = vrot.lane.b32.xlu0 %v794, 124
        %v849 = vpop.permute.xlu0 %848
        %850 = vrot.lane.b32.xlu0 %v798, 124
        %v851 = vpop.permute.xlu0 %850
        %852 = vrot.lane.b32.xlu0 %v797, 124
        %v853 = vpop.permute.xlu0 %852
        %854 = vrot.lane.b32.xlu0 %v801, 124
        %v855 = vpop.permute.xlu0 %854
        %856 = vrot.lane.b32.xlu0 %v800, 124
        %v857 = vpop.permute.xlu0 %856
        %858 = vrot.lane.b32.xlu0 %v804, 124
        %v859 = vpop.permute.xlu0 %858
        %860 = vrot.lane.b32.xlu0 %v803, 124
        %v861 = vpop.permute.xlu0 %860
        %862 = vrot.lane.b32.xlu0 %v807, 124
        %v863 = vpop.permute.xlu0 %862
        %864 = vrot.lane.b32.xlu0 %v806, 124
        %v865 = vpop.permute.xlu0 %864
        %866 = vrot.lane.b32.xlu0 %v810, 124
        %v867 = vpop.permute.xlu0 %866
        %868 = vrot.lane.b32.xlu0 %v809, 124
        %v869 = vpop.permute.xlu0 %868
        %870 = vrot.lane.b32.xlu0 %v813, 124
        %v871 = vpop.permute.xlu0 %870
        %872 = vrot.lane.b32.xlu0 %v812, 124
        %v873 = vpop.permute.xlu0 %872
        %874 = vrot.lane.b32.xlu0 %v816, 124
        %v875 = vpop.permute.xlu0 %874
        %876 = vrot.lane.b32.xlu0 %v815, 124
        %v877 = vpop.permute.xlu0 %876
        %878 = vrot.lane.b32.xlu0 %v819, 124
        %v879 = vpop.permute.xlu0 %878
        %880 = vrot.lane.b32.xlu0 %v818, 124
        %v881 = vpop.permute.xlu0 %880
        %882 = vrot.lane.b32.xlu0 %v822, 124
        %v883 = vpop.permute.xlu0 %882
        %884 = vrot.lane.b32.xlu0 %v821, 124
        %v885 = vpop.permute.xlu0 %884
        %886 = vrot.lane.b32.xlu0 %v825, 124
        %v887 = vpop.permute.xlu0 %886
        %888 = vrot.lane.b32.xlu0 %v824, 124
        %v889 = vpop.permute.xlu0 %888
        %vm922 = vcmask 1041408
        %v923 = vrot.slane %v256, 6
        %v924 = vrot.slane %v257, 6
        %v925 = vsel %vm922, %v923, %v924
        %v926 = vrot.slane %v392, 6
        %v927 = vrot.slane %v394, 6
        %v928 = vsel %vm922, %v926, %v927
        %v929 = vrot.slane %v396, 6
        %v930 = vrot.slane %v398, 6
        %v931 = vsel %vm922, %v929, %v930
        %v932 = vrot.slane %v400, 6
        %v933 = vrot.slane %v402, 6
        %v934 = vsel %vm922, %v932, %v933
        %v935 = vrot.slane %v404, 6
        %v936 = vrot.slane %v406, 6
        %v937 = vsel %vm922, %v935, %v936
        %v938 = vrot.slane %v408, 6
        %v939 = vrot.slane %v410, 6
        %v940 = vsel %vm922, %v938, %v939
        %v941 = vrot.slane %v412, 6
        %v942 = vrot.slane %v414, 6
        %v943 = vsel %vm922, %v941, %v942
        %v944 = vrot.slane %v388, 6
        %v945 = vrot.slane %v390, 6
        %v946 = vsel %vm922, %v944, %v945
        %v947 = vrot.slane %v420, 6
        %v948 = vrot.slane %v422, 6
        %v949 = vsel %vm922, %v947, %v948
        %v950 = vrot.slane %v424, 6
        %v951 = vrot.slane %v426, 6
        %v952 = vsel %vm922, %v950, %v951
        %v953 = vrot.slane %v428, 6
        %v954 = vrot.slane %v430, 6
        %v955 = vsel %vm922, %v953, %v954
        %v956 = vrot.slane %v432, 6
        %v957 = vrot.slane %v434, 6
        %v958 = vsel %vm922, %v956, %v957
        %v959 = vrot.slane %v436, 6
        %v960 = vrot.slane %v438, 6
        %v961 = vsel %vm922, %v959, %v960
        %v962 = vrot.slane %v440, 6
        %v963 = vrot.slane %v442, 6
        %v964 = vsel %vm922, %v962, %v963
        %v965 = vrot.slane %v416, 6
        %v966 = vrot.slane %v418, 6
        %v967 = vsel %vm922, %v965, %v966
        %v968 = vrot.slane %v448, 6
        %v969 = vrot.slane %v450, 6
        %v970 = vsel %vm922, %v968, %v969
        %971 = vrot.lane.b32.xlu0 %v925, 122
        %v972 = vpop.permute.xlu0 %971
        %973 = vrot.lane.b32.xlu0 %v924, 122
        %v974 = vpop.permute.xlu0 %973
        %975 = vrot.lane.b32.xlu0 %v928, 122
        %v976 = vpop.permute.xlu0 %975
        %977 = vrot.lane.b32.xlu0 %v927, 122
        %v978 = vpop.permute.xlu0 %977
        %979 = vrot.lane.b32.xlu0 %v931, 122
        %v980 = vpop.permute.xlu0 %979
        %981 = vrot.lane.b32.xlu0 %v930, 122
        %v982 = vpop.permute.xlu0 %981
        %983 = vrot.lane.b32.xlu0 %v934, 122
        %v984 = vpop.permute.xlu0 %983
        %985 = vrot.lane.b32.xlu0 %v933, 122
        %v986 = vpop.permute.xlu0 %985
        %987 = vrot.lane.b32.xlu0 %v937, 122
        %v988 = vpop.permute.xlu0 %987
        %989 = vrot.lane.b32.xlu0 %v936, 122
        %v990 = vpop.permute.xlu0 %989
        %991 = vrot.lane.b32.xlu0 %v940, 122
        %v992 = vpop.permute.xlu0 %991
        %993 = vrot.lane.b32.xlu0 %v939, 122
        %v994 = vpop.permute.xlu0 %993
        %995 = vrot.lane.b32.xlu0 %v943, 122
        %v996 = vpop.permute.xlu0 %995
        %997 = vrot.lane.b32.xlu0 %v942, 122
        %v998 = vpop.permute.xlu0 %997
        %999 = vrot.lane.b32.xlu0 %v946, 122
        %v1000 = vpop.permute.xlu0 %999
        %1001 = vrot.lane.b32.xlu0 %v945, 122
        %v1002 = vpop.permute.xlu0 %1001
        %1003 = vrot.lane.b32.xlu0 %v949, 122
        %v1004 = vpop.permute.xlu0 %1003
        %1005 = vrot.lane.b32.xlu0 %v948, 122
        %v1006 = vpop.permute.xlu0 %1005
        %1007 = vrot.lane.b32.xlu0 %v952, 122
        %v1008 = vpop.permute.xlu0 %1007
        %1009 = vrot.lane.b32.xlu0 %v951, 122
        %v1010 = vpop.permute.xlu0 %1009
        %1011 = vrot.lane.b32.xlu0 %v955, 122
        %v1012 = vpop.permute.xlu0 %1011
        %1013 = vrot.lane.b32.xlu0 %v954, 122
        %v1014 = vpop.permute.xlu0 %1013
        %1015 = vrot.lane.b32.xlu0 %v958, 122
        %v1016 = vpop.permute.xlu0 %1015
        %1017 = vrot.lane.b32.xlu0 %v957, 122
        %v1018 = vpop.permute.xlu0 %1017
        %1019 = vrot.lane.b32.xlu0 %v961, 122
        %v1020 = vpop.permute.xlu0 %1019
        %1021 = vrot.lane.b32.xlu0 %v960, 122
        %v1022 = vpop.permute.xlu0 %1021
        %1023 = vrot.lane.b32.xlu0 %v964, 122
        %v1024 = vpop.permute.xlu0 %1023
        %1025 = vrot.lane.b32.xlu0 %v963, 122
        %v1026 = vpop.permute.xlu0 %1025
        %1027 = vrot.lane.b32.xlu0 %v967, 122
        %v1028 = vpop.permute.xlu0 %1027
        %1029 = vrot.lane.b32.xlu0 %v966, 122
        %v1030 = vpop.permute.xlu0 %1029
        %1031 = vrot.lane.b32.xlu0 %v970, 122
        %v1032 = vpop.permute.xlu0 %1031
        %1033 = vrot.lane.b32.xlu0 %v969, 122
        %v1034 = vpop.permute.xlu0 %1033
        %v1067 = vrot.slane %v452, 2
        %v1068 = vrot.slane %v454, 2
        %v1069 = vsel %vm342, %v1067, %v1068
        %v1070 = vrot.slane %v456, 2
        %v1071 = vrot.slane %v458, 2
        %v1072 = vsel %vm342, %v1070, %v1071
        %v1073 = vrot.slane %v460, 2
        %v1074 = vrot.slane %v462, 2
        %v1075 = vsel %vm342, %v1073, %v1074
        %v1076 = vrot.slane %v464, 2
        %v1077 = vrot.slane %v466, 2
        %v1078 = vsel %vm342, %v1076, %v1077
        %v1079 = vrot.slane %v468, 2
        %v1080 = vrot.slane %v470, 2
        %v1081 = vsel %vm342, %v1079, %v1080
        %v1082 = vrot.slane %v475, 2
        %v1083 = vrot.slane %v477, 2
        %v1084 = vsel %vm342, %v1082, %v1083
        %v1085 = vrot.slane %v473, 2
        %v1086 = vrot.slane %v472, 2
        %v1087 = vsel %vm342, %v1085, %v1086
        %v1088 = vrot.slane %v479, 2
        %v1089 = vrot.slane %v481, 2
        %v1090 = vsel %vm342, %v1088, %v1089
        %v1091 = vrot.slane %v483, 2
        %v1092 = vrot.slane %v485, 2
        %v1093 = vsel %vm342, %v1091, %v1092
        %v1094 = vrot.slane %v487, 2
        %v1095 = vrot.slane %v489, 2
        %v1096 = vsel %vm342, %v1094, %v1095
        %v1097 = vrot.slane %v491, 2
        %v1098 = vrot.slane %v493, 2
        %v1099 = vsel %vm342, %v1097, %v1098
        %v1100 = vrot.slane %v495, 2
        %v1101 = vrot.slane %v497, 2
        %v1102 = vsel %vm342, %v1100, %v1101
        %v1103 = vrot.slane %v414, 2
        %v1104 = vrot.slane %v499, 2
        %v1105 = vsel %vm342, %v1103, %v1104
        %v1106 = vrot.slane %v390, 2
        %v1107 = vrot.slane %v389, 2
        %v1108 = vsel %vm342, %v1106, %v1107
        %v1109 = vrot.slane %v501, 2
        %v1110 = vrot.slane %v503, 2
        %v1111 = vsel %vm342, %v1109, %v1110
        %1112 = vrot.lane.b32.xlu0 %v1069, 127
        %v1113 = vpop.permute.xlu0 %1112
        %1114 = vrot.lane.b32.xlu0 %v1068, 127
        %v1115 = vpop.permute.xlu0 %1114
        %1116 = vrot.lane.b32.xlu0 %v1072, 127
        %v1117 = vpop.permute.xlu0 %1116
        %1118 = vrot.lane.b32.xlu0 %v1071, 127
        %v1119 = vpop.permute.xlu0 %1118
        %1120 = vrot.lane.b32.xlu0 %v1075, 127
        %v1121 = vpop.permute.xlu0 %1120
        %1122 = vrot.lane.b32.xlu0 %v1074, 127
        %v1123 = vpop.permute.xlu0 %1122
        %1124 = vrot.lane.b32.xlu0 %v1078, 127
        %v1125 = vpop.permute.xlu0 %1124
        %1126 = vrot.lane.b32.xlu0 %v1077, 127
        %v1127 = vpop.permute.xlu0 %1126
        %1128 = vrot.lane.b32.xlu0 %v1081, 127
        %v1129 = vpop.permute.xlu0 %1128
        %1130 = vrot.lane.b32.xlu0 %v1080, 127
        %v1131 = vpop.permute.xlu0 %1130
        %1132 = vrot.lane.b32.xlu0 %v1084, 127
        %v1133 = vpop.permute.xlu0 %1132
        %1134 = vrot.lane.b32.xlu0 %v1083, 127
        %v1135 = vpop.permute.xlu0 %1134
        %1136 = vrot.lane.b32.xlu0 %v1087, 127
        %v1137 = vpop.permute.xlu0 %1136
        %1138 = vrot.lane.b32.xlu0 %v1086, 127
        %v1139 = vpop.permute.xlu0 %1138
        %1140 = vrot.lane.b32.xlu0 %v1090, 127
        %v1141 = vpop.permute.xlu0 %1140
        %1142 = vrot.lane.b32.xlu0 %v1089, 127
        %v1143 = vpop.permute.xlu0 %1142
        %1144 = vrot.lane.b32.xlu0 %v1093, 127
        %v1145 = vpop.permute.xlu0 %1144
        %1146 = vrot.lane.b32.xlu0 %v1092, 127
        %v1147 = vpop.permute.xlu0 %1146
        %1148 = vrot.lane.b32.xlu0 %v1096, 127
        %v1149 = vpop.permute.xlu0 %1148
        %1150 = vrot.lane.b32.xlu0 %v1095, 127
        %v1151 = vpop.permute.xlu0 %1150
        %1152 = vrot.lane.b32.xlu0 %v1099, 127
        %v1153 = vpop.permute.xlu0 %1152
        %1154 = vrot.lane.b32.xlu0 %v1098, 127
        %v1155 = vpop.permute.xlu0 %1154
        %1156 = vrot.lane.b32.xlu0 %v1102, 127
        %v1157 = vpop.permute.xlu0 %1156
        %1158 = vrot.lane.b32.xlu0 %v1101, 127
        %v1159 = vpop.permute.xlu0 %1158
        %1160 = vrot.lane.b32.xlu0 %v1105, 127
        %v1161 = vpop.permute.xlu0 %1160
        %1162 = vrot.lane.b32.xlu0 %v1104, 127
        %v1163 = vpop.permute.xlu0 %1162
        %1164 = vrot.lane.b32.xlu0 %v1108, 127
        %v1165 = vpop.permute.xlu0 %1164
        %1166 = vrot.lane.b32.xlu0 %v1107, 127
        %v1167 = vpop.permute.xlu0 %1166
        %1168 = vrot.lane.b32.xlu0 %v1111, 127
        %v1169 = vpop.permute.xlu0 %1168
        %1170 = vrot.lane.b32.xlu0 %v1110, 127
        %v1171 = vpop.permute.xlu0 %1170
        %v1204 = vrot.slane %v452, 4
        %v1205 = vrot.slane %v454, 4
        %v1206 = vsel %vm443, %v1204, %v1205
        %v1207 = vrot.slane %v456, 4
        %v1208 = vrot.slane %v458, 4
        %v1209 = vsel %vm443, %v1207, %v1208
        %v1210 = vrot.slane %v460, 4
        %v1211 = vrot.slane %v462, 4
        %v1212 = vsel %vm443, %v1210, %v1211
        %v1213 = vrot.slane %v505, 4
        %v1214 = vrot.slane %v507, 4
        %v1215 = vsel %vm443, %v1213, %v1214
        %v1216 = vrot.slane %v509, 4
        %v1217 = vrot.slane %v511, 4
        %v1218 = vsel %vm443, %v1216, %v1217
        %v1219 = vrot.slane %v475, 4
        %v1220 = vrot.slane %v477, 4
        %v1221 = vsel %vm443, %v1219, %v1220
        %v1222 = vrot.slane %v473, 4
        %v1223 = vrot.slane %v472, 4
        %v1224 = vsel %vm443, %v1222, %v1223
        %v1225 = vrot.slane %v479, 4
        %v1226 = vrot.slane %v481, 4
        %v1227 = vsel %vm443, %v1225, %v1226
        %v1228 = vrot.slane %v483, 4
        %v1229 = vrot.slane %v485, 4
        %v1230 = vsel %vm443, %v1228, %v1229
        %v1231 = vrot.slane %v487, 4
        %v1232 = vrot.slane %v489, 4
        %v1233 = vsel %vm443, %v1231, %v1232
        %v1234 = vrot.slane %v406, 4
        %v1235 = vrot.slane %v513, 4
        %v1236 = vsel %vm443, %v1234, %v1235
        %v1237 = vrot.slane %v410, 4
        %v1238 = vrot.slane %v515, 4
        %v1239 = vsel %vm443, %v1237, %v1238
        %v1240 = vrot.slane %v414, 4
        %v1241 = vrot.slane %v499, 4
        %v1242 = vsel %vm443, %v1240, %v1241
        %v1243 = vrot.slane %v390, 4
        %v1244 = vrot.slane %v389, 4
        %v1245 = vsel %vm443, %v1243, %v1244
        %v1246 = vrot.slane %v501, 4
        %v1247 = vrot.slane %v503, 4
        %v1248 = vsel %vm443, %v1246, %v1247
        %1249 = vrot.lane.b32.xlu0 %v446, 125
        %v1250 = vpop.permute.xlu0 %1249
        %1251 = vrot.lane.b32.xlu0 %v445, 125
        %v1252 = vpop.permute.xlu0 %1251
        %1253 = vrot.lane.b32.xlu0 %v1206, 125
        %v1254 = vpop.permute.xlu0 %1253
        %1255 = vrot.lane.b32.xlu0 %v1205, 125
        %v1256 = vpop.permute.xlu0 %1255
        %1257 = vrot.lane.b32.xlu0 %v1209, 125
        %v1258 = vpop.permute.xlu0 %1257
        %1259 = vrot.lane.b32.xlu0 %v1208, 125
        %v1260 = vpop.permute.xlu0 %1259
        %1261 = vrot.lane.b32.xlu0 %v1212, 125
        %v1262 = vpop.permute.xlu0 %1261
        %1263 = vrot.lane.b32.xlu0 %v1211, 125
        %v1264 = vpop.permute.xlu0 %1263
        %1265 = vrot.lane.b32.xlu0 %v1215, 125
        %v1266 = vpop.permute.xlu0 %1265
        %1267 = vrot.lane.b32.xlu0 %v1214, 125
        %v1268 = vpop.permute.xlu0 %1267
        %1269 = vrot.lane.b32.xlu0 %v1218, 125
        %v1270 = vpop.permute.xlu0 %1269
        %1271 = vrot.lane.b32.xlu0 %v1217, 125
        %v1272 = vpop.permute.xlu0 %1271
        %1273 = vrot.lane.b32.xlu0 %v1221, 125
        %v1274 = vpop.permute.xlu0 %1273
        %1275 = vrot.lane.b32.xlu0 %v1220, 125
        %v1276 = vpop.permute.xlu0 %1275
        %1277 = vrot.lane.b32.xlu0 %v1224, 125
        %v1278 = vpop.permute.xlu0 %1277
        %1279 = vrot.lane.b32.xlu0 %v1223, 125
        %v1280 = vpop.permute.xlu0 %1279
        %1281 = vrot.lane.b32.xlu0 %v1227, 125
        %v1282 = vpop.permute.xlu0 %1281
        %1283 = vrot.lane.b32.xlu0 %v1226, 125
        %v1284 = vpop.permute.xlu0 %1283
        %1285 = vrot.lane.b32.xlu0 %v1230, 125
        %v1286 = vpop.permute.xlu0 %1285
        %1287 = vrot.lane.b32.xlu0 %v1229, 125
        %v1288 = vpop.permute.xlu0 %1287
        %1289 = vrot.lane.b32.xlu0 %v1233, 125
        %v1290 = vpop.permute.xlu0 %1289
        %1291 = vrot.lane.b32.xlu0 %v1232, 125
        %v1292 = vpop.permute.xlu0 %1291
        %1293 = vrot.lane.b32.xlu0 %v1236, 125
        %v1294 = vpop.permute.xlu0 %1293
        %1295 = vrot.lane.b32.xlu0 %v1235, 125
        %v1296 = vpop.permute.xlu0 %1295
        %1297 = vrot.lane.b32.xlu0 %v1239, 125
        %v1298 = vpop.permute.xlu0 %1297
        %1299 = vrot.lane.b32.xlu0 %v1238, 125
        %v1300 = vpop.permute.xlu0 %1299
        %1301 = vrot.lane.b32.xlu0 %v1242, 125
        %v1302 = vpop.permute.xlu0 %1301
        %1303 = vrot.lane.b32.xlu0 %v1241, 125
        %v1304 = vpop.permute.xlu0 %1303
        %1305 = vrot.lane.b32.xlu0 %v1245, 125
        %v1306 = vpop.permute.xlu0 %1305
        %1307 = vrot.lane.b32.xlu0 %v1244, 125
        %v1308 = vpop.permute.xlu0 %1307
        %1309 = vrot.lane.b32.xlu0 %v1248, 125
        %v1310 = vpop.permute.xlu0 %1309
        %1311 = vrot.lane.b32.xlu0 %v1247, 125
        %v1312 = vpop.permute.xlu0 %1311
        %v1345 = vrot.slane %v258, 6
        %v1346 = vrot.slane %v259, 6
        %v1347 = vsel %vm922, %v1345, %v1346
        %v1348 = vrot.slane %v452, 6
        %v1349 = vrot.slane %v454, 6
        %v1350 = vsel %vm922, %v1348, %v1349
        %v1351 = vrot.slane %v522, 6
        %v1352 = vrot.slane %v524, 6
        %v1353 = vsel %vm922, %v1351, %v1352
        %v1354 = vrot.slane %v526, 6
        %v1355 = vrot.slane %v528, 6
        %v1356 = vsel %vm922, %v1354, %v1355
        %v1357 = vrot.slane %v530, 6
        %v1358 = vrot.slane %v532, 6
        %v1359 = vsel %vm922, %v1357, %v1358
        %v1360 = vrot.slane %v534, 6
        %v1361 = vrot.slane %v536, 6
        %v1362 = vsel %vm922, %v1360, %v1361
        %v1363 = vrot.slane %v538, 6
        %v1364 = vrot.slane %v540, 6
        %v1365 = vsel %vm922, %v1363, %v1364
        %v1366 = vrot.slane %v518, 6
        %v1367 = vrot.slane %v520, 6
        %v1368 = vsel %vm922, %v1366, %v1367
        %v1369 = vrot.slane %v542, 6
        %v1370 = vrot.slane %v544, 6
        %v1371 = vsel %vm922, %v1369, %v1370
        %v1372 = vrot.slane %v549, 6
        %v1373 = vrot.slane %v551, 6
        %v1374 = vsel %vm922, %v1372, %v1373
        %v1375 = vrot.slane %v553, 6
        %v1376 = vrot.slane %v555, 6
        %v1377 = vsel %vm922, %v1375, %v1376
        %v1378 = vrot.slane %v557, 6
        %v1379 = vrot.slane %v559, 6
        %v1380 = vsel %vm922, %v1378, %v1379
        %v1381 = vrot.slane %v561, 6
        %v1382 = vrot.slane %v563, 6
        %v1383 = vsel %vm922, %v1381, %v1382
        %v1384 = vrot.slane %v565, 6
        %v1385 = vrot.slane %v567, 6
        %v1386 = vsel %vm922, %v1384, %v1385
        %v1387 = vrot.slane %v545, 6
        %v1388 = vrot.slane %v547, 6
        %v1389 = vsel %vm922, %v1387, %v1388
        %v1390 = vrot.slane %v569, 6
        %v1391 = vrot.slane %v571, 6
        %v1392 = vsel %vm922, %v1390, %v1391
        %1393 = vrot.lane.b32.xlu0 %v1347, 123
        %v1394 = vpop.permute.xlu0 %1393
        %1395 = vrot.lane.b32.xlu0 %v1346, 123
        %v1396 = vpop.permute.xlu0 %1395
        %1397 = vrot.lane.b32.xlu0 %v1350, 123
        %v1398 = vpop.permute.xlu0 %1397
        %1399 = vrot.lane.b32.xlu0 %v1349, 123
        %v1400 = vpop.permute.xlu0 %1399
        %1401 = vrot.lane.b32.xlu0 %v1353, 123
        %v1402 = vpop.permute.xlu0 %1401
        %1403 = vrot.lane.b32.xlu0 %v1352, 123
        %v1404 = vpop.permute.xlu0 %1403
        %1405 = vrot.lane.b32.xlu0 %v1356, 123
        %v1406 = vpop.permute.xlu0 %1405
        %1407 = vrot.lane.b32.xlu0 %v1355, 123
        %v1408 = vpop.permute.xlu0 %1407
        %1409 = vrot.lane.b32.xlu0 %v1359, 123
        %v1410 = vpop.permute.xlu0 %1409
        %1411 = vrot.lane.b32.xlu0 %v1358, 123
        %v1412 = vpop.permute.xlu0 %1411
        %1413 = vrot.lane.b32.xlu0 %v1362, 123
        %v1414 = vpop.permute.xlu0 %1413
        %1415 = vrot.lane.b32.xlu0 %v1361, 123
        %v1416 = vpop.permute.xlu0 %1415
        %1417 = vrot.lane.b32.xlu0 %v1365, 123
        %v1418 = vpop.permute.xlu0 %1417
        %1419 = vrot.lane.b32.xlu0 %v1364, 123
        %v1420 = vpop.permute.xlu0 %1419
        %1421 = vrot.lane.b32.xlu0 %v1368, 123
        %v1422 = vpop.permute.xlu0 %1421
        %1423 = vrot.lane.b32.xlu0 %v1367, 123
        %v1424 = vpop.permute.xlu0 %1423
        %1425 = vrot.lane.b32.xlu0 %v1371, 123
        %v1426 = vpop.permute.xlu0 %1425
        %1427 = vrot.lane.b32.xlu0 %v1370, 123
        %v1428 = vpop.permute.xlu0 %1427
        %1429 = vrot.lane.b32.xlu0 %v1374, 123
        %v1430 = vpop.permute.xlu0 %1429
        %1431 = vrot.lane.b32.xlu0 %v1373, 123
        %v1432 = vpop.permute.xlu0 %1431
        %1433 = vrot.lane.b32.xlu0 %v1377, 123
        %v1434 = vpop.permute.xlu0 %1433
        %1435 = vrot.lane.b32.xlu0 %v1376, 123
        %v1436 = vpop.permute.xlu0 %1435
        %1437 = vrot.lane.b32.xlu0 %v1380, 123
        %v1438 = vpop.permute.xlu0 %1437
        %1439 = vrot.lane.b32.xlu0 %v1379, 123
        %v1440 = vpop.permute.xlu0 %1439
        %1441 = vrot.lane.b32.xlu0 %v1383, 123
        %v1442 = vpop.permute.xlu0 %1441
        %1443 = vrot.lane.b32.xlu0 %v1382, 123
        %v1444 = vpop.permute.xlu0 %1443
        %1445 = vrot.lane.b32.xlu0 %v1386, 123
        %v1446 = vpop.permute.xlu0 %1445
        %1447 = vrot.lane.b32.xlu0 %v1385, 123
        %v1448 = vpop.permute.xlu0 %1447
        %1449 = vrot.lane.b32.xlu0 %v1389, 123
        %v1450 = vpop.permute.xlu0 %1449
        %1451 = vrot.lane.b32.xlu0 %v1388, 123
        %v1452 = vpop.permute.xlu0 %1451
        %1453 = vrot.lane.b32.xlu0 %v1392, 123
        %v1454 = vpop.permute.xlu0 %1453
        %1455 = vrot.lane.b32.xlu0 %v1391, 123
        %v1456 = vpop.permute.xlu0 %1455
        %v1489 = vrot.slane %v573, 2
        %v1490 = vrot.slane %v575, 2
        %v1491 = vsel %vm342, %v1489, %v1490
        %v1492 = vrot.slane %v577, 2
        %v1493 = vrot.slane %v579, 2
        %v1494 = vsel %vm342, %v1492, %v1493
        %v1495 = vrot.slane %v581, 2
        %v1496 = vrot.slane %v583, 2
        %v1497 = vsel %vm342, %v1495, %v1496
        %v1498 = vrot.slane %v585, 2
        %v1499 = vrot.slane %v587, 2
        %v1500 = vsel %vm342, %v1498, %v1499
        %v1501 = vrot.slane %v589, 2
        %v1502 = vrot.slane %v591, 2
        %v1503 = vsel %vm342, %v1501, %v1502
        %v1504 = vrot.slane %v593, 2
        %v1505 = vrot.slane %v595, 2
        %v1506 = vsel %vm342, %v1504, %v1505
        %v1507 = vrot.slane %v598, 2
        %v1508 = vrot.slane %v597, 2
        %v1509 = vsel %vm342, %v1507, %v1508
        %v1510 = vrot.slane %v600, 2
        %v1511 = vrot.slane %v602, 2
        %v1512 = vsel %vm342, %v1510, %v1511
        %v1513 = vrot.slane %v604, 2
        %v1514 = vrot.slane %v606, 2
        %v1515 = vsel %vm342, %v1513, %v1514
        %v1516 = vrot.slane %v608, 2
        %v1517 = vrot.slane %v610, 2
        %v1518 = vsel %vm342, %v1516, %v1517
        %v1519 = vrot.slane %v612, 2
        %v1520 = vrot.slane %v614, 2
        %v1521 = vsel %vm342, %v1519, %v1520
        %v1522 = vrot.slane %v616, 2
        %v1523 = vrot.slane %v618, 2
        %v1524 = vsel %vm342, %v1522, %v1523
        %v1525 = vrot.slane %v620, 2
        %v1526 = vrot.slane %v622, 2
        %v1527 = vsel %vm342, %v1525, %v1526
        %v1528 = vrot.slane %v520, 2
        %v1529 = vrot.slane %v519, 2
        %v1530 = vsel %vm342, %v1528, %v1529
        %v1531 = vrot.slane %v544, 2
        %v1532 = vrot.slane %v624, 2
        %v1533 = vsel %vm342, %v1531, %v1532
        %v1566 = vrot.slane %v260, 4
        %v1567 = vrot.slane %v261, 4
        %v1568 = vsel %vm443, %v1566, %v1567
        %v1569 = vrot.slane %v573, 4
        %v1570 = vrot.slane %v575, 4
        %v1571 = vsel %vm443, %v1569, %v1570
        %v1572 = vrot.slane %v577, 4
        %v1573 = vrot.slane %v579, 4
        %v1574 = vsel %vm443, %v1572, %v1573
        %v1575 = vrot.slane %v581, 4
        %v1576 = vrot.slane %v583, 4
        %v1577 = vsel %vm443, %v1575, %v1576
        %v1578 = vrot.slane %v585, 4
        %v1579 = vrot.slane %v587, 4
        %v1580 = vsel %vm443, %v1578, %v1579
        %v1581 = vrot.slane %v626, 4
        %v1582 = vrot.slane %v628, 4
        %v1583 = vsel %vm443, %v1581, %v1582
        %v1584 = vrot.slane %v630, 4
        %v1585 = vrot.slane %v632, 4
        %v1586 = vsel %vm443, %v1584, %v1585
        %v1587 = vrot.slane %v598, 4
        %v1588 = vrot.slane %v597, 4
        %v1589 = vsel %vm443, %v1587, %v1588
        %v1590 = vrot.slane %v600, 4
        %v1591 = vrot.slane %v602, 4
        %v1592 = vsel %vm443, %v1590, %v1591
        %v1593 = vrot.slane %v604, 4
        %v1594 = vrot.slane %v606, 4
        %v1595 = vsel %vm443, %v1593, %v1594
        %v1596 = vrot.slane %v608, 4
        %v1597 = vrot.slane %v610, 4
        %v1598 = vsel %vm443, %v1596, %v1597
        %v1599 = vrot.slane %v612, 4
        %v1600 = vrot.slane %v614, 4
        %v1601 = vsel %vm443, %v1599, %v1600
        %v1602 = vrot.slane %v536, 4
        %v1603 = vrot.slane %v634, 4
        %v1604 = vsel %vm443, %v1602, %v1603
        %v1605 = vrot.slane %v540, 4
        %v1606 = vrot.slane %v636, 4
        %v1607 = vsel %vm443, %v1605, %v1606
        %v1608 = vrot.slane %v520, 4
        %v1609 = vrot.slane %v519, 4
        %v1610 = vsel %vm443, %v1608, %v1609
        %v1611 = vrot.slane %v544, 4
        %v1612 = vrot.slane %v624, 4
        %v1613 = vsel %vm443, %v1611, %v1612
        %1614 = vrot.lane.b32.xlu0 %v1568, 126
        %v1615 = vpop.permute.xlu0 %1614
        %1616 = vrot.lane.b32.xlu0 %v1567, 126
        %v1617 = vpop.permute.xlu0 %1616
        %1618 = vrot.lane.b32.xlu0 %v1571, 126
        %v1619 = vpop.permute.xlu0 %1618
        %1620 = vrot.lane.b32.xlu0 %v1570, 126
        %v1621 = vpop.permute.xlu0 %1620
        %1622 = vrot.lane.b32.xlu0 %v1574, 126
        %v1623 = vpop.permute.xlu0 %1622
        %1624 = vrot.lane.b32.xlu0 %v1573, 126
        %v1625 = vpop.permute.xlu0 %1624
        %1626 = vrot.lane.b32.xlu0 %v1577, 126
        %v1627 = vpop.permute.xlu0 %1626
        %1628 = vrot.lane.b32.xlu0 %v1576, 126
        %v1629 = vpop.permute.xlu0 %1628
        %1630 = vrot.lane.b32.xlu0 %v1580, 126
        %v1631 = vpop.permute.xlu0 %1630
        %1632 = vrot.lane.b32.xlu0 %v1579, 126
        %v1633 = vpop.permute.xlu0 %1632
        %1634 = vrot.lane.b32.xlu0 %v1583, 126
        %v1635 = vpop.permute.xlu0 %1634
        %1636 = vrot.lane.b32.xlu0 %v1582, 126
        %v1637 = vpop.permute.xlu0 %1636
        %1638 = vrot.lane.b32.xlu0 %v1586, 126
        %v1639 = vpop.permute.xlu0 %1638
        %1640 = vrot.lane.b32.xlu0 %v1585, 126
        %v1641 = vpop.permute.xlu0 %1640
        %1642 = vrot.lane.b32.xlu0 %v1589, 126
        %v1643 = vpop.permute.xlu0 %1642
        %1644 = vrot.lane.b32.xlu0 %v1588, 126
        %v1645 = vpop.permute.xlu0 %1644
        %1646 = vrot.lane.b32.xlu0 %v1592, 126
        %v1647 = vpop.permute.xlu0 %1646
        %1648 = vrot.lane.b32.xlu0 %v1591, 126
        %v1649 = vpop.permute.xlu0 %1648
        %1650 = vrot.lane.b32.xlu0 %v1595, 126
        %v1651 = vpop.permute.xlu0 %1650
        %1652 = vrot.lane.b32.xlu0 %v1594, 126
        %v1653 = vpop.permute.xlu0 %1652
        %1654 = vrot.lane.b32.xlu0 %v1598, 126
        %v1655 = vpop.permute.xlu0 %1654
        %1656 = vrot.lane.b32.xlu0 %v1597, 126
        %v1657 = vpop.permute.xlu0 %1656
        %1658 = vrot.lane.b32.xlu0 %v1601, 126
        %v1659 = vpop.permute.xlu0 %1658
        %1660 = vrot.lane.b32.xlu0 %v1600, 126
        %v1661 = vpop.permute.xlu0 %1660
        %1662 = vrot.lane.b32.xlu0 %v1604, 126
        %v1663 = vpop.permute.xlu0 %1662
        %1664 = vrot.lane.b32.xlu0 %v1603, 126
        %v1665 = vpop.permute.xlu0 %1664
        %1666 = vrot.lane.b32.xlu0 %v1607, 126
        %v1667 = vpop.permute.xlu0 %1666
        %1668 = vrot.lane.b32.xlu0 %v1606, 126
        %v1669 = vpop.permute.xlu0 %1668
        %1670 = vrot.lane.b32.xlu0 %v1610, 126
        %v1671 = vpop.permute.xlu0 %1670
        %1672 = vrot.lane.b32.xlu0 %v1609, 126
        %v1673 = vpop.permute.xlu0 %1672
        %1674 = vrot.lane.b32.xlu0 %v1613, 126
        %v1675 = vpop.permute.xlu0 %1674
        %1676 = vrot.lane.b32.xlu0 %v1612, 126
        %v1677 = vpop.permute.xlu0 %1676
        %v1710 = vrot.slane %v260, 6
        %v1711 = vrot.slane %v261, 6
        %v1712 = vsel %vm922, %v1710, %v1711
        %v1713 = vrot.slane %v573, 6
        %v1714 = vrot.slane %v575, 6
        %v1715 = vsel %vm922, %v1713, %v1714
        %v1716 = vrot.slane %v577, 6
        %v1717 = vrot.slane %v579, 6
        %v1718 = vsel %vm922, %v1716, %v1717
        %1719 = vrot.lane.b32.xlu0 %v1712, 124
        %v1720 = vpop.permute.xlu0 %1719
        %1721 = vrot.lane.b32.xlu0 %v1711, 124
        %v1722 = vpop.permute.xlu0 %1721
        %1723 = vrot.lane.b32.xlu0 %v1715, 124
        %v1724 = vpop.permute.xlu0 %1723
        %1725 = vrot.lane.b32.xlu0 %v1714, 124
        %v1726 = vpop.permute.xlu0 %1725
        %1727 = vrot.lane.b32.xlu0 %v1718, 124
        %v1728 = vpop.permute.xlu0 %1727
        %1729 = vrot.lane.b32.xlu0 %v1717, 124
        %v1730 = vpop.permute.xlu0 %1729
        %v1736 = vcombine.low %v256, %v271
        %v1737 = vcombine.high %v256, %v271
        %v1739 = vunpack.c.l.s4 1983009808
        %v1740 = vunpack.c.0.s8 %v1739
        %v1741 = vlaneseq
        %v1742 = vshrl.u32 %v1741, 7
        %v1743 = vsub.s32 %v1740, %v1742
        %v1744 = vrot.slane %v1736, %v1743
        %v1746 = vunpack.c.l.s4 1983009808
        %v1747 = vunpack.c.0.s8 %v1746
        %v1748 = vlaneseq
        %v1749 = vshrl.u32 %v1748, 7
        %v1750 = vsub.s32 %v1747, %v1749
        %v1751 = vrot.slane %v1737, %v1750
        %v1752 = vcombine.low %v265, %v277
        %v1753 = vcombine.high %v265, %v277
        %v1755 = vunpack.c.l.s4 1983009808
        %v1756 = vunpack.c.0.s8 %v1755
        %v1757 = vlaneseq
        %v1758 = vshrl.u32 %v1757, 7
        %v1759 = vsub.s32 %v1756, %v1758
        %v1760 = vrot.slane %v1752, %v1759
        %v1762 = vunpack.c.l.s4 1983009808
        %v1763 = vunpack.c.0.s8 %v1762
        %v1764 = vlaneseq
        %v1765 = vshrl.u32 %v1764, 7
        %v1766 = vsub.s32 %v1763, %v1765
        %v1767 = vrot.slane %v1753, %v1766
        %v1768 = vcombine.low %v283, %v295
        %v1769 = vcombine.high %v283, %v295
        %v1771 = vunpack.c.l.s4 1983009808
        %v1772 = vunpack.c.0.s8 %v1771
        %v1773 = vlaneseq
        %v1774 = vshrl.u32 %v1773, 7
        %v1775 = vsub.s32 %v1772, %v1774
        %v1776 = vrot.slane %v1768, %v1775
        %v1778 = vunpack.c.l.s4 1983009808
        %v1779 = vunpack.c.0.s8 %v1778
        %v1780 = vlaneseq
        %v1781 = vshrl.u32 %v1780, 7
        %v1782 = vsub.s32 %v1779, %v1781
        %v1783 = vrot.slane %v1769, %v1782
        %v1784 = vcombine.low %v289, %v303
        %v1785 = vcombine.high %v289, %v303
        %v1787 = vunpack.c.l.s4 1983009808
        %v1788 = vunpack.c.0.s8 %v1787
        %v1789 = vlaneseq
        %v1790 = vshrl.u32 %v1789, 7
        %v1791 = vsub.s32 %v1788, %v1790
        %v1792 = vrot.slane %v1784, %v1791
        %v1794 = vunpack.c.l.s4 1983009808
        %v1795 = vunpack.c.0.s8 %v1794
        %v1796 = vlaneseq
        %v1797 = vshrl.u32 %v1796, 7
        %v1798 = vsub.s32 %v1795, %v1797
        %v1799 = vrot.slane %v1785, %v1798
        %v1800 = vcombine.low %v1744, %v1760
        %v1801 = vcombine.high %v1744, %v1760
        %v1803 = vunpack.c.l.s4 1934713408
        %v1804 = vunpack.c.0.s8 %v1803
        %v1805 = vlaneseq
        %v1806 = vshrl.u32 %v1805, 7
        %v1807 = vsub.s32 %v1804, %v1806
        %v1808 = vrot.slane %v1800, %v1807
        %v1810 = vunpack.c.l.s4 1934713408
        %v1811 = vunpack.c.0.s8 %v1810
        %v1812 = vlaneseq
        %v1813 = vshrl.u32 %v1812, 7
        %v1814 = vsub.s32 %v1811, %v1813
        %v1815 = vrot.slane %v1801, %v1814
        %v1816 = vcombine.low %v1751, %v1767
        %v1817 = vcombine.high %v1751, %v1767
        %v1819 = vunpack.c.l.s4 1934713408
        %v1820 = vunpack.c.0.s8 %v1819
        %v1821 = vlaneseq
        %v1822 = vshrl.u32 %v1821, 7
        %v1823 = vsub.s32 %v1820, %v1822
        %v1824 = vrot.slane %v1816, %v1823
        %v1826 = vunpack.c.l.s4 1934713408
        %v1827 = vunpack.c.0.s8 %v1826
        %v1828 = vlaneseq
        %v1829 = vshrl.u32 %v1828, 7
        %v1830 = vsub.s32 %v1827, %v1829
        %v1831 = vrot.slane %v1817, %v1830
        %v1832 = vcombine.low %v1776, %v1792
        %v1833 = vcombine.high %v1776, %v1792
        %v1835 = vunpack.c.l.s4 1934713408
        %v1836 = vunpack.c.0.s8 %v1835
        %v1837 = vlaneseq
        %v1838 = vshrl.u32 %v1837, 7
        %v1839 = vsub.s32 %v1836, %v1838
        %v1840 = vrot.slane %v1832, %v1839
        %v1842 = vunpack.c.l.s4 1934713408
        %v1843 = vunpack.c.0.s8 %v1842
        %v1844 = vlaneseq
        %v1845 = vshrl.u32 %v1844, 7
        %v1846 = vsub.s32 %v1843, %v1845
        %v1847 = vrot.slane %v1833, %v1846
        %v1848 = vcombine.low %v1783, %v1799
        %v1849 = vcombine.high %v1783, %v1799
        %v1851 = vunpack.c.l.s4 1934713408
        %v1852 = vunpack.c.0.s8 %v1851
        %v1853 = vlaneseq
        %v1854 = vshrl.u32 %v1853, 7
        %v1855 = vsub.s32 %v1852, %v1854
        %v1856 = vrot.slane %v1848, %v1855
        %v1858 = vunpack.c.l.s4 1934713408
        %v1859 = vunpack.c.0.s8 %v1858
        %v1860 = vlaneseq
        %v1861 = vshrl.u32 %v1860, 7
        %v1862 = vsub.s32 %v1859, %v1861
        %v1863 = vrot.slane %v1849, %v1862
        %v1864 = vcombine.low %v1808, %v1840
        %v1865 = vcombine.high %v1808, %v1840
        %v1866 = vcombine.low %v1815, %v1847
        %v1867 = vcombine.high %v1815, %v1847
        %v1868 = vcombine.low %v1824, %v1856
        %v1869 = vcombine.high %v1824, %v1856
        %v1870 = vcombine.low %v1831, %v1863
        %v1871 = vcombine.high %v1831, %v1863
        %v1872 = vcombine.low %v307, %v319
        %v1873 = vcombine.high %v307, %v319
        %v1875 = vunpack.c.l.s4 1983009808
        %v1876 = vunpack.c.0.s8 %v1875
        %v1877 = vlaneseq
        %v1878 = vshrl.u32 %v1877, 7
        %v1879 = vsub.s32 %v1876, %v1878
        %v1880 = vrot.slane %v1872, %v1879
        %v1882 = vunpack.c.l.s4 1983009808
        %v1883 = vunpack.c.0.s8 %v1882
        %v1884 = vlaneseq
        %v1885 = vshrl.u32 %v1884, 7
        %v1886 = vsub.s32 %v1883, %v1885
        %v1887 = vrot.slane %v1873, %v1886
        %v1888 = vcombine.low %v313, %v325
        %v1889 = vcombine.high %v313, %v325
        %v1891 = vunpack.c.l.s4 1983009808
        %v1892 = vunpack.c.0.s8 %v1891
        %v1893 = vlaneseq
        %v1894 = vshrl.u32 %v1893, 7
        %v1895 = vsub.s32 %v1892, %v1894
        %v1896 = vrot.slane %v1888, %v1895
        %v1898 = vunpack.c.l.s4 1983009808
        %v1899 = vunpack.c.0.s8 %v1898
        %v1900 = vlaneseq
        %v1901 = vshrl.u32 %v1900, 7
        %v1902 = vsub.s32 %v1899, %v1901
        %v1903 = vrot.slane %v1889, %v1902
        %v1904 = vcombine.low %v331, %v345
        %v1905 = vcombine.high %v331, %v345
        %v1907 = vunpack.c.l.s4 1983009808
        %v1908 = vunpack.c.0.s8 %v1907
        %v1909 = vlaneseq
        %v1910 = vshrl.u32 %v1909, 7
        %v1911 = vsub.s32 %v1908, %v1910
        %v1912 = vrot.slane %v1904, %v1911
        %v1914 = vunpack.c.l.s4 1983009808
        %v1915 = vunpack.c.0.s8 %v1914
        %v1916 = vlaneseq
        %v1917 = vshrl.u32 %v1916, 7
        %v1918 = vsub.s32 %v1915, %v1917
        %v1919 = vrot.slane %v1905, %v1918
        %v1920 = vcombine.low %v337, %v349
        %v1921 = vcombine.high %v337, %v349
        %v1923 = vunpack.c.l.s4 1983009808
        %v1924 = vunpack.c.0.s8 %v1923
        %v1925 = vlaneseq
        %v1926 = vshrl.u32 %v1925, 7
        %v1927 = vsub.s32 %v1924, %v1926
        %v1928 = vrot.slane %v1920, %v1927
        %v1930 = vunpack.c.l.s4 1983009808
        %v1931 = vunpack.c.0.s8 %v1930
        %v1932 = vlaneseq
        %v1933 = vshrl.u32 %v1932, 7
        %v1934 = vsub.s32 %v1931, %v1933
        %v1935 = vrot.slane %v1921, %v1934
        %v1936 = vcombine.low %v1880, %v1896
        %v1937 = vcombine.high %v1880, %v1896
        %v1939 = vunpack.c.l.s4 1934713408
        %v1940 = vunpack.c.0.s8 %v1939
        %v1941 = vlaneseq
        %v1942 = vshrl.u32 %v1941, 7
        %v1943 = vsub.s32 %v1940, %v1942
        %v1944 = vrot.slane %v1936, %v1943
        %v1946 = vunpack.c.l.s4 1934713408
        %v1947 = vunpack.c.0.s8 %v1946
        %v1948 = vlaneseq
        %v1949 = vshrl.u32 %v1948, 7
        %v1950 = vsub.s32 %v1947, %v1949
        %v1951 = vrot.slane %v1937, %v1950
        %v1952 = vcombine.low %v1887, %v1903
        %v1953 = vcombine.high %v1887, %v1903
        %v1955 = vunpack.c.l.s4 1934713408
        %v1956 = vunpack.c.0.s8 %v1955
        %v1957 = vlaneseq
        %v1958 = vshrl.u32 %v1957, 7
        %v1959 = vsub.s32 %v1956, %v1958
        %v1960 = vrot.slane %v1952, %v1959
        %v1962 = vunpack.c.l.s4 1934713408
        %v1963 = vunpack.c.0.s8 %v1962
        %v1964 = vlaneseq
        %v1965 = vshrl.u32 %v1964, 7
        %v1966 = vsub.s32 %v1963, %v1965
        %v1967 = vrot.slane %v1953, %v1966
        %v1968 = vcombine.low %v1912, %v1928
        %v1969 = vcombine.high %v1912, %v1928
        %v1971 = vunpack.c.l.s4 1934713408
        %v1972 = vunpack.c.0.s8 %v1971
        %v1973 = vlaneseq
        %v1974 = vshrl.u32 %v1973, 7
        %v1975 = vsub.s32 %v1972, %v1974
        %v1976 = vrot.slane %v1968, %v1975
        %v1978 = vunpack.c.l.s4 1934713408
        %v1979 = vunpack.c.0.s8 %v1978
        %v1980 = vlaneseq
        %v1981 = vshrl.u32 %v1980, 7
        %v1982 = vsub.s32 %v1979, %v1981
        %v1983 = vrot.slane %v1969, %v1982
        %v1984 = vcombine.low %v1919, %v1935
        %v1985 = vcombine.high %v1919, %v1935
        %v1987 = vunpack.c.l.s4 1934713408
        %v1988 = vunpack.c.0.s8 %v1987
        %v1989 = vlaneseq
        %v1990 = vshrl.u32 %v1989, 7
        %v1991 = vsub.s32 %v1988, %v1990
        %v1992 = vrot.slane %v1984, %v1991
        %v1994 = vunpack.c.l.s4 1934713408
        %v1995 = vunpack.c.0.s8 %v1994
        %v1996 = vlaneseq
        %v1997 = vshrl.u32 %v1996, 7
        %v1998 = vsub.s32 %v1995, %v1997
        %v1999 = vrot.slane %v1985, %v1998
        %v2000 = vcombine.low %v1944, %v1976
        %v2001 = vcombine.high %v1944, %v1976
        %v2002 = vcombine.low %v1951, %v1983
        %v2003 = vcombine.high %v1951, %v1983
        %v2004 = vcombine.low %v1960, %v1992
        %v2005 = vcombine.high %v1960, %v1992
        %v2006 = vcombine.low %v1967, %v1999
        %v2007 = vcombine.high %v1967, %v1999
        %v2008 = vcombine.low %v683, %v691
        %v2009 = vcombine.high %v683, %v691
        %v2011 = vunpack.c.l.s4 1983009808
        %v2012 = vunpack.c.0.s8 %v2011
        %v2013 = vlaneseq
        %v2014 = vshrl.u32 %v2013, 7
        %v2015 = vsub.s32 %v2012, %v2014
        %v2016 = vrot.slane %v2008, %v2015
        %v2018 = vunpack.c.l.s4 1983009808
        %v2019 = vunpack.c.0.s8 %v2018
        %v2020 = vlaneseq
        %v2021 = vshrl.u32 %v2020, 7
        %v2022 = vsub.s32 %v2019, %v2021
        %v2023 = vrot.slane %v2009, %v2022
        %v2024 = vcombine.low %v687, %v695
        %v2025 = vcombine.high %v687, %v695
        %v2027 = vunpack.c.l.s4 1983009808
        %v2028 = vunpack.c.0.s8 %v2027
        %v2029 = vlaneseq
        %v2030 = vshrl.u32 %v2029, 7
        %v2031 = vsub.s32 %v2028, %v2030
        %v2032 = vrot.slane %v2024, %v2031
        %v2034 = vunpack.c.l.s4 1983009808
        %v2035 = vunpack.c.0.s8 %v2034
        %v2036 = vlaneseq
        %v2037 = vshrl.u32 %v2036, 7
        %v2038 = vsub.s32 %v2035, %v2037
        %v2039 = vrot.slane %v2025, %v2038
        %v2040 = vcombine.low %v699, %v707
        %v2041 = vcombine.high %v699, %v707
        %v2043 = vunpack.c.l.s4 1983009808
        %v2044 = vunpack.c.0.s8 %v2043
        %v2045 = vlaneseq
        %v2046 = vshrl.u32 %v2045, 7
        %v2047 = vsub.s32 %v2044, %v2046
        %v2048 = vrot.slane %v2040, %v2047
        %v2050 = vunpack.c.l.s4 1983009808
        %v2051 = vunpack.c.0.s8 %v2050
        %v2052 = vlaneseq
        %v2053 = vshrl.u32 %v2052, 7
        %v2054 = vsub.s32 %v2051, %v2053
        %v2055 = vrot.slane %v2041, %v2054
        %v2056 = vcombine.low %v703, %v711
        %v2057 = vcombine.high %v703, %v711
        %v2059 = vunpack.c.l.s4 1983009808
        %v2060 = vunpack.c.0.s8 %v2059
        %v2061 = vlaneseq
        %v2062 = vshrl.u32 %v2061, 7
        %v2063 = vsub.s32 %v2060, %v2062
        %v2064 = vrot.slane %v2056, %v2063
        %v2066 = vunpack.c.l.s4 1983009808
        %v2067 = vunpack.c.0.s8 %v2066
        %v2068 = vlaneseq
        %v2069 = vshrl.u32 %v2068, 7
        %v2070 = vsub.s32 %v2067, %v2069
        %v2071 = vrot.slane %v2057, %v2070
        %v2072 = vcombine.low %v2016, %v2032
        %v2073 = vcombine.high %v2016, %v2032
        %v2075 = vunpack.c.l.s4 1934713408
        %v2076 = vunpack.c.0.s8 %v2075
        %v2077 = vlaneseq
        %v2078 = vshrl.u32 %v2077, 7
        %v2079 = vsub.s32 %v2076, %v2078
        %v2080 = vrot.slane %v2072, %v2079
        %v2082 = vunpack.c.l.s4 1934713408
        %v2083 = vunpack.c.0.s8 %v2082
        %v2084 = vlaneseq
        %v2085 = vshrl.u32 %v2084, 7
        %v2086 = vsub.s32 %v2083, %v2085
        %v2087 = vrot.slane %v2073, %v2086
        %v2088 = vcombine.low %v2023, %v2039
        %v2089 = vcombine.high %v2023, %v2039
        %v2091 = vunpack.c.l.s4 1934713408
        %v2092 = vunpack.c.0.s8 %v2091
        %v2093 = vlaneseq
        %v2094 = vshrl.u32 %v2093, 7
        %v2095 = vsub.s32 %v2092, %v2094
        %v2096 = vrot.slane %v2088, %v2095
        %v2098 = vunpack.c.l.s4 1934713408
        %v2099 = vunpack.c.0.s8 %v2098
        %v2100 = vlaneseq
        %v2101 = vshrl.u32 %v2100, 7
        %v2102 = vsub.s32 %v2099, %v2101
        %v2103 = vrot.slane %v2089, %v2102
        %v2104 = vcombine.low %v2048, %v2064
        %v2105 = vcombine.high %v2048, %v2064
        %v2107 = vunpack.c.l.s4 1934713408
        %v2108 = vunpack.c.0.s8 %v2107
        %v2109 = vlaneseq
        %v2110 = vshrl.u32 %v2109, 7
        %v2111 = vsub.s32 %v2108, %v2110
        %v2112 = vrot.slane %v2104, %v2111
        %v2114 = vunpack.c.l.s4 1934713408
        %v2115 = vunpack.c.0.s8 %v2114
        %v2116 = vlaneseq
        %v2117 = vshrl.u32 %v2116, 7
        %v2118 = vsub.s32 %v2115, %v2117
        %v2119 = vrot.slane %v2105, %v2118
        %v2120 = vcombine.low %v2055, %v2071
        %v2121 = vcombine.high %v2055, %v2071
        %v2123 = vunpack.c.l.s4 1934713408
        %v2124 = vunpack.c.0.s8 %v2123
        %v2125 = vlaneseq
        %v2126 = vshrl.u32 %v2125, 7
        %v2127 = vsub.s32 %v2124, %v2126
        %v2128 = vrot.slane %v2120, %v2127
        %v2130 = vunpack.c.l.s4 1934713408
        %v2131 = vunpack.c.0.s8 %v2130
        %v2132 = vlaneseq
        %v2133 = vshrl.u32 %v2132, 7
        %v2134 = vsub.s32 %v2131, %v2133
        %v2135 = vrot.slane %v2121, %v2134
        %v2136 = vcombine.low %v2080, %v2112
        %v2137 = vcombine.high %v2080, %v2112
        %v2138 = vcombine.low %v2087, %v2119
        %v2139 = vcombine.high %v2087, %v2119
        %v2140 = vcombine.low %v2096, %v2128
        %v2141 = vcombine.high %v2096, %v2128
        %v2142 = vcombine.low %v2103, %v2135
        %v2143 = vcombine.high %v2103, %v2135
        %v2144 = vcombine.low %v715, %v723
        %v2145 = vcombine.high %v715, %v723
        %v2147 = vunpack.c.l.s4 1983009808
        %v2148 = vunpack.c.0.s8 %v2147
        %v2149 = vlaneseq
        %v2150 = vshrl.u32 %v2149, 7
        %v2151 = vsub.s32 %v2148, %v2150
        %v2152 = vrot.slane %v2144, %v2151
        %v2154 = vunpack.c.l.s4 1983009808
        %v2155 = vunpack.c.0.s8 %v2154
        %v2156 = vlaneseq
        %v2157 = vshrl.u32 %v2156, 7
        %v2158 = vsub.s32 %v2155, %v2157
        %v2159 = vrot.slane %v2145, %v2158
        %v2160 = vcombine.low %v719, %v727
        %v2161 = vcombine.high %v719, %v727
        %v2163 = vunpack.c.l.s4 1983009808
        %v2164 = vunpack.c.0.s8 %v2163
        %v2165 = vlaneseq
        %v2166 = vshrl.u32 %v2165, 7
        %v2167 = vsub.s32 %v2164, %v2166
        %v2168 = vrot.slane %v2160, %v2167
        %v2170 = vunpack.c.l.s4 1983009808
        %v2171 = vunpack.c.0.s8 %v2170
        %v2172 = vlaneseq
        %v2173 = vshrl.u32 %v2172, 7
        %v2174 = vsub.s32 %v2171, %v2173
        %v2175 = vrot.slane %v2161, %v2174
        %v2176 = vcombine.low %v731, %v739
        %v2177 = vcombine.high %v731, %v739
        %v2179 = vunpack.c.l.s4 1983009808
        %v2180 = vunpack.c.0.s8 %v2179
        %v2181 = vlaneseq
        %v2182 = vshrl.u32 %v2181, 7
        %v2183 = vsub.s32 %v2180, %v2182
        %v2184 = vrot.slane %v2176, %v2183
        %v2186 = vunpack.c.l.s4 1983009808
        %v2187 = vunpack.c.0.s8 %v2186
        %v2188 = vlaneseq
        %v2189 = vshrl.u32 %v2188, 7
        %v2190 = vsub.s32 %v2187, %v2189
        %v2191 = vrot.slane %v2177, %v2190
        %v2192 = vcombine.low %v735, %v743
        %v2193 = vcombine.high %v735, %v743
        %v2195 = vunpack.c.l.s4 1983009808
        %v2196 = vunpack.c.0.s8 %v2195
        %v2197 = vlaneseq
        %v2198 = vshrl.u32 %v2197, 7
        %v2199 = vsub.s32 %v2196, %v2198
        %v2200 = vrot.slane %v2192, %v2199
        %v2202 = vunpack.c.l.s4 1983009808
        %v2203 = vunpack.c.0.s8 %v2202
        %v2204 = vlaneseq
        %v2205 = vshrl.u32 %v2204, 7
        %v2206 = vsub.s32 %v2203, %v2205
        %v2207 = vrot.slane %v2193, %v2206
        %v2208 = vcombine.low %v2152, %v2168
        %v2209 = vcombine.high %v2152, %v2168
        %v2211 = vunpack.c.l.s4 1934713408
        %v2212 = vunpack.c.0.s8 %v2211
        %v2213 = vlaneseq
        %v2214 = vshrl.u32 %v2213, 7
        %v2215 = vsub.s32 %v2212, %v2214
        %v2216 = vrot.slane %v2208, %v2215
        %v2218 = vunpack.c.l.s4 1934713408
        %v2219 = vunpack.c.0.s8 %v2218
        %v2220 = vlaneseq
        %v2221 = vshrl.u32 %v2220, 7
        %v2222 = vsub.s32 %v2219, %v2221
        %v2223 = vrot.slane %v2209, %v2222
        %v2224 = vcombine.low %v2159, %v2175
        %v2225 = vcombine.high %v2159, %v2175
        %v2227 = vunpack.c.l.s4 1934713408
        %v2228 = vunpack.c.0.s8 %v2227
        %v2229 = vlaneseq
        %v2230 = vshrl.u32 %v2229, 7
        %v2231 = vsub.s32 %v2228, %v2230
        %v2232 = vrot.slane %v2224, %v2231
        %v2234 = vunpack.c.l.s4 1934713408
        %v2235 = vunpack.c.0.s8 %v2234
        %v2236 = vlaneseq
        %v2237 = vshrl.u32 %v2236, 7
        %v2238 = vsub.s32 %v2235, %v2237
        %v2239 = vrot.slane %v2225, %v2238
        %v2240 = vcombine.low %v2184, %v2200
        %v2241 = vcombine.high %v2184, %v2200
        %v2243 = vunpack.c.l.s4 1934713408
        %v2244 = vunpack.c.0.s8 %v2243
        %v2245 = vlaneseq
        %v2246 = vshrl.u32 %v2245, 7
        %v2247 = vsub.s32 %v2244, %v2246
        %v2248 = vrot.slane %v2240, %v2247
        %v2250 = vunpack.c.l.s4 1934713408
        %v2251 = vunpack.c.0.s8 %v2250
        %v2252 = vlaneseq
        %v2253 = vshrl.u32 %v2252, 7
        %v2254 = vsub.s32 %v2251, %v2253
        %v2255 = vrot.slane %v2241, %v2254
        %v2256 = vcombine.low %v2191, %v2207
        %v2257 = vcombine.high %v2191, %v2207
        %v2259 = vunpack.c.l.s4 1934713408
        %v2260 = vunpack.c.0.s8 %v2259
        %v2261 = vlaneseq
        %v2262 = vshrl.u32 %v2261, 7
        %v2263 = vsub.s32 %v2260, %v2262
        %v2264 = vrot.slane %v2256, %v2263
        %v2266 = vunpack.c.l.s4 1934713408
        %v2267 = vunpack.c.0.s8 %v2266
        %v2268 = vlaneseq
        %v2269 = vshrl.u32 %v2268, 7
        %v2270 = vsub.s32 %v2267, %v2269
        %v2271 = vrot.slane %v2257, %v2270
        %v2272 = vcombine.low %v2216, %v2248
        %v2273 = vcombine.high %v2216, %v2248
        %v2274 = vcombine.low %v2223, %v2255
        %v2275 = vcombine.high %v2223, %v2255
        %v2276 = vcombine.low %v2232, %v2264
        %v2277 = vcombine.high %v2232, %v2264
        %v2278 = vcombine.low %v2239, %v2271
        %v2279 = vcombine.high %v2239, %v2271
        %v2280 = vcombine.low %v827, %v835
        %v2281 = vcombine.high %v827, %v835
        %v2283 = vunpack.c.l.s4 1983009808
        %v2284 = vunpack.c.0.s8 %v2283
        %v2285 = vlaneseq
        %v2286 = vshrl.u32 %v2285, 7
        %v2287 = vsub.s32 %v2284, %v2286
        %v2288 = vrot.slane %v2280, %v2287
        %v2290 = vunpack.c.l.s4 1983009808
        %v2291 = vunpack.c.0.s8 %v2290
        %v2292 = vlaneseq
        %v2293 = vshrl.u32 %v2292, 7
        %v2294 = vsub.s32 %v2291, %v2293
        %v2295 = vrot.slane %v2281, %v2294
        %v2296 = vcombine.low %v831, %v839
        %v2297 = vcombine.high %v831, %v839
        %v2299 = vunpack.c.l.s4 1983009808
        %v2300 = vunpack.c.0.s8 %v2299
        %v2301 = vlaneseq
        %v2302 = vshrl.u32 %v2301, 7
        %v2303 = vsub.s32 %v2300, %v2302
        %v2304 = vrot.slane %v2296, %v2303
        %v2306 = vunpack.c.l.s4 1983009808
        %v2307 = vunpack.c.0.s8 %v2306
        %v2308 = vlaneseq
        %v2309 = vshrl.u32 %v2308, 7
        %v2310 = vsub.s32 %v2307, %v2309
        %v2311 = vrot.slane %v2297, %v2310
        %v2312 = vcombine.low %v843, %v851
        %v2313 = vcombine.high %v843, %v851
        %v2315 = vunpack.c.l.s4 1983009808
        %v2316 = vunpack.c.0.s8 %v2315
        %v2317 = vlaneseq
        %v2318 = vshrl.u32 %v2317, 7
        %v2319 = vsub.s32 %v2316, %v2318
        %v2320 = vrot.slane %v2312, %v2319
        %v2322 = vunpack.c.l.s4 1983009808
        %v2323 = vunpack.c.0.s8 %v2322
        %v2324 = vlaneseq
        %v2325 = vshrl.u32 %v2324, 7
        %v2326 = vsub.s32 %v2323, %v2325
        %v2327 = vrot.slane %v2313, %v2326
        %v2328 = vcombine.low %v847, %v855
        %v2329 = vcombine.high %v847, %v855
        %v2331 = vunpack.c.l.s4 1983009808
        %v2332 = vunpack.c.0.s8 %v2331
        %v2333 = vlaneseq
        %v2334 = vshrl.u32 %v2333, 7
        %v2335 = vsub.s32 %v2332, %v2334
        %v2336 = vrot.slane %v2328, %v2335
        %v2338 = vunpack.c.l.s4 1983009808
        %v2339 = vunpack.c.0.s8 %v2338
        %v2340 = vlaneseq
        %v2341 = vshrl.u32 %v2340, 7
        %v2342 = vsub.s32 %v2339, %v2341
        %v2343 = vrot.slane %v2329, %v2342
        %v2344 = vcombine.low %v2288, %v2304
        %v2345 = vcombine.high %v2288, %v2304
        %v2347 = vunpack.c.l.s4 1934713408
        %v2348 = vunpack.c.0.s8 %v2347
        %v2349 = vlaneseq
        %v2350 = vshrl.u32 %v2349, 7
        %v2351 = vsub.s32 %v2348, %v2350
        %v2352 = vrot.slane %v2344, %v2351
        %v2354 = vunpack.c.l.s4 1934713408
        %v2355 = vunpack.c.0.s8 %v2354
        %v2356 = vlaneseq
        %v2357 = vshrl.u32 %v2356, 7
        %v2358 = vsub.s32 %v2355, %v2357
        %v2359 = vrot.slane %v2345, %v2358
        %v2360 = vcombine.low %v2295, %v2311
        %v2361 = vcombine.high %v2295, %v2311
        %v2363 = vunpack.c.l.s4 1934713408
        %v2364 = vunpack.c.0.s8 %v2363
        %v2365 = vlaneseq
        %v2366 = vshrl.u32 %v2365, 7
        %v2367 = vsub.s32 %v2364, %v2366
        %v2368 = vrot.slane %v2360, %v2367
        %v2370 = vunpack.c.l.s4 1934713408
        %v2371 = vunpack.c.0.s8 %v2370
        %v2372 = vlaneseq
        %v2373 = vshrl.u32 %v2372, 7
        %v2374 = vsub.s32 %v2371, %v2373
        %v2375 = vrot.slane %v2361, %v2374
        %v2376 = vcombine.low %v2320, %v2336
        %v2377 = vcombine.high %v2320, %v2336
        %v2379 = vunpack.c.l.s4 1934713408
        %v2380 = vunpack.c.0.s8 %v2379
        %v2381 = vlaneseq
        %v2382 = vshrl.u32 %v2381, 7
        %v2383 = vsub.s32 %v2380, %v2382
        %v2384 = vrot.slane %v2376, %v2383
        %v2386 = vunpack.c.l.s4 1934713408
        %v2387 = vunpack.c.0.s8 %v2386
        %v2388 = vlaneseq
        %v2389 = vshrl.u32 %v2388, 7
        %v2390 = vsub.s32 %v2387, %v2389
        %v2391 = vrot.slane %v2377, %v2390
        %v2392 = vcombine.low %v2327, %v2343
        %v2393 = vcombine.high %v2327, %v2343
        %v2395 = vunpack.c.l.s4 1934713408
        %v2396 = vunpack.c.0.s8 %v2395
        %v2397 = vlaneseq
        %v2398 = vshrl.u32 %v2397, 7
        %v2399 = vsub.s32 %v2396, %v2398
        %v2400 = vrot.slane %v2392, %v2399
        %v2402 = vunpack.c.l.s4 1934713408
        %v2403 = vunpack.c.0.s8 %v2402
        %v2404 = vlaneseq
        %v2405 = vshrl.u32 %v2404, 7
        %v2406 = vsub.s32 %v2403, %v2405
        %v2407 = vrot.slane %v2393, %v2406
        %v2408 = vcombine.low %v2352, %v2384
        %v2409 = vcombine.high %v2352, %v2384
        %v2410 = vcombine.low %v2359, %v2391
        %v2411 = vcombine.high %v2359, %v2391
        %v2412 = vcombine.low %v2368, %v2400
        %v2413 = vcombine.high %v2368, %v2400
        %v2414 = vcombine.low %v2375, %v2407
        %v2415 = vcombine.high %v2375, %v2407
        %v2416 = vcombine.low %v859, %v867
        %v2417 = vcombine.high %v859, %v867
        %v2419 = vunpack.c.l.s4 1983009808
        %v2420 = vunpack.c.0.s8 %v2419
        %v2421 = vlaneseq
        %v2422 = vshrl.u32 %v2421, 7
        %v2423 = vsub.s32 %v2420, %v2422
        %v2424 = vrot.slane %v2416, %v2423
        %v2426 = vunpack.c.l.s4 1983009808
        %v2427 = vunpack.c.0.s8 %v2426
        %v2428 = vlaneseq
        %v2429 = vshrl.u32 %v2428, 7
        %v2430 = vsub.s32 %v2427, %v2429
        %v2431 = vrot.slane %v2417, %v2430
        %v2432 = vcombine.low %v863, %v871
        %v2433 = vcombine.high %v863, %v871
        %v2435 = vunpack.c.l.s4 1983009808
        %v2436 = vunpack.c.0.s8 %v2435
        %v2437 = vlaneseq
        %v2438 = vshrl.u32 %v2437, 7
        %v2439 = vsub.s32 %v2436, %v2438
        %v2440 = vrot.slane %v2432, %v2439
        %v2442 = vunpack.c.l.s4 1983009808
        %v2443 = vunpack.c.0.s8 %v2442
        %v2444 = vlaneseq
        %v2445 = vshrl.u32 %v2444, 7
        %v2446 = vsub.s32 %v2443, %v2445
        %v2447 = vrot.slane %v2433, %v2446
        %v2448 = vcombine.low %v875, %v883
        %v2449 = vcombine.high %v875, %v883
        %v2451 = vunpack.c.l.s4 1983009808
        %v2452 = vunpack.c.0.s8 %v2451
        %v2453 = vlaneseq
        %v2454 = vshrl.u32 %v2453, 7
        %v2455 = vsub.s32 %v2452, %v2454
        %v2456 = vrot.slane %v2448, %v2455
        %v2458 = vunpack.c.l.s4 1983009808
        %v2459 = vunpack.c.0.s8 %v2458
        %v2460 = vlaneseq
        %v2461 = vshrl.u32 %v2460, 7
        %v2462 = vsub.s32 %v2459, %v2461
        %v2463 = vrot.slane %v2449, %v2462
        %v2464 = vcombine.low %v879, %v887
        %v2465 = vcombine.high %v879, %v887
        %v2467 = vunpack.c.l.s4 1983009808
        %v2468 = vunpack.c.0.s8 %v2467
        %v2469 = vlaneseq
        %v2470 = vshrl.u32 %v2469, 7
        %v2471 = vsub.s32 %v2468, %v2470
        %v2472 = vrot.slane %v2464, %v2471
        %v2474 = vunpack.c.l.s4 1983009808
        %v2475 = vunpack.c.0.s8 %v2474
        %v2476 = vlaneseq
        %v2477 = vshrl.u32 %v2476, 7
        %v2478 = vsub.s32 %v2475, %v2477
        %v2479 = vrot.slane %v2465, %v2478
        %v2480 = vcombine.low %v2424, %v2440
        %v2481 = vcombine.high %v2424, %v2440
        %v2483 = vunpack.c.l.s4 1934713408
        %v2484 = vunpack.c.0.s8 %v2483
        %v2485 = vlaneseq
        %v2486 = vshrl.u32 %v2485, 7
        %v2487 = vsub.s32 %v2484, %v2486
        %v2488 = vrot.slane %v2480, %v2487
        %v2490 = vunpack.c.l.s4 1934713408
        %v2491 = vunpack.c.0.s8 %v2490
        %v2492 = vlaneseq
        %v2493 = vshrl.u32 %v2492, 7
        %v2494 = vsub.s32 %v2491, %v2493
        %v2495 = vrot.slane %v2481, %v2494
        %v2496 = vcombine.low %v2431, %v2447
        %v2497 = vcombine.high %v2431, %v2447
        %v2499 = vunpack.c.l.s4 1934713408
        %v2500 = vunpack.c.0.s8 %v2499
        %v2501 = vlaneseq
        %v2502 = vshrl.u32 %v2501, 7
        %v2503 = vsub.s32 %v2500, %v2502
        %v2504 = vrot.slane %v2496, %v2503
        %v2506 = vunpack.c.l.s4 1934713408
        %v2507 = vunpack.c.0.s8 %v2506
        %v2508 = vlaneseq
        %v2509 = vshrl.u32 %v2508, 7
        %v2510 = vsub.s32 %v2507, %v2509
        %v2511 = vrot.slane %v2497, %v2510
        %v2512 = vcombine.low %v2456, %v2472
        %v2513 = vcombine.high %v2456, %v2472
        %v2515 = vunpack.c.l.s4 1934713408
        %v2516 = vunpack.c.0.s8 %v2515
        %v2517 = vlaneseq
        %v2518 = vshrl.u32 %v2517, 7
        %v2519 = vsub.s32 %v2516, %v2518
        %v2520 = vrot.slane %v2512, %v2519
        %v2522 = vunpack.c.l.s4 1934713408
        %v2523 = vunpack.c.0.s8 %v2522
        %v2524 = vlaneseq
        %v2525 = vshrl.u32 %v2524, 7
        %v2526 = vsub.s32 %v2523, %v2525
        %v2527 = vrot.slane %v2513, %v2526
        %v2528 = vcombine.low %v2463, %v2479
        %v2529 = vcombine.high %v2463, %v2479
        %v2531 = vunpack.c.l.s4 1934713408
        %v2532 = vunpack.c.0.s8 %v2531
        %v2533 = vlaneseq
        %v2534 = vshrl.u32 %v2533, 7
        %v2535 = vsub.s32 %v2532, %v2534
        %v2536 = vrot.slane %v2528, %v2535
        %v2538 = vunpack.c.l.s4 1934713408
        %v2539 = vunpack.c.0.s8 %v2538
        %v2540 = vlaneseq
        %v2541 = vshrl.u32 %v2540, 7
        %v2542 = vsub.s32 %v2539, %v2541
        %v2543 = vrot.slane %v2529, %v2542
        %v2544 = vcombine.low %v2488, %v2520
        %v2545 = vcombine.high %v2488, %v2520
        %v2546 = vcombine.low %v2495, %v2527
        %v2547 = vcombine.high %v2495, %v2527
        %v2548 = vcombine.low %v2504, %v2536
        %v2549 = vcombine.high %v2504, %v2536
        %v2550 = vcombine.low %v2511, %v2543
        %v2551 = vcombine.high %v2511, %v2543
        %v2552 = vcombine.low %v972, %v980
        %v2553 = vcombine.high %v972, %v980
        %v2555 = vunpack.c.l.s4 1983009808
        %v2556 = vunpack.c.0.s8 %v2555
        %v2557 = vlaneseq
        %v2558 = vshrl.u32 %v2557, 7
        %v2559 = vsub.s32 %v2556, %v2558
        %v2560 = vrot.slane %v2552, %v2559
        %v2562 = vunpack.c.l.s4 1983009808
        %v2563 = vunpack.c.0.s8 %v2562
        %v2564 = vlaneseq
        %v2565 = vshrl.u32 %v2564, 7
        %v2566 = vsub.s32 %v2563, %v2565
        %v2567 = vrot.slane %v2553, %v2566
        %v2568 = vcombine.low %v976, %v984
        %v2569 = vcombine.high %v976, %v984
        %v2571 = vunpack.c.l.s4 1983009808
        %v2572 = vunpack.c.0.s8 %v2571
        %v2573 = vlaneseq
        %v2574 = vshrl.u32 %v2573, 7
        %v2575 = vsub.s32 %v2572, %v2574
        %v2576 = vrot.slane %v2568, %v2575
        %v2578 = vunpack.c.l.s4 1983009808
        %v2579 = vunpack.c.0.s8 %v2578
        %v2580 = vlaneseq
        %v2581 = vshrl.u32 %v2580, 7
        %v2582 = vsub.s32 %v2579, %v2581
        %v2583 = vrot.slane %v2569, %v2582
        %v2584 = vcombine.low %v988, %v996
        %v2585 = vcombine.high %v988, %v996
        %v2587 = vunpack.c.l.s4 1983009808
        %v2588 = vunpack.c.0.s8 %v2587
        %v2589 = vlaneseq
        %v2590 = vshrl.u32 %v2589, 7
        %v2591 = vsub.s32 %v2588, %v2590
        %v2592 = vrot.slane %v2584, %v2591
        %v2594 = vunpack.c.l.s4 1983009808
        %v2595 = vunpack.c.0.s8 %v2594
        %v2596 = vlaneseq
        %v2597 = vshrl.u32 %v2596, 7
        %v2598 = vsub.s32 %v2595, %v2597
        %v2599 = vrot.slane %v2585, %v2598
        %v2600 = vcombine.low %v992, %v1000
        %v2601 = vcombine.high %v992, %v1000
        %v2603 = vunpack.c.l.s4 1983009808
        %v2604 = vunpack.c.0.s8 %v2603
        %v2605 = vlaneseq
        %v2606 = vshrl.u32 %v2605, 7
        %v2607 = vsub.s32 %v2604, %v2606
        %v2608 = vrot.slane %v2600, %v2607
        %v2610 = vunpack.c.l.s4 1983009808
        %v2611 = vunpack.c.0.s8 %v2610
        %v2612 = vlaneseq
        %v2613 = vshrl.u32 %v2612, 7
        %v2614 = vsub.s32 %v2611, %v2613
        %v2615 = vrot.slane %v2601, %v2614
        %v2616 = vcombine.low %v2560, %v2576
        %v2617 = vcombine.high %v2560, %v2576
        %v2619 = vunpack.c.l.s4 1934713408
        %v2620 = vunpack.c.0.s8 %v2619
        %v2621 = vlaneseq
        %v2622 = vshrl.u32 %v2621, 7
        %v2623 = vsub.s32 %v2620, %v2622
        %v2624 = vrot.slane %v2616, %v2623
        %v2626 = vunpack.c.l.s4 1934713408
        %v2627 = vunpack.c.0.s8 %v2626
        %v2628 = vlaneseq
        %v2629 = vshrl.u32 %v2628, 7
        %v2630 = vsub.s32 %v2627, %v2629
        %v2631 = vrot.slane %v2617, %v2630
        %v2632 = vcombine.low %v2567, %v2583
        %v2633 = vcombine.high %v2567, %v2583
        %v2635 = vunpack.c.l.s4 1934713408
        %v2636 = vunpack.c.0.s8 %v2635
        %v2637 = vlaneseq
        %v2638 = vshrl.u32 %v2637, 7
        %v2639 = vsub.s32 %v2636, %v2638
        %v2640 = vrot.slane %v2632, %v2639
        %v2642 = vunpack.c.l.s4 1934713408
        %v2643 = vunpack.c.0.s8 %v2642
        %v2644 = vlaneseq
        %v2645 = vshrl.u32 %v2644, 7
        %v2646 = vsub.s32 %v2643, %v2645
        %v2647 = vrot.slane %v2633, %v2646
        %v2648 = vcombine.low %v2592, %v2608
        %v2649 = vcombine.high %v2592, %v2608
        %v2651 = vunpack.c.l.s4 1934713408
        %v2652 = vunpack.c.0.s8 %v2651
        %v2653 = vlaneseq
        %v2654 = vshrl.u32 %v2653, 7
        %v2655 = vsub.s32 %v2652, %v2654
        %v2656 = vrot.slane %v2648, %v2655
        %v2658 = vunpack.c.l.s4 1934713408
        %v2659 = vunpack.c.0.s8 %v2658
        %v2660 = vlaneseq
        %v2661 = vshrl.u32 %v2660, 7
        %v2662 = vsub.s32 %v2659, %v2661
        %v2663 = vrot.slane %v2649, %v2662
        %v2664 = vcombine.low %v2599, %v2615
        %v2665 = vcombine.high %v2599, %v2615
        %v2667 = vunpack.c.l.s4 1934713408
        %v2668 = vunpack.c.0.s8 %v2667
        %v2669 = vlaneseq
        %v2670 = vshrl.u32 %v2669, 7
        %v2671 = vsub.s32 %v2668, %v2670
        %v2672 = vrot.slane %v2664, %v2671
        %v2674 = vunpack.c.l.s4 1934713408
        %v2675 = vunpack.c.0.s8 %v2674
        %v2676 = vlaneseq
        %v2677 = vshrl.u32 %v2676, 7
        %v2678 = vsub.s32 %v2675, %v2677
        %v2679 = vrot.slane %v2665, %v2678
        %v2680 = vcombine.low %v2624, %v2656
        %v2681 = vcombine.high %v2624, %v2656
        %v2682 = vcombine.low %v2631, %v2663
        %v2683 = vcombine.high %v2631, %v2663
        %v2684 = vcombine.low %v2640, %v2672
        %v2685 = vcombine.high %v2640, %v2672
        %v2686 = vcombine.low %v2647, %v2679
        %v2687 = vcombine.high %v2647, %v2679
        %v2688 = vcombine.low %v1004, %v1012
        %v2689 = vcombine.high %v1004, %v1012
        %v2691 = vunpack.c.l.s4 1983009808
        %v2692 = vunpack.c.0.s8 %v2691
        %v2693 = vlaneseq
        %v2694 = vshrl.u32 %v2693, 7
        %v2695 = vsub.s32 %v2692, %v2694
        %v2696 = vrot.slane %v2688, %v2695
        %v2698 = vunpack.c.l.s4 1983009808
        %v2699 = vunpack.c.0.s8 %v2698
        %v2700 = vlaneseq
        %v2701 = vshrl.u32 %v2700, 7
        %v2702 = vsub.s32 %v2699, %v2701
        %v2703 = vrot.slane %v2689, %v2702
        %v2704 = vcombine.low %v1008, %v1016
        %v2705 = vcombine.high %v1008, %v1016
        %v2707 = vunpack.c.l.s4 1983009808
        %v2708 = vunpack.c.0.s8 %v2707
        %v2709 = vlaneseq
        %v2710 = vshrl.u32 %v2709, 7
        %v2711 = vsub.s32 %v2708, %v2710
        %v2712 = vrot.slane %v2704, %v2711
        %v2714 = vunpack.c.l.s4 1983009808
        %v2715 = vunpack.c.0.s8 %v2714
        %v2716 = vlaneseq
        %v2717 = vshrl.u32 %v2716, 7
        %v2718 = vsub.s32 %v2715, %v2717
        %v2719 = vrot.slane %v2705, %v2718
        %v2720 = vcombine.low %v1020, %v1028
        %v2721 = vcombine.high %v1020, %v1028
        %v2723 = vunpack.c.l.s4 1983009808
        %v2724 = vunpack.c.0.s8 %v2723
        %v2725 = vlaneseq
        %v2726 = vshrl.u32 %v2725, 7
        %v2727 = vsub.s32 %v2724, %v2726
        %v2728 = vrot.slane %v2720, %v2727
        %v2730 = vunpack.c.l.s4 1983009808
        %v2731 = vunpack.c.0.s8 %v2730
        %v2732 = vlaneseq
        %v2733 = vshrl.u32 %v2732, 7
        %v2734 = vsub.s32 %v2731, %v2733
        %v2735 = vrot.slane %v2721, %v2734
        %v2736 = vcombine.low %v1024, %v1032
        %v2737 = vcombine.high %v1024, %v1032
        %v2739 = vunpack.c.l.s4 1983009808
        %v2740 = vunpack.c.0.s8 %v2739
        %v2741 = vlaneseq
        %v2742 = vshrl.u32 %v2741, 7
        %v2743 = vsub.s32 %v2740, %v2742
        %v2744 = vrot.slane %v2736, %v2743
        %v2746 = vunpack.c.l.s4 1983009808
        %v2747 = vunpack.c.0.s8 %v2746
        %v2748 = vlaneseq
        %v2749 = vshrl.u32 %v2748, 7
        %v2750 = vsub.s32 %v2747, %v2749
        %v2751 = vrot.slane %v2737, %v2750
        %v2752 = vcombine.low %v2696, %v2712
        %v2753 = vcombine.high %v2696, %v2712
        %v2755 = vunpack.c.l.s4 1934713408
        %v2756 = vunpack.c.0.s8 %v2755
        %v2757 = vlaneseq
        %v2758 = vshrl.u32 %v2757, 7
        %v2759 = vsub.s32 %v2756, %v2758
        %v2760 = vrot.slane %v2752, %v2759
        %v2762 = vunpack.c.l.s4 1934713408
        %v2763 = vunpack.c.0.s8 %v2762
        %v2764 = vlaneseq
        %v2765 = vshrl.u32 %v2764, 7
        %v2766 = vsub.s32 %v2763, %v2765
        %v2767 = vrot.slane %v2753, %v2766
        %v2768 = vcombine.low %v2703, %v2719
        %v2769 = vcombine.high %v2703, %v2719
        %v2771 = vunpack.c.l.s4 1934713408
        %v2772 = vunpack.c.0.s8 %v2771
        %v2773 = vlaneseq
        %v2774 = vshrl.u32 %v2773, 7
        %v2775 = vsub.s32 %v2772, %v2774
        %v2776 = vrot.slane %v2768, %v2775
        %v2778 = vunpack.c.l.s4 1934713408
        %v2779 = vunpack.c.0.s8 %v2778
        %v2780 = vlaneseq
        %v2781 = vshrl.u32 %v2780, 7
        %v2782 = vsub.s32 %v2779, %v2781
        %v2783 = vrot.slane %v2769, %v2782
        %v2784 = vcombine.low %v2728, %v2744
        %v2785 = vcombine.high %v2728, %v2744
        %v2787 = vunpack.c.l.s4 1934713408
        %v2788 = vunpack.c.0.s8 %v2787
        %v2789 = vlaneseq
        %v2790 = vshrl.u32 %v2789, 7
        %v2791 = vsub.s32 %v2788, %v2790
        %v2792 = vrot.slane %v2784, %v2791
        %v2794 = vunpack.c.l.s4 1934713408
        %v2795 = vunpack.c.0.s8 %v2794
        %v2796 = vlaneseq
        %v2797 = vshrl.u32 %v2796, 7
        %v2798 = vsub.s32 %v2795, %v2797
        %v2799 = vrot.slane %v2785, %v2798
        %v2800 = vcombine.low %v2735, %v2751
        %v2801 = vcombine.high %v2735, %v2751
        %v2803 = vunpack.c.l.s4 1934713408
        %v2804 = vunpack.c.0.s8 %v2803
        %v2805 = vlaneseq
        %v2806 = vshrl.u32 %v2805, 7
        %v2807 = vsub.s32 %v2804, %v2806
        %v2808 = vrot.slane %v2800, %v2807
        %v2810 = vunpack.c.l.s4 1934713408
        %v2811 = vunpack.c.0.s8 %v2810
        %v2812 = vlaneseq
        %v2813 = vshrl.u32 %v2812, 7
        %v2814 = vsub.s32 %v2811, %v2813
        %v2815 = vrot.slane %v2801, %v2814
        %v2816 = vcombine.low %v2760, %v2792
        %v2817 = vcombine.high %v2760, %v2792
        %v2818 = vcombine.low %v2767, %v2799
        %v2819 = vcombine.high %v2767, %v2799
        %v2820 = vcombine.low %v2776, %v2808
        %v2821 = vcombine.high %v2776, %v2808
        %v2822 = vcombine.low %v2783, %v2815
        %v2823 = vcombine.high %v2783, %v2815
        %v2824 = vcombine.low %v501, %v1117
        %v2825 = vcombine.high %v501, %v1117
        %v2827 = vunpack.c.l.s4 1983009808
        %v2828 = vunpack.c.0.s8 %v2827
        %v2829 = vlaneseq
        %v2830 = vshrl.u32 %v2829, 7
        %v2831 = vsub.s32 %v2828, %v2830
        %v2832 = vrot.slane %v2824, %v2831
        %v2834 = vunpack.c.l.s4 1983009808
        %v2835 = vunpack.c.0.s8 %v2834
        %v2836 = vlaneseq
        %v2837 = vshrl.u32 %v2836, 7
        %v2838 = vsub.s32 %v2835, %v2837
        %v2839 = vrot.slane %v2825, %v2838
        %v2840 = vcombine.low %v1113, %v1121
        %v2841 = vcombine.high %v1113, %v1121
        %v2843 = vunpack.c.l.s4 1983009808
        %v2844 = vunpack.c.0.s8 %v2843
        %v2845 = vlaneseq
        %v2846 = vshrl.u32 %v2845, 7
        %v2847 = vsub.s32 %v2844, %v2846
        %v2848 = vrot.slane %v2840, %v2847
        %v2850 = vunpack.c.l.s4 1983009808
        %v2851 = vunpack.c.0.s8 %v2850
        %v2852 = vlaneseq
        %v2853 = vshrl.u32 %v2852, 7
        %v2854 = vsub.s32 %v2851, %v2853
        %v2855 = vrot.slane %v2841, %v2854
        %v2856 = vcombine.low %v1125, %v1133
        %v2857 = vcombine.high %v1125, %v1133
        %v2859 = vunpack.c.l.s4 1983009808
        %v2860 = vunpack.c.0.s8 %v2859
        %v2861 = vlaneseq
        %v2862 = vshrl.u32 %v2861, 7
        %v2863 = vsub.s32 %v2860, %v2862
        %v2864 = vrot.slane %v2856, %v2863
        %v2866 = vunpack.c.l.s4 1983009808
        %v2867 = vunpack.c.0.s8 %v2866
        %v2868 = vlaneseq
        %v2869 = vshrl.u32 %v2868, 7
        %v2870 = vsub.s32 %v2867, %v2869
        %v2871 = vrot.slane %v2857, %v2870
        %v2872 = vcombine.low %v1129, %v1137
        %v2873 = vcombine.high %v1129, %v1137
        %v2875 = vunpack.c.l.s4 1983009808
        %v2876 = vunpack.c.0.s8 %v2875
        %v2877 = vlaneseq
        %v2878 = vshrl.u32 %v2877, 7
        %v2879 = vsub.s32 %v2876, %v2878
        %v2880 = vrot.slane %v2872, %v2879
        %v2882 = vunpack.c.l.s4 1983009808
        %v2883 = vunpack.c.0.s8 %v2882
        %v2884 = vlaneseq
        %v2885 = vshrl.u32 %v2884, 7
        %v2886 = vsub.s32 %v2883, %v2885
        %v2887 = vrot.slane %v2873, %v2886
        %v2888 = vcombine.low %v2832, %v2848
        %v2889 = vcombine.high %v2832, %v2848
        %v2891 = vunpack.c.l.s4 1934713408
        %v2892 = vunpack.c.0.s8 %v2891
        %v2893 = vlaneseq
        %v2894 = vshrl.u32 %v2893, 7
        %v2895 = vsub.s32 %v2892, %v2894
        %v2896 = vrot.slane %v2888, %v2895
        %v2898 = vunpack.c.l.s4 1934713408
        %v2899 = vunpack.c.0.s8 %v2898
        %v2900 = vlaneseq
        %v2901 = vshrl.u32 %v2900, 7
        %v2902 = vsub.s32 %v2899, %v2901
        %v2903 = vrot.slane %v2889, %v2902
        %v2904 = vcombine.low %v2839, %v2855
        %v2905 = vcombine.high %v2839, %v2855
        %v2907 = vunpack.c.l.s4 1934713408
        %v2908 = vunpack.c.0.s8 %v2907
        %v2909 = vlaneseq
        %v2910 = vshrl.u32 %v2909, 7
        %v2911 = vsub.s32 %v2908, %v2910
        %v2912 = vrot.slane %v2904, %v2911
        %v2914 = vunpack.c.l.s4 1934713408
        %v2915 = vunpack.c.0.s8 %v2914
        %v2916 = vlaneseq
        %v2917 = vshrl.u32 %v2916, 7
        %v2918 = vsub.s32 %v2915, %v2917
        %v2919 = vrot.slane %v2905, %v2918
        %v2920 = vcombine.low %v2864, %v2880
        %v2921 = vcombine.high %v2864, %v2880
        %v2923 = vunpack.c.l.s4 1934713408
        %v2924 = vunpack.c.0.s8 %v2923
        %v2925 = vlaneseq
        %v2926 = vshrl.u32 %v2925, 7
        %v2927 = vsub.s32 %v2924, %v2926
        %v2928 = vrot.slane %v2920, %v2927
        %v2930 = vunpack.c.l.s4 1934713408
        %v2931 = vunpack.c.0.s8 %v2930
        %v2932 = vlaneseq
        %v2933 = vshrl.u32 %v2932, 7
        %v2934 = vsub.s32 %v2931, %v2933
        %v2935 = vrot.slane %v2921, %v2934
        %v2936 = vcombine.low %v2871, %v2887
        %v2937 = vcombine.high %v2871, %v2887
        %v2939 = vunpack.c.l.s4 1934713408
        %v2940 = vunpack.c.0.s8 %v2939
        %v2941 = vlaneseq
        %v2942 = vshrl.u32 %v2941, 7
        %v2943 = vsub.s32 %v2940, %v2942
        %v2944 = vrot.slane %v2936, %v2943
        %v2946 = vunpack.c.l.s4 1934713408
        %v2947 = vunpack.c.0.s8 %v2946
        %v2948 = vlaneseq
        %v2949 = vshrl.u32 %v2948, 7
        %v2950 = vsub.s32 %v2947, %v2949
        %v2951 = vrot.slane %v2937, %v2950
        %v2952 = vcombine.low %v2896, %v2928
        %v2953 = vcombine.high %v2896, %v2928
        %v2954 = vcombine.low %v2903, %v2935
        %v2955 = vcombine.high %v2903, %v2935
        %v2956 = vcombine.low %v2912, %v2944
        %v2957 = vcombine.high %v2912, %v2944
        %v2958 = vcombine.low %v2919, %v2951
        %v2959 = vcombine.high %v2919, %v2951
        %v2960 = vcombine.low %v1141, %v1149
        %v2961 = vcombine.high %v1141, %v1149
        %v2963 = vunpack.c.l.s4 1983009808
        %v2964 = vunpack.c.0.s8 %v2963
        %v2965 = vlaneseq
        %v2966 = vshrl.u32 %v2965, 7
        %v2967 = vsub.s32 %v2964, %v2966
        %v2968 = vrot.slane %v2960, %v2967
        %v2970 = vunpack.c.l.s4 1983009808
        %v2971 = vunpack.c.0.s8 %v2970
        %v2972 = vlaneseq
        %v2973 = vshrl.u32 %v2972, 7
        %v2974 = vsub.s32 %v2971, %v2973
        %v2975 = vrot.slane %v2961, %v2974
        %v2976 = vcombine.low %v1145, %v1153
        %v2977 = vcombine.high %v1145, %v1153
        %v2979 = vunpack.c.l.s4 1983009808
        %v2980 = vunpack.c.0.s8 %v2979
        %v2981 = vlaneseq
        %v2982 = vshrl.u32 %v2981, 7
        %v2983 = vsub.s32 %v2980, %v2982
        %v2984 = vrot.slane %v2976, %v2983
        %v2986 = vunpack.c.l.s4 1983009808
        %v2987 = vunpack.c.0.s8 %v2986
        %v2988 = vlaneseq
        %v2989 = vshrl.u32 %v2988, 7
        %v2990 = vsub.s32 %v2987, %v2989
        %v2991 = vrot.slane %v2977, %v2990
        %v2992 = vcombine.low %v1157, %v1165
        %v2993 = vcombine.high %v1157, %v1165
        %v2995 = vunpack.c.l.s4 1983009808
        %v2996 = vunpack.c.0.s8 %v2995
        %v2997 = vlaneseq
        %v2998 = vshrl.u32 %v2997, 7
        %v2999 = vsub.s32 %v2996, %v2998
        %v3000 = vrot.slane %v2992, %v2999
        %v3002 = vunpack.c.l.s4 1983009808
        %v3003 = vunpack.c.0.s8 %v3002
        %v3004 = vlaneseq
        %v3005 = vshrl.u32 %v3004, 7
        %v3006 = vsub.s32 %v3003, %v3005
        %v3007 = vrot.slane %v2993, %v3006
        %v3008 = vcombine.low %v1161, %v1169
        %v3009 = vcombine.high %v1161, %v1169
        %v3011 = vunpack.c.l.s4 1983009808
        %v3012 = vunpack.c.0.s8 %v3011
        %v3013 = vlaneseq
        %v3014 = vshrl.u32 %v3013, 7
        %v3015 = vsub.s32 %v3012, %v3014
        %v3016 = vrot.slane %v3008, %v3015
        %v3018 = vunpack.c.l.s4 1983009808
        %v3019 = vunpack.c.0.s8 %v3018
        %v3020 = vlaneseq
        %v3021 = vshrl.u32 %v3020, 7
        %v3022 = vsub.s32 %v3019, %v3021
        %v3023 = vrot.slane %v3009, %v3022
        %v3024 = vcombine.low %v2968, %v2984
        %v3025 = vcombine.high %v2968, %v2984
        %v3027 = vunpack.c.l.s4 1934713408
        %v3028 = vunpack.c.0.s8 %v3027
        %v3029 = vlaneseq
        %v3030 = vshrl.u32 %v3029, 7
        %v3031 = vsub.s32 %v3028, %v3030
        %v3032 = vrot.slane %v3024, %v3031
        %v3034 = vunpack.c.l.s4 1934713408
        %v3035 = vunpack.c.0.s8 %v3034
        %v3036 = vlaneseq
        %v3037 = vshrl.u32 %v3036, 7
        %v3038 = vsub.s32 %v3035, %v3037
        %v3039 = vrot.slane %v3025, %v3038
        %v3040 = vcombine.low %v2975, %v2991
        %v3041 = vcombine.high %v2975, %v2991
        %v3043 = vunpack.c.l.s4 1934713408
        %v3044 = vunpack.c.0.s8 %v3043
        %v3045 = vlaneseq
        %v3046 = vshrl.u32 %v3045, 7
        %v3047 = vsub.s32 %v3044, %v3046
        %v3048 = vrot.slane %v3040, %v3047
        %v3050 = vunpack.c.l.s4 1934713408
        %v3051 = vunpack.c.0.s8 %v3050
        %v3052 = vlaneseq
        %v3053 = vshrl.u32 %v3052, 7
        %v3054 = vsub.s32 %v3051, %v3053
        %v3055 = vrot.slane %v3041, %v3054
        %v3056 = vcombine.low %v3000, %v3016
        %v3057 = vcombine.high %v3000, %v3016
        %v3059 = vunpack.c.l.s4 1934713408
        %v3060 = vunpack.c.0.s8 %v3059
        %v3061 = vlaneseq
        %v3062 = vshrl.u32 %v3061, 7
        %v3063 = vsub.s32 %v3060, %v3062
        %v3064 = vrot.slane %v3056, %v3063
        %v3066 = vunpack.c.l.s4 1934713408
        %v3067 = vunpack.c.0.s8 %v3066
        %v3068 = vlaneseq
        %v3069 = vshrl.u32 %v3068, 7
        %v3070 = vsub.s32 %v3067, %v3069
        %v3071 = vrot.slane %v3057, %v3070
        %v3072 = vcombine.low %v3007, %v3023
        %v3073 = vcombine.high %v3007, %v3023
        %v3075 = vunpack.c.l.s4 1934713408
        %v3076 = vunpack.c.0.s8 %v3075
        %v3077 = vlaneseq
        %v3078 = vshrl.u32 %v3077, 7
        %v3079 = vsub.s32 %v3076, %v3078
        %v3080 = vrot.slane %v3072, %v3079
        %v3082 = vunpack.c.l.s4 1934713408
        %v3083 = vunpack.c.0.s8 %v3082
        %v3084 = vlaneseq
        %v3085 = vshrl.u32 %v3084, 7
        %v3086 = vsub.s32 %v3083, %v3085
        %v3087 = vrot.slane %v3073, %v3086
        %v3088 = vcombine.low %v3032, %v3064
        %v3089 = vcombine.high %v3032, %v3064
        %v3090 = vcombine.low %v3039, %v3071
        %v3091 = vcombine.high %v3039, %v3071
        %v3092 = vcombine.low %v3048, %v3080
        %v3093 = vcombine.high %v3048, %v3080
        %v3094 = vcombine.low %v3055, %v3087
        %v3095 = vcombine.high %v3055, %v3087
        %v3096 = vcombine.low %v1250, %v1258
        %v3097 = vcombine.high %v1250, %v1258
        %v3099 = vunpack.c.l.s4 1983009808
        %v3100 = vunpack.c.0.s8 %v3099
        %v3101 = vlaneseq
        %v3102 = vshrl.u32 %v3101, 7
        %v3103 = vsub.s32 %v3100, %v3102
        %v3104 = vrot.slane %v3096, %v3103
        %v3106 = vunpack.c.l.s4 1983009808
        %v3107 = vunpack.c.0.s8 %v3106
        %v3108 = vlaneseq
        %v3109 = vshrl.u32 %v3108, 7
        %v3110 = vsub.s32 %v3107, %v3109
        %v3111 = vrot.slane %v3097, %v3110
        %v3112 = vcombine.low %v1254, %v1262
        %v3113 = vcombine.high %v1254, %v1262
        %v3115 = vunpack.c.l.s4 1983009808
        %v3116 = vunpack.c.0.s8 %v3115
        %v3117 = vlaneseq
        %v3118 = vshrl.u32 %v3117, 7
        %v3119 = vsub.s32 %v3116, %v3118
        %v3120 = vrot.slane %v3112, %v3119
        %v3122 = vunpack.c.l.s4 1983009808
        %v3123 = vunpack.c.0.s8 %v3122
        %v3124 = vlaneseq
        %v3125 = vshrl.u32 %v3124, 7
        %v3126 = vsub.s32 %v3123, %v3125
        %v3127 = vrot.slane %v3113, %v3126
        %v3128 = vcombine.low %v1266, %v1274
        %v3129 = vcombine.high %v1266, %v1274
        %v3131 = vunpack.c.l.s4 1983009808
        %v3132 = vunpack.c.0.s8 %v3131
        %v3133 = vlaneseq
        %v3134 = vshrl.u32 %v3133, 7
        %v3135 = vsub.s32 %v3132, %v3134
        %v3136 = vrot.slane %v3128, %v3135
        %v3138 = vunpack.c.l.s4 1983009808
        %v3139 = vunpack.c.0.s8 %v3138
        %v3140 = vlaneseq
        %v3141 = vshrl.u32 %v3140, 7
        %v3142 = vsub.s32 %v3139, %v3141
        %v3143 = vrot.slane %v3129, %v3142
        %v3144 = vcombine.low %v1270, %v1278
        %v3145 = vcombine.high %v1270, %v1278
        %v3147 = vunpack.c.l.s4 1983009808
        %v3148 = vunpack.c.0.s8 %v3147
        %v3149 = vlaneseq
        %v3150 = vshrl.u32 %v3149, 7
        %v3151 = vsub.s32 %v3148, %v3150
        %v3152 = vrot.slane %v3144, %v3151
        %v3154 = vunpack.c.l.s4 1983009808
        %v3155 = vunpack.c.0.s8 %v3154
        %v3156 = vlaneseq
        %v3157 = vshrl.u32 %v3156, 7
        %v3158 = vsub.s32 %v3155, %v3157
        %v3159 = vrot.slane %v3145, %v3158
        %v3160 = vcombine.low %v3104, %v3120
        %v3161 = vcombine.high %v3104, %v3120
        %v3163 = vunpack.c.l.s4 1934713408
        %v3164 = vunpack.c.0.s8 %v3163
        %v3165 = vlaneseq
        %v3166 = vshrl.u32 %v3165, 7
        %v3167 = vsub.s32 %v3164, %v3166
        %v3168 = vrot.slane %v3160, %v3167
        %v3170 = vunpack.c.l.s4 1934713408
        %v3171 = vunpack.c.0.s8 %v3170
        %v3172 = vlaneseq
        %v3173 = vshrl.u32 %v3172, 7
        %v3174 = vsub.s32 %v3171, %v3173
        %v3175 = vrot.slane %v3161, %v3174
        %v3176 = vcombine.low %v3111, %v3127
        %v3177 = vcombine.high %v3111, %v3127
        %v3179 = vunpack.c.l.s4 1934713408
        %v3180 = vunpack.c.0.s8 %v3179
        %v3181 = vlaneseq
        %v3182 = vshrl.u32 %v3181, 7
        %v3183 = vsub.s32 %v3180, %v3182
        %v3184 = vrot.slane %v3176, %v3183
        %v3186 = vunpack.c.l.s4 1934713408
        %v3187 = vunpack.c.0.s8 %v3186
        %v3188 = vlaneseq
        %v3189 = vshrl.u32 %v3188, 7
        %v3190 = vsub.s32 %v3187, %v3189
        %v3191 = vrot.slane %v3177, %v3190
        %v3192 = vcombine.low %v3136, %v3152
        %v3193 = vcombine.high %v3136, %v3152
        %v3195 = vunpack.c.l.s4 1934713408
        %v3196 = vunpack.c.0.s8 %v3195
        %v3197 = vlaneseq
        %v3198 = vshrl.u32 %v3197, 7
        %v3199 = vsub.s32 %v3196, %v3198
        %v3200 = vrot.slane %v3192, %v3199
        %v3202 = vunpack.c.l.s4 1934713408
        %v3203 = vunpack.c.0.s8 %v3202
        %v3204 = vlaneseq
        %v3205 = vshrl.u32 %v3204, 7
        %v3206 = vsub.s32 %v3203, %v3205
        %v3207 = vrot.slane %v3193, %v3206
        %v3208 = vcombine.low %v3143, %v3159
        %v3209 = vcombine.high %v3143, %v3159
        %v3211 = vunpack.c.l.s4 1934713408
        %v3212 = vunpack.c.0.s8 %v3211
        %v3213 = vlaneseq
        %v3214 = vshrl.u32 %v3213, 7
        %v3215 = vsub.s32 %v3212, %v3214
        %v3216 = vrot.slane %v3208, %v3215
        %v3218 = vunpack.c.l.s4 1934713408
        %v3219 = vunpack.c.0.s8 %v3218
        %v3220 = vlaneseq
        %v3221 = vshrl.u32 %v3220, 7
        %v3222 = vsub.s32 %v3219, %v3221
        %v3223 = vrot.slane %v3209, %v3222
        %v3224 = vcombine.low %v3168, %v3200
        %v3225 = vcombine.high %v3168, %v3200
        %v3226 = vcombine.low %v3175, %v3207
        %v3227 = vcombine.high %v3175, %v3207
        %v3228 = vcombine.low %v3184, %v3216
        %v3229 = vcombine.high %v3184, %v3216
        %v3230 = vcombine.low %v3191, %v3223
        %v3231 = vcombine.high %v3191, %v3223
        %v3232 = vcombine.low %v1282, %v1290
        %v3233 = vcombine.high %v1282, %v1290
        %v3235 = vunpack.c.l.s4 1983009808
        %v3236 = vunpack.c.0.s8 %v3235
        %v3237 = vlaneseq
        %v3238 = vshrl.u32 %v3237, 7
        %v3239 = vsub.s32 %v3236, %v3238
        %v3240 = vrot.slane %v3232, %v3239
        %v3242 = vunpack.c.l.s4 1983009808
        %v3243 = vunpack.c.0.s8 %v3242
        %v3244 = vlaneseq
        %v3245 = vshrl.u32 %v3244, 7
        %v3246 = vsub.s32 %v3243, %v3245
        %v3247 = vrot.slane %v3233, %v3246
        %v3248 = vcombine.low %v1286, %v1294
        %v3249 = vcombine.high %v1286, %v1294
        %v3251 = vunpack.c.l.s4 1983009808
        %v3252 = vunpack.c.0.s8 %v3251
        %v3253 = vlaneseq
        %v3254 = vshrl.u32 %v3253, 7
        %v3255 = vsub.s32 %v3252, %v3254
        %v3256 = vrot.slane %v3248, %v3255
        %v3258 = vunpack.c.l.s4 1983009808
        %v3259 = vunpack.c.0.s8 %v3258
        %v3260 = vlaneseq
        %v3261 = vshrl.u32 %v3260, 7
        %v3262 = vsub.s32 %v3259, %v3261
        %v3263 = vrot.slane %v3249, %v3262
        %v3264 = vcombine.low %v1298, %v1306
        %v3265 = vcombine.high %v1298, %v1306
        %v3267 = vunpack.c.l.s4 1983009808
        %v3268 = vunpack.c.0.s8 %v3267
        %v3269 = vlaneseq
        %v3270 = vshrl.u32 %v3269, 7
        %v3271 = vsub.s32 %v3268, %v3270
        %v3272 = vrot.slane %v3264, %v3271
        %v3274 = vunpack.c.l.s4 1983009808
        %v3275 = vunpack.c.0.s8 %v3274
        %v3276 = vlaneseq
        %v3277 = vshrl.u32 %v3276, 7
        %v3278 = vsub.s32 %v3275, %v3277
        %v3279 = vrot.slane %v3265, %v3278
        %v3280 = vcombine.low %v1302, %v1310
        %v3281 = vcombine.high %v1302, %v1310
        %v3283 = vunpack.c.l.s4 1983009808
        %v3284 = vunpack.c.0.s8 %v3283
        %v3285 = vlaneseq
        %v3286 = vshrl.u32 %v3285, 7
        %v3287 = vsub.s32 %v3284, %v3286
        %v3288 = vrot.slane %v3280, %v3287
        %v3290 = vunpack.c.l.s4 1983009808
        %v3291 = vunpack.c.0.s8 %v3290
        %v3292 = vlaneseq
        %v3293 = vshrl.u32 %v3292, 7
        %v3294 = vsub.s32 %v3291, %v3293
        %v3295 = vrot.slane %v3281, %v3294
        %v3296 = vcombine.low %v3240, %v3256
        %v3297 = vcombine.high %v3240, %v3256
        %v3299 = vunpack.c.l.s4 1934713408
        %v3300 = vunpack.c.0.s8 %v3299
        %v3301 = vlaneseq
        %v3302 = vshrl.u32 %v3301, 7
        %v3303 = vsub.s32 %v3300, %v3302
        %v3304 = vrot.slane %v3296, %v3303
        %v3306 = vunpack.c.l.s4 1934713408
        %v3307 = vunpack.c.0.s8 %v3306
        %v3308 = vlaneseq
        %v3309 = vshrl.u32 %v3308, 7
        %v3310 = vsub.s32 %v3307, %v3309
        %v3311 = vrot.slane %v3297, %v3310
        %v3312 = vcombine.low %v3247, %v3263
        %v3313 = vcombine.high %v3247, %v3263
        %v3315 = vunpack.c.l.s4 1934713408
        %v3316 = vunpack.c.0.s8 %v3315
        %v3317 = vlaneseq
        %v3318 = vshrl.u32 %v3317, 7
        %v3319 = vsub.s32 %v3316, %v3318
        %v3320 = vrot.slane %v3312, %v3319
        %v3322 = vunpack.c.l.s4 1934713408
        %v3323 = vunpack.c.0.s8 %v3322
        %v3324 = vlaneseq
        %v3325 = vshrl.u32 %v3324, 7
        %v3326 = vsub.s32 %v3323, %v3325
        %v3327 = vrot.slane %v3313, %v3326
        %v3328 = vcombine.low %v3272, %v3288
        %v3329 = vcombine.high %v3272, %v3288
        %v3331 = vunpack.c.l.s4 1934713408
        %v3332 = vunpack.c.0.s8 %v3331
        %v3333 = vlaneseq
        %v3334 = vshrl.u32 %v3333, 7
        %v3335 = vsub.s32 %v3332, %v3334
        %v3336 = vrot.slane %v3328, %v3335
        %v3338 = vunpack.c.l.s4 1934713408
        %v3339 = vunpack.c.0.s8 %v3338
        %v3340 = vlaneseq
        %v3341 = vshrl.u32 %v3340, 7
        %v3342 = vsub.s32 %v3339, %v3341
        %v3343 = vrot.slane %v3329, %v3342
        %v3344 = vcombine.low %v3279, %v3295
        %v3345 = vcombine.high %v3279, %v3295
        %v3347 = vunpack.c.l.s4 1934713408
        %v3348 = vunpack.c.0.s8 %v3347
        %v3349 = vlaneseq
        %v3350 = vshrl.u32 %v3349, 7
        %v3351 = vsub.s32 %v3348, %v3350
        %v3352 = vrot.slane %v3344, %v3351
        %v3354 = vunpack.c.l.s4 1934713408
        %v3355 = vunpack.c.0.s8 %v3354
        %v3356 = vlaneseq
        %v3357 = vshrl.u32 %v3356, 7
        %v3358 = vsub.s32 %v3355, %v3357
        %v3359 = vrot.slane %v3345, %v3358
        %v3360 = vcombine.low %v3304, %v3336
        %v3361 = vcombine.high %v3304, %v3336
        %v3362 = vcombine.low %v3311, %v3343
        %v3363 = vcombine.high %v3311, %v3343
        %v3364 = vcombine.low %v3320, %v3352
        %v3365 = vcombine.high %v3320, %v3352
        %v3366 = vcombine.low %v3327, %v3359
        %v3367 = vcombine.high %v3327, %v3359
        %v3368 = vcombine.low %v1394, %v1402
        %v3369 = vcombine.high %v1394, %v1402
        %v3371 = vunpack.c.l.s4 1983009808
        %v3372 = vunpack.c.0.s8 %v3371
        %v3373 = vlaneseq
        %v3374 = vshrl.u32 %v3373, 7
        %v3375 = vsub.s32 %v3372, %v3374
        %v3376 = vrot.slane %v3368, %v3375
        %v3378 = vunpack.c.l.s4 1983009808
        %v3379 = vunpack.c.0.s8 %v3378
        %v3380 = vlaneseq
        %v3381 = vshrl.u32 %v3380, 7
        %v3382 = vsub.s32 %v3379, %v3381
        %v3383 = vrot.slane %v3369, %v3382
        %v3384 = vcombine.low %v1398, %v1406
        %v3385 = vcombine.high %v1398, %v1406
        %v3387 = vunpack.c.l.s4 1983009808
        %v3388 = vunpack.c.0.s8 %v3387
        %v3389 = vlaneseq
        %v3390 = vshrl.u32 %v3389, 7
        %v3391 = vsub.s32 %v3388, %v3390
        %v3392 = vrot.slane %v3384, %v3391
        %v3394 = vunpack.c.l.s4 1983009808
        %v3395 = vunpack.c.0.s8 %v3394
        %v3396 = vlaneseq
        %v3397 = vshrl.u32 %v3396, 7
        %v3398 = vsub.s32 %v3395, %v3397
        %v3399 = vrot.slane %v3385, %v3398
        %v3400 = vcombine.low %v1410, %v1418
        %v3401 = vcombine.high %v1410, %v1418
        %v3403 = vunpack.c.l.s4 1983009808
        %v3404 = vunpack.c.0.s8 %v3403
        %v3405 = vlaneseq
        %v3406 = vshrl.u32 %v3405, 7
        %v3407 = vsub.s32 %v3404, %v3406
        %v3408 = vrot.slane %v3400, %v3407
        %v3410 = vunpack.c.l.s4 1983009808
        %v3411 = vunpack.c.0.s8 %v3410
        %v3412 = vlaneseq
        %v3413 = vshrl.u32 %v3412, 7
        %v3414 = vsub.s32 %v3411, %v3413
        %v3415 = vrot.slane %v3401, %v3414
        %v3416 = vcombine.low %v1414, %v1422
        %v3417 = vcombine.high %v1414, %v1422
        %v3419 = vunpack.c.l.s4 1983009808
        %v3420 = vunpack.c.0.s8 %v3419
        %v3421 = vlaneseq
        %v3422 = vshrl.u32 %v3421, 7
        %v3423 = vsub.s32 %v3420, %v3422
        %v3424 = vrot.slane %v3416, %v3423
        %v3426 = vunpack.c.l.s4 1983009808
        %v3427 = vunpack.c.0.s8 %v3426
        %v3428 = vlaneseq
        %v3429 = vshrl.u32 %v3428, 7
        %v3430 = vsub.s32 %v3427, %v3429
        %v3431 = vrot.slane %v3417, %v3430
        %v3432 = vcombine.low %v3376, %v3392
        %v3433 = vcombine.high %v3376, %v3392
        %v3435 = vunpack.c.l.s4 1934713408
        %v3436 = vunpack.c.0.s8 %v3435
        %v3437 = vlaneseq
        %v3438 = vshrl.u32 %v3437, 7
        %v3439 = vsub.s32 %v3436, %v3438
        %v3440 = vrot.slane %v3432, %v3439
        %v3442 = vunpack.c.l.s4 1934713408
        %v3443 = vunpack.c.0.s8 %v3442
        %v3444 = vlaneseq
        %v3445 = vshrl.u32 %v3444, 7
        %v3446 = vsub.s32 %v3443, %v3445
        %v3447 = vrot.slane %v3433, %v3446
        %v3448 = vcombine.low %v3383, %v3399
        %v3449 = vcombine.high %v3383, %v3399
        %v3451 = vunpack.c.l.s4 1934713408
        %v3452 = vunpack.c.0.s8 %v3451
        %v3453 = vlaneseq
        %v3454 = vshrl.u32 %v3453, 7
        %v3455 = vsub.s32 %v3452, %v3454
        %v3456 = vrot.slane %v3448, %v3455
        %v3458 = vunpack.c.l.s4 1934713408
        %v3459 = vunpack.c.0.s8 %v3458
        %v3460 = vlaneseq
        %v3461 = vshrl.u32 %v3460, 7
        %v3462 = vsub.s32 %v3459, %v3461
        %v3463 = vrot.slane %v3449, %v3462
        %v3464 = vcombine.low %v3408, %v3424
        %v3465 = vcombine.high %v3408, %v3424
        %v3467 = vunpack.c.l.s4 1934713408
        %v3468 = vunpack.c.0.s8 %v3467
        %v3469 = vlaneseq
        %v3470 = vshrl.u32 %v3469, 7
        %v3471 = vsub.s32 %v3468, %v3470
        %v3472 = vrot.slane %v3464, %v3471
        %v3474 = vunpack.c.l.s4 1934713408
        %v3475 = vunpack.c.0.s8 %v3474
        %v3476 = vlaneseq
        %v3477 = vshrl.u32 %v3476, 7
        %v3478 = vsub.s32 %v3475, %v3477
        %v3479 = vrot.slane %v3465, %v3478
        %v3480 = vcombine.low %v3415, %v3431
        %v3481 = vcombine.high %v3415, %v3431
        %v3483 = vunpack.c.l.s4 1934713408
        %v3484 = vunpack.c.0.s8 %v3483
        %v3485 = vlaneseq
        %v3486 = vshrl.u32 %v3485, 7
        %v3487 = vsub.s32 %v3484, %v3486
        %v3488 = vrot.slane %v3480, %v3487
        %v3490 = vunpack.c.l.s4 1934713408
        %v3491 = vunpack.c.0.s8 %v3490
        %v3492 = vlaneseq
        %v3493 = vshrl.u32 %v3492, 7
        %v3494 = vsub.s32 %v3491, %v3493
        %v3495 = vrot.slane %v3481, %v3494
        %v3496 = vcombine.low %v3440, %v3472
        %v3497 = vcombine.high %v3440, %v3472
        %v3498 = vcombine.low %v3447, %v3479
        %v3499 = vcombine.high %v3447, %v3479
        %v3500 = vcombine.low %v3456, %v3488
        %v3501 = vcombine.high %v3456, %v3488
        %v3502 = vcombine.low %v3463, %v3495
        %v3503 = vcombine.high %v3463, %v3495
        %v3504 = vcombine.low %v1426, %v1434
        %v3505 = vcombine.high %v1426, %v1434
        %v3507 = vunpack.c.l.s4 1983009808
        %v3508 = vunpack.c.0.s8 %v3507
        %v3509 = vlaneseq
        %v3510 = vshrl.u32 %v3509, 7
        %v3511 = vsub.s32 %v3508, %v3510
        %v3512 = vrot.slane %v3504, %v3511
        %v3514 = vunpack.c.l.s4 1983009808
        %v3515 = vunpack.c.0.s8 %v3514
        %v3516 = vlaneseq
        %v3517 = vshrl.u32 %v3516, 7
        %v3518 = vsub.s32 %v3515, %v3517
        %v3519 = vrot.slane %v3505, %v3518
        %v3520 = vcombine.low %v1430, %v1438
        %v3521 = vcombine.high %v1430, %v1438
        %v3523 = vunpack.c.l.s4 1983009808
        %v3524 = vunpack.c.0.s8 %v3523
        %v3525 = vlaneseq
        %v3526 = vshrl.u32 %v3525, 7
        %v3527 = vsub.s32 %v3524, %v3526
        %v3528 = vrot.slane %v3520, %v3527
        %v3530 = vunpack.c.l.s4 1983009808
        %v3531 = vunpack.c.0.s8 %v3530
        %v3532 = vlaneseq
        %v3533 = vshrl.u32 %v3532, 7
        %v3534 = vsub.s32 %v3531, %v3533
        %v3535 = vrot.slane %v3521, %v3534
        %v3536 = vcombine.low %v1442, %v1450
        %v3537 = vcombine.high %v1442, %v1450
        %v3539 = vunpack.c.l.s4 1983009808
        %v3540 = vunpack.c.0.s8 %v3539
        %v3541 = vlaneseq
        %v3542 = vshrl.u32 %v3541, 7
        %v3543 = vsub.s32 %v3540, %v3542
        %v3544 = vrot.slane %v3536, %v3543
        %v3546 = vunpack.c.l.s4 1983009808
        %v3547 = vunpack.c.0.s8 %v3546
        %v3548 = vlaneseq
        %v3549 = vshrl.u32 %v3548, 7
        %v3550 = vsub.s32 %v3547, %v3549
        %v3551 = vrot.slane %v3537, %v3550
        %v3552 = vcombine.low %v1446, %v1454
        %v3553 = vcombine.high %v1446, %v1454
        %v3555 = vunpack.c.l.s4 1983009808
        %v3556 = vunpack.c.0.s8 %v3555
        %v3557 = vlaneseq
        %v3558 = vshrl.u32 %v3557, 7
        %v3559 = vsub.s32 %v3556, %v3558
        %v3560 = vrot.slane %v3552, %v3559
        %v3562 = vunpack.c.l.s4 1983009808
        %v3563 = vunpack.c.0.s8 %v3562
        %v3564 = vlaneseq
        %v3565 = vshrl.u32 %v3564, 7
        %v3566 = vsub.s32 %v3563, %v3565
        %v3567 = vrot.slane %v3553, %v3566
        %v3568 = vcombine.low %v3512, %v3528
        %v3569 = vcombine.high %v3512, %v3528
        %v3571 = vunpack.c.l.s4 1934713408
        %v3572 = vunpack.c.0.s8 %v3571
        %v3573 = vlaneseq
        %v3574 = vshrl.u32 %v3573, 7
        %v3575 = vsub.s32 %v3572, %v3574
        %v3576 = vrot.slane %v3568, %v3575
        %v3578 = vunpack.c.l.s4 1934713408
        %v3579 = vunpack.c.0.s8 %v3578
        %v3580 = vlaneseq
        %v3581 = vshrl.u32 %v3580, 7
        %v3582 = vsub.s32 %v3579, %v3581
        %v3583 = vrot.slane %v3569, %v3582
        %v3584 = vcombine.low %v3519, %v3535
        %v3585 = vcombine.high %v3519, %v3535
        %v3587 = vunpack.c.l.s4 1934713408
        %v3588 = vunpack.c.0.s8 %v3587
        %v3589 = vlaneseq
        %v3590 = vshrl.u32 %v3589, 7
        %v3591 = vsub.s32 %v3588, %v3590
        %v3592 = vrot.slane %v3584, %v3591
        %v3594 = vunpack.c.l.s4 1934713408
        %v3595 = vunpack.c.0.s8 %v3594
        %v3596 = vlaneseq
        %v3597 = vshrl.u32 %v3596, 7
        %v3598 = vsub.s32 %v3595, %v3597
        %v3599 = vrot.slane %v3585, %v3598
        %v3600 = vcombine.low %v3544, %v3560
        %v3601 = vcombine.high %v3544, %v3560
        %v3603 = vunpack.c.l.s4 1934713408
        %v3604 = vunpack.c.0.s8 %v3603
        %v3605 = vlaneseq
        %v3606 = vshrl.u32 %v3605, 7
        %v3607 = vsub.s32 %v3604, %v3606
        %v3608 = vrot.slane %v3600, %v3607
        %v3610 = vunpack.c.l.s4 1934713408
        %v3611 = vunpack.c.0.s8 %v3610
        %v3612 = vlaneseq
        %v3613 = vshrl.u32 %v3612, 7
        %v3614 = vsub.s32 %v3611, %v3613
        %v3615 = vrot.slane %v3601, %v3614
        %v3616 = vcombine.low %v3551, %v3567
        %v3617 = vcombine.high %v3551, %v3567
        %v3619 = vunpack.c.l.s4 1934713408
        %v3620 = vunpack.c.0.s8 %v3619
        %v3621 = vlaneseq
        %v3622 = vshrl.u32 %v3621, 7
        %v3623 = vsub.s32 %v3620, %v3622
        %v3624 = vrot.slane %v3616, %v3623
        %v3626 = vunpack.c.l.s4 1934713408
        %v3627 = vunpack.c.0.s8 %v3626
        %v3628 = vlaneseq
        %v3629 = vshrl.u32 %v3628, 7
        %v3630 = vsub.s32 %v3627, %v3629
        %v3631 = vrot.slane %v3617, %v3630
        %v3632 = vcombine.low %v3576, %v3608
        %v3633 = vcombine.high %v3576, %v3608
        %v3634 = vcombine.low %v3583, %v3615
        %v3635 = vcombine.high %v3583, %v3615
        %v3636 = vcombine.low %v3592, %v3624
        %v3637 = vcombine.high %v3592, %v3624
        %v3638 = vcombine.low %v3599, %v3631
        %v3639 = vcombine.high %v3599, %v3631
        %v3640 = vcombine.low %v520, %v1494
        %v3641 = vcombine.high %v520, %v1494
        %v3643 = vunpack.c.l.s4 1983009808
        %v3644 = vunpack.c.0.s8 %v3643
        %v3645 = vlaneseq
        %v3646 = vshrl.u32 %v3645, 7
        %v3647 = vsub.s32 %v3644, %v3646
        %v3648 = vrot.slane %v3640, %v3647
        %v3650 = vunpack.c.l.s4 1983009808
        %v3651 = vunpack.c.0.s8 %v3650
        %v3652 = vlaneseq
        %v3653 = vshrl.u32 %v3652, 7
        %v3654 = vsub.s32 %v3651, %v3653
        %v3655 = vrot.slane %v3641, %v3654
        %v3656 = vcombine.low %v1491, %v1497
        %v3657 = vcombine.high %v1491, %v1497
        %v3659 = vunpack.c.l.s4 1983009808
        %v3660 = vunpack.c.0.s8 %v3659
        %v3661 = vlaneseq
        %v3662 = vshrl.u32 %v3661, 7
        %v3663 = vsub.s32 %v3660, %v3662
        %v3664 = vrot.slane %v3656, %v3663
        %v3666 = vunpack.c.l.s4 1983009808
        %v3667 = vunpack.c.0.s8 %v3666
        %v3668 = vlaneseq
        %v3669 = vshrl.u32 %v3668, 7
        %v3670 = vsub.s32 %v3667, %v3669
        %v3671 = vrot.slane %v3657, %v3670
        %v3672 = vcombine.low %v1500, %v1506
        %v3673 = vcombine.high %v1500, %v1506
        %v3675 = vunpack.c.l.s4 1983009808
        %v3676 = vunpack.c.0.s8 %v3675
        %v3677 = vlaneseq
        %v3678 = vshrl.u32 %v3677, 7
        %v3679 = vsub.s32 %v3676, %v3678
        %v3680 = vrot.slane %v3672, %v3679
        %v3682 = vunpack.c.l.s4 1983009808
        %v3683 = vunpack.c.0.s8 %v3682
        %v3684 = vlaneseq
        %v3685 = vshrl.u32 %v3684, 7
        %v3686 = vsub.s32 %v3683, %v3685
        %v3687 = vrot.slane %v3673, %v3686
        %v3688 = vcombine.low %v1503, %v1509
        %v3689 = vcombine.high %v1503, %v1509
        %v3691 = vunpack.c.l.s4 1983009808
        %v3692 = vunpack.c.0.s8 %v3691
        %v3693 = vlaneseq
        %v3694 = vshrl.u32 %v3693, 7
        %v3695 = vsub.s32 %v3692, %v3694
        %v3696 = vrot.slane %v3688, %v3695
        %v3698 = vunpack.c.l.s4 1983009808
        %v3699 = vunpack.c.0.s8 %v3698
        %v3700 = vlaneseq
        %v3701 = vshrl.u32 %v3700, 7
        %v3702 = vsub.s32 %v3699, %v3701
        %v3703 = vrot.slane %v3689, %v3702
        %v3704 = vcombine.low %v3648, %v3664
        %v3705 = vcombine.high %v3648, %v3664
        %v3707 = vunpack.c.l.s4 1934713408
        %v3708 = vunpack.c.0.s8 %v3707
        %v3709 = vlaneseq
        %v3710 = vshrl.u32 %v3709, 7
        %v3711 = vsub.s32 %v3708, %v3710
        %v3712 = vrot.slane %v3704, %v3711
        %v3714 = vunpack.c.l.s4 1934713408
        %v3715 = vunpack.c.0.s8 %v3714
        %v3716 = vlaneseq
        %v3717 = vshrl.u32 %v3716, 7
        %v3718 = vsub.s32 %v3715, %v3717
        %v3719 = vrot.slane %v3705, %v3718
        %v3720 = vcombine.low %v3655, %v3671
        %v3721 = vcombine.high %v3655, %v3671
        %v3723 = vunpack.c.l.s4 1934713408
        %v3724 = vunpack.c.0.s8 %v3723
        %v3725 = vlaneseq
        %v3726 = vshrl.u32 %v3725, 7
        %v3727 = vsub.s32 %v3724, %v3726
        %v3728 = vrot.slane %v3720, %v3727
        %v3730 = vunpack.c.l.s4 1934713408
        %v3731 = vunpack.c.0.s8 %v3730
        %v3732 = vlaneseq
        %v3733 = vshrl.u32 %v3732, 7
        %v3734 = vsub.s32 %v3731, %v3733
        %v3735 = vrot.slane %v3721, %v3734
        %v3736 = vcombine.low %v3680, %v3696
        %v3737 = vcombine.high %v3680, %v3696
        %v3739 = vunpack.c.l.s4 1934713408
        %v3740 = vunpack.c.0.s8 %v3739
        %v3741 = vlaneseq
        %v3742 = vshrl.u32 %v3741, 7
        %v3743 = vsub.s32 %v3740, %v3742
        %v3744 = vrot.slane %v3736, %v3743
        %v3746 = vunpack.c.l.s4 1934713408
        %v3747 = vunpack.c.0.s8 %v3746
        %v3748 = vlaneseq
        %v3749 = vshrl.u32 %v3748, 7
        %v3750 = vsub.s32 %v3747, %v3749
        %v3751 = vrot.slane %v3737, %v3750
        %v3752 = vcombine.low %v3687, %v3703
        %v3753 = vcombine.high %v3687, %v3703
        %v3755 = vunpack.c.l.s4 1934713408
        %v3756 = vunpack.c.0.s8 %v3755
        %v3757 = vlaneseq
        %v3758 = vshrl.u32 %v3757, 7
        %v3759 = vsub.s32 %v3756, %v3758
        %v3760 = vrot.slane %v3752, %v3759
        %v3762 = vunpack.c.l.s4 1934713408
        %v3763 = vunpack.c.0.s8 %v3762
        %v3764 = vlaneseq
        %v3765 = vshrl.u32 %v3764, 7
        %v3766 = vsub.s32 %v3763, %v3765
        %v3767 = vrot.slane %v3753, %v3766
        %v3768 = vcombine.low %v3712, %v3744
        %v3769 = vcombine.high %v3712, %v3744
        %v3770 = vcombine.low %v3719, %v3751
        %v3771 = vcombine.high %v3719, %v3751
        %v3772 = vcombine.low %v3728, %v3760
        %v3773 = vcombine.high %v3728, %v3760
        %v3774 = vcombine.low %v3735, %v3767
        %v3775 = vcombine.high %v3735, %v3767
        %v3776 = vcombine.low %v1512, %v1518
        %v3777 = vcombine.high %v1512, %v1518
        %v3779 = vunpack.c.l.s4 1983009808
        %v3780 = vunpack.c.0.s8 %v3779
        %v3781 = vlaneseq
        %v3782 = vshrl.u32 %v3781, 7
        %v3783 = vsub.s32 %v3780, %v3782
        %v3784 = vrot.slane %v3776, %v3783
        %v3786 = vunpack.c.l.s4 1983009808
        %v3787 = vunpack.c.0.s8 %v3786
        %v3788 = vlaneseq
        %v3789 = vshrl.u32 %v3788, 7
        %v3790 = vsub.s32 %v3787, %v3789
        %v3791 = vrot.slane %v3777, %v3790
        %v3792 = vcombine.low %v1515, %v1521
        %v3793 = vcombine.high %v1515, %v1521
        %v3795 = vunpack.c.l.s4 1983009808
        %v3796 = vunpack.c.0.s8 %v3795
        %v3797 = vlaneseq
        %v3798 = vshrl.u32 %v3797, 7
        %v3799 = vsub.s32 %v3796, %v3798
        %v3800 = vrot.slane %v3792, %v3799
        %v3802 = vunpack.c.l.s4 1983009808
        %v3803 = vunpack.c.0.s8 %v3802
        %v3804 = vlaneseq
        %v3805 = vshrl.u32 %v3804, 7
        %v3806 = vsub.s32 %v3803, %v3805
        %v3807 = vrot.slane %v3793, %v3806
        %v3808 = vcombine.low %v1524, %v1530
        %v3809 = vcombine.high %v1524, %v1530
        %v3811 = vunpack.c.l.s4 1983009808
        %v3812 = vunpack.c.0.s8 %v3811
        %v3813 = vlaneseq
        %v3814 = vshrl.u32 %v3813, 7
        %v3815 = vsub.s32 %v3812, %v3814
        %v3816 = vrot.slane %v3808, %v3815
        %v3818 = vunpack.c.l.s4 1983009808
        %v3819 = vunpack.c.0.s8 %v3818
        %v3820 = vlaneseq
        %v3821 = vshrl.u32 %v3820, 7
        %v3822 = vsub.s32 %v3819, %v3821
        %v3823 = vrot.slane %v3809, %v3822
        %v3824 = vcombine.low %v1527, %v1533
        %v3825 = vcombine.high %v1527, %v1533
        %v3827 = vunpack.c.l.s4 1983009808
        %v3828 = vunpack.c.0.s8 %v3827
        %v3829 = vlaneseq
        %v3830 = vshrl.u32 %v3829, 7
        %v3831 = vsub.s32 %v3828, %v3830
        %v3832 = vrot.slane %v3824, %v3831
        %v3834 = vunpack.c.l.s4 1983009808
        %v3835 = vunpack.c.0.s8 %v3834
        %v3836 = vlaneseq
        %v3837 = vshrl.u32 %v3836, 7
        %v3838 = vsub.s32 %v3835, %v3837
        %v3839 = vrot.slane %v3825, %v3838
        %v3840 = vcombine.low %v3784, %v3800
        %v3841 = vcombine.high %v3784, %v3800
        %v3843 = vunpack.c.l.s4 1934713408
        %v3844 = vunpack.c.0.s8 %v3843
        %v3845 = vlaneseq
        %v3846 = vshrl.u32 %v3845, 7
        %v3847 = vsub.s32 %v3844, %v3846
        %v3848 = vrot.slane %v3840, %v3847
        %v3850 = vunpack.c.l.s4 1934713408
        %v3851 = vunpack.c.0.s8 %v3850
        %v3852 = vlaneseq
        %v3853 = vshrl.u32 %v3852, 7
        %v3854 = vsub.s32 %v3851, %v3853
        %v3855 = vrot.slane %v3841, %v3854
        %v3856 = vcombine.low %v3791, %v3807
        %v3857 = vcombine.high %v3791, %v3807
        %v3859 = vunpack.c.l.s4 1934713408
        %v3860 = vunpack.c.0.s8 %v3859
        %v3861 = vlaneseq
        %v3862 = vshrl.u32 %v3861, 7
        %v3863 = vsub.s32 %v3860, %v3862
        %v3864 = vrot.slane %v3856, %v3863
        %v3866 = vunpack.c.l.s4 1934713408
        %v3867 = vunpack.c.0.s8 %v3866
        %v3868 = vlaneseq
        %v3869 = vshrl.u32 %v3868, 7
        %v3870 = vsub.s32 %v3867, %v3869
        %v3871 = vrot.slane %v3857, %v3870
        %v3872 = vcombine.low %v3816, %v3832
        %v3873 = vcombine.high %v3816, %v3832
        %v3875 = vunpack.c.l.s4 1934713408
        %v3876 = vunpack.c.0.s8 %v3875
        %v3877 = vlaneseq
        %v3878 = vshrl.u32 %v3877, 7
        %v3879 = vsub.s32 %v3876, %v3878
        %v3880 = vrot.slane %v3872, %v3879
        %v3882 = vunpack.c.l.s4 1934713408
        %v3883 = vunpack.c.0.s8 %v3882
        %v3884 = vlaneseq
        %v3885 = vshrl.u32 %v3884, 7
        %v3886 = vsub.s32 %v3883, %v3885
        %v3887 = vrot.slane %v3873, %v3886
        %v3888 = vcombine.low %v3823, %v3839
        %v3889 = vcombine.high %v3823, %v3839
        %v3891 = vunpack.c.l.s4 1934713408
        %v3892 = vunpack.c.0.s8 %v3891
        %v3893 = vlaneseq
        %v3894 = vshrl.u32 %v3893, 7
        %v3895 = vsub.s32 %v3892, %v3894
        %v3896 = vrot.slane %v3888, %v3895
        %v3898 = vunpack.c.l.s4 1934713408
        %v3899 = vunpack.c.0.s8 %v3898
        %v3900 = vlaneseq
        %v3901 = vshrl.u32 %v3900, 7
        %v3902 = vsub.s32 %v3899, %v3901
        %v3903 = vrot.slane %v3889, %v3902
        %v3904 = vcombine.low %v3848, %v3880
        %v3905 = vcombine.high %v3848, %v3880
        %v3906 = vcombine.low %v3855, %v3887
        %v3907 = vcombine.high %v3855, %v3887
        %v3908 = vcombine.low %v3864, %v3896
        %v3909 = vcombine.high %v3864, %v3896
        %v3910 = vcombine.low %v3871, %v3903
        %v3911 = vcombine.high %v3871, %v3903
        %v3912 = vcombine.low %v1615, %v1623
        %v3913 = vcombine.high %v1615, %v1623
        %v3915 = vunpack.c.l.s4 1983009808
        %v3916 = vunpack.c.0.s8 %v3915
        %v3917 = vlaneseq
        %v3918 = vshrl.u32 %v3917, 7
        %v3919 = vsub.s32 %v3916, %v3918
        %v3920 = vrot.slane %v3912, %v3919
        %v3922 = vunpack.c.l.s4 1983009808
        %v3923 = vunpack.c.0.s8 %v3922
        %v3924 = vlaneseq
        %v3925 = vshrl.u32 %v3924, 7
        %v3926 = vsub.s32 %v3923, %v3925
        %v3927 = vrot.slane %v3913, %v3926
        %v3928 = vcombine.low %v1619, %v1627
        %v3929 = vcombine.high %v1619, %v1627
        %v3931 = vunpack.c.l.s4 1983009808
        %v3932 = vunpack.c.0.s8 %v3931
        %v3933 = vlaneseq
        %v3934 = vshrl.u32 %v3933, 7
        %v3935 = vsub.s32 %v3932, %v3934
        %v3936 = vrot.slane %v3928, %v3935
        %v3938 = vunpack.c.l.s4 1983009808
        %v3939 = vunpack.c.0.s8 %v3938
        %v3940 = vlaneseq
        %v3941 = vshrl.u32 %v3940, 7
        %v3942 = vsub.s32 %v3939, %v3941
        %v3943 = vrot.slane %v3929, %v3942
        %v3944 = vcombine.low %v1631, %v1639
        %v3945 = vcombine.high %v1631, %v1639
        %v3947 = vunpack.c.l.s4 1983009808
        %v3948 = vunpack.c.0.s8 %v3947
        %v3949 = vlaneseq
        %v3950 = vshrl.u32 %v3949, 7
        %v3951 = vsub.s32 %v3948, %v3950
        %v3952 = vrot.slane %v3944, %v3951
        %v3954 = vunpack.c.l.s4 1983009808
        %v3955 = vunpack.c.0.s8 %v3954
        %v3956 = vlaneseq
        %v3957 = vshrl.u32 %v3956, 7
        %v3958 = vsub.s32 %v3955, %v3957
        %v3959 = vrot.slane %v3945, %v3958
        %v3960 = vcombine.low %v1635, %v1643
        %v3961 = vcombine.high %v1635, %v1643
        %v3963 = vunpack.c.l.s4 1983009808
        %v3964 = vunpack.c.0.s8 %v3963
        %v3965 = vlaneseq
        %v3966 = vshrl.u32 %v3965, 7
        %v3967 = vsub.s32 %v3964, %v3966
        %v3968 = vrot.slane %v3960, %v3967
        %v3970 = vunpack.c.l.s4 1983009808
        %v3971 = vunpack.c.0.s8 %v3970
        %v3972 = vlaneseq
        %v3973 = vshrl.u32 %v3972, 7
        %v3974 = vsub.s32 %v3971, %v3973
        %v3975 = vrot.slane %v3961, %v3974
        %v3976 = vcombine.low %v3920, %v3936
        %v3977 = vcombine.high %v3920, %v3936
        %v3979 = vunpack.c.l.s4 1934713408
        %v3980 = vunpack.c.0.s8 %v3979
        %v3981 = vlaneseq
        %v3982 = vshrl.u32 %v3981, 7
        %v3983 = vsub.s32 %v3980, %v3982
        %v3984 = vrot.slane %v3976, %v3983
        %v3986 = vunpack.c.l.s4 1934713408
        %v3987 = vunpack.c.0.s8 %v3986
        %v3988 = vlaneseq
        %v3989 = vshrl.u32 %v3988, 7
        %v3990 = vsub.s32 %v3987, %v3989
        %v3991 = vrot.slane %v3977, %v3990
        %v3992 = vcombine.low %v3927, %v3943
        %v3993 = vcombine.high %v3927, %v3943
        %v3995 = vunpack.c.l.s4 1934713408
        %v3996 = vunpack.c.0.s8 %v3995
        %v3997 = vlaneseq
        %v3998 = vshrl.u32 %v3997, 7
        %v3999 = vsub.s32 %v3996, %v3998
        %v4000 = vrot.slane %v3992, %v3999
        %v4002 = vunpack.c.l.s4 1934713408
        %v4003 = vunpack.c.0.s8 %v4002
        %v4004 = vlaneseq
        %v4005 = vshrl.u32 %v4004, 7
        %v4006 = vsub.s32 %v4003, %v4005
        %v4007 = vrot.slane %v3993, %v4006
        %v4008 = vcombine.low %v3952, %v3968
        %v4009 = vcombine.high %v3952, %v3968
        %v4011 = vunpack.c.l.s4 1934713408
        %v4012 = vunpack.c.0.s8 %v4011
        %v4013 = vlaneseq
        %v4014 = vshrl.u32 %v4013, 7
        %v4015 = vsub.s32 %v4012, %v4014
        %v4016 = vrot.slane %v4008, %v4015
        %v4018 = vunpack.c.l.s4 1934713408
        %v4019 = vunpack.c.0.s8 %v4018
        %v4020 = vlaneseq
        %v4021 = vshrl.u32 %v4020, 7
        %v4022 = vsub.s32 %v4019, %v4021
        %v4023 = vrot.slane %v4009, %v4022
        %v4024 = vcombine.low %v3959, %v3975
        %v4025 = vcombine.high %v3959, %v3975
        %v4027 = vunpack.c.l.s4 1934713408
        %v4028 = vunpack.c.0.s8 %v4027
        %v4029 = vlaneseq
        %v4030 = vshrl.u32 %v4029, 7
        %v4031 = vsub.s32 %v4028, %v4030
        %v4032 = vrot.slane %v4024, %v4031
        %v4034 = vunpack.c.l.s4 1934713408
        %v4035 = vunpack.c.0.s8 %v4034
        %v4036 = vlaneseq
        %v4037 = vshrl.u32 %v4036, 7
        %v4038 = vsub.s32 %v4035, %v4037
        %v4039 = vrot.slane %v4025, %v4038
        %v4040 = vcombine.low %v3984, %v4016
        %v4041 = vcombine.high %v3984, %v4016
        %v4042 = vcombine.low %v3991, %v4023
        %v4043 = vcombine.high %v3991, %v4023
        %v4044 = vcombine.low %v4000, %v4032
        %v4045 = vcombine.high %v4000, %v4032
        %v4046 = vcombine.low %v4007, %v4039
        %v4047 = vcombine.high %v4007, %v4039
        %v4048 = vcombine.low %v1647, %v1655
        %v4049 = vcombine.high %v1647, %v1655
        %v4051 = vunpack.c.l.s4 1983009808
        %v4052 = vunpack.c.0.s8 %v4051
        %v4053 = vlaneseq
        %v4054 = vshrl.u32 %v4053, 7
        %v4055 = vsub.s32 %v4052, %v4054
        %v4056 = vrot.slane %v4048, %v4055
        %v4058 = vunpack.c.l.s4 1983009808
        %v4059 = vunpack.c.0.s8 %v4058
        %v4060 = vlaneseq
        %v4061 = vshrl.u32 %v4060, 7
        %v4062 = vsub.s32 %v4059, %v4061
        %v4063 = vrot.slane %v4049, %v4062
        %v4064 = vcombine.low %v1651, %v1659
        %v4065 = vcombine.high %v1651, %v1659
        %v4067 = vunpack.c.l.s4 1983009808
        %v4068 = vunpack.c.0.s8 %v4067
        %v4069 = vlaneseq
        %v4070 = vshrl.u32 %v4069, 7
        %v4071 = vsub.s32 %v4068, %v4070
        %v4072 = vrot.slane %v4064, %v4071
        %v4074 = vunpack.c.l.s4 1983009808
        %v4075 = vunpack.c.0.s8 %v4074
        %v4076 = vlaneseq
        %v4077 = vshrl.u32 %v4076, 7
        %v4078 = vsub.s32 %v4075, %v4077
        %v4079 = vrot.slane %v4065, %v4078
        %v4080 = vcombine.low %v1663, %v1671
        %v4081 = vcombine.high %v1663, %v1671
        %v4083 = vunpack.c.l.s4 1983009808
        %v4084 = vunpack.c.0.s8 %v4083
        %v4085 = vlaneseq
        %v4086 = vshrl.u32 %v4085, 7
        %v4087 = vsub.s32 %v4084, %v4086
        %v4088 = vrot.slane %v4080, %v4087
        %v4090 = vunpack.c.l.s4 1983009808
        %v4091 = vunpack.c.0.s8 %v4090
        %v4092 = vlaneseq
        %v4093 = vshrl.u32 %v4092, 7
        %v4094 = vsub.s32 %v4091, %v4093
        %v4095 = vrot.slane %v4081, %v4094
        %v4096 = vcombine.low %v1667, %v1675
        %v4097 = vcombine.high %v1667, %v1675
        %v4099 = vunpack.c.l.s4 1983009808
        %v4100 = vunpack.c.0.s8 %v4099
        %v4101 = vlaneseq
        %v4102 = vshrl.u32 %v4101, 7
        %v4103 = vsub.s32 %v4100, %v4102
        %v4104 = vrot.slane %v4096, %v4103
        %v4106 = vunpack.c.l.s4 1983009808
        %v4107 = vunpack.c.0.s8 %v4106
        %v4108 = vlaneseq
        %v4109 = vshrl.u32 %v4108, 7
        %v4110 = vsub.s32 %v4107, %v4109
        %v4111 = vrot.slane %v4097, %v4110
        %v4112 = vcombine.low %v4056, %v4072
        %v4113 = vcombine.high %v4056, %v4072
        %v4115 = vunpack.c.l.s4 1934713408
        %v4116 = vunpack.c.0.s8 %v4115
        %v4117 = vlaneseq
        %v4118 = vshrl.u32 %v4117, 7
        %v4119 = vsub.s32 %v4116, %v4118
        %v4120 = vrot.slane %v4112, %v4119
        %v4122 = vunpack.c.l.s4 1934713408
        %v4123 = vunpack.c.0.s8 %v4122
        %v4124 = vlaneseq
        %v4125 = vshrl.u32 %v4124, 7
        %v4126 = vsub.s32 %v4123, %v4125
        %v4127 = vrot.slane %v4113, %v4126
        %v4128 = vcombine.low %v4063, %v4079
        %v4129 = vcombine.high %v4063, %v4079
        %v4131 = vunpack.c.l.s4 1934713408
        %v4132 = vunpack.c.0.s8 %v4131
        %v4133 = vlaneseq
        %v4134 = vshrl.u32 %v4133, 7
        %v4135 = vsub.s32 %v4132, %v4134
        %v4136 = vrot.slane %v4128, %v4135
        %v4138 = vunpack.c.l.s4 1934713408
        %v4139 = vunpack.c.0.s8 %v4138
        %v4140 = vlaneseq
        %v4141 = vshrl.u32 %v4140, 7
        %v4142 = vsub.s32 %v4139, %v4141
        %v4143 = vrot.slane %v4129, %v4142
        %v4144 = vcombine.low %v4088, %v4104
        %v4145 = vcombine.high %v4088, %v4104
        %v4147 = vunpack.c.l.s4 1934713408
        %v4148 = vunpack.c.0.s8 %v4147
        %v4149 = vlaneseq
        %v4150 = vshrl.u32 %v4149, 7
        %v4151 = vsub.s32 %v4148, %v4150
        %v4152 = vrot.slane %v4144, %v4151
        %v4154 = vunpack.c.l.s4 1934713408
        %v4155 = vunpack.c.0.s8 %v4154
        %v4156 = vlaneseq
        %v4157 = vshrl.u32 %v4156, 7
        %v4158 = vsub.s32 %v4155, %v4157
        %v4159 = vrot.slane %v4145, %v4158
        %v4160 = vcombine.low %v4095, %v4111
        %v4161 = vcombine.high %v4095, %v4111
        %v4163 = vunpack.c.l.s4 1934713408
        %v4164 = vunpack.c.0.s8 %v4163
        %v4165 = vlaneseq
        %v4166 = vshrl.u32 %v4165, 7
        %v4167 = vsub.s32 %v4164, %v4166
        %v4168 = vrot.slane %v4160, %v4167
        %v4170 = vunpack.c.l.s4 1934713408
        %v4171 = vunpack.c.0.s8 %v4170
        %v4172 = vlaneseq
        %v4173 = vshrl.u32 %v4172, 7
        %v4174 = vsub.s32 %v4171, %v4173
        %v4175 = vrot.slane %v4161, %v4174
        %v4176 = vcombine.low %v4120, %v4152
        %v4177 = vcombine.high %v4120, %v4152
        %v4178 = vcombine.low %v4127, %v4159
        %v4179 = vcombine.high %v4127, %v4159
        %v4180 = vcombine.low %v4136, %v4168
        %v4181 = vcombine.high %v4136, %v4168
        %v4182 = vcombine.low %v4143, %v4175
        %v4183 = vcombine.high %v4143, %v4175
        %v4184 = vcombine.low %v1720, %v1728
        %v4185 = vcombine.high %v1720, %v1728
        %v4187 = vunpack.c.l.s4 1983009808
        %v4188 = vunpack.c.0.s8 %v4187
        %v4189 = vlaneseq
        %v4190 = vshrl.u32 %v4189, 7
        %v4191 = vsub.s32 %v4188, %v4190
        %v4192 = vrot.slane %v4184, %v4191
        %v4194 = vunpack.c.l.s4 1983009808
        %v4195 = vunpack.c.0.s8 %v4194
        %v4196 = vlaneseq
        %v4197 = vshrl.u32 %v4196, 7
        %v4198 = vsub.s32 %v4195, %v4197
        %v4199 = vrot.slane %v4185, %v4198
        %v4200 = vcombine.high %v1724, 0.0
        %v4202 = vunpack.c.l.s4 1983009808
        %v4203 = vunpack.c.0.s8 %v4202
        %v4204 = vlaneseq
        %v4205 = vshrl.u32 %v4204, 7
        %v4206 = vsub.s32 %v4203, %v4205
        %v4207 = vrot.slane %v1724, %v4206
        %v4209 = vunpack.c.l.s4 1983009808
        %v4210 = vunpack.c.0.s8 %v4209
        %v4211 = vlaneseq
        %v4212 = vshrl.u32 %v4211, 7
        %v4213 = vsub.s32 %v4210, %v4212
        %v4214 = vrot.slane %v4200, %v4213
        %v4215 = vcombine.low %v4192, %v4207
        %v4216 = vcombine.high %v4192, %v4207
        %v4218 = vunpack.c.l.s4 1934713408
        %v4219 = vunpack.c.0.s8 %v4218
        %v4220 = vlaneseq
        %v4221 = vshrl.u32 %v4220, 7
        %v4222 = vsub.s32 %v4219, %v4221
        %v4223 = vrot.slane %v4215, %v4222
        %v4225 = vunpack.c.l.s4 1934713408
        %v4226 = vunpack.c.0.s8 %v4225
        %v4227 = vlaneseq
        %v4228 = vshrl.u32 %v4227, 7
        %v4229 = vsub.s32 %v4226, %v4228
        %v4230 = vrot.slane %v4216, %v4229
        %v4231 = vcombine.low %v4199, %v4214
        %v4232 = vcombine.high %v4199, %v4214
        %v4234 = vunpack.c.l.s4 1934713408
        %v4235 = vunpack.c.0.s8 %v4234
        %v4236 = vlaneseq
        %v4237 = vshrl.u32 %v4236, 7
        %v4238 = vsub.s32 %v4235, %v4237
        %v4239 = vrot.slane %v4231, %v4238
        %v4241 = vunpack.c.l.s4 1934713408
        %v4242 = vunpack.c.0.s8 %v4241
        %v4243 = vlaneseq
        %v4244 = vshrl.u32 %v4243, 7
        %v4245 = vsub.s32 %v4242, %v4244
        %v4246 = vrot.slane %v4232, %v4245
        %v4247 = vcombine.high %v4223, 0.0
        %v4248 = vcombine.high %v4230, 0.0
        %v4249 = vcombine.high %v4239, 0.0
        %v4250 = vcombine.high %v4246, 0.0
        %v4251 = vcombine.low %v257, %v273
        %v4253 = vunpack.c.l.s4 1983009808
        %v4254 = vunpack.c.0.s8 %v4253
        %v4255 = vlaneseq
        %v4256 = vshrl.u32 %v4255, 7
        %v4257 = vsub.s32 %v4254, %v4256
        %v4258 = vrot.slane %v4251, %v4257
        %v4259 = vcombine.low %v267, %v279
        %v4261 = vunpack.c.l.s4 1983009808
        %v4262 = vunpack.c.0.s8 %v4261
        %v4263 = vlaneseq
        %v4264 = vshrl.u32 %v4263, 7
        %v4265 = vsub.s32 %v4262, %v4264
        %v4266 = vrot.slane %v4259, %v4265
        %v4267 = vcombine.low %v285, %v297
        %v4269 = vunpack.c.l.s4 1983009808
        %v4270 = vunpack.c.0.s8 %v4269
        %v4271 = vlaneseq
        %v4272 = vshrl.u32 %v4271, 7
        %v4273 = vsub.s32 %v4270, %v4272
        %v4274 = vrot.slane %v4267, %v4273
        %v4275 = vcombine.low %v291, %v302
        %v4277 = vunpack.c.l.s4 1983009808
        %v4278 = vunpack.c.0.s8 %v4277
        %v4279 = vlaneseq
        %v4280 = vshrl.u32 %v4279, 7
        %v4281 = vsub.s32 %v4278, %v4280
        %v4282 = vrot.slane %v4275, %v4281
        %v4283 = vcombine.low %v4258, %v4266
        %v4285 = vunpack.c.l.s4 1934713408
        %v4286 = vunpack.c.0.s8 %v4285
        %v4287 = vlaneseq
        %v4288 = vshrl.u32 %v4287, 7
        %v4289 = vsub.s32 %v4286, %v4288
        %v4290 = vrot.slane %v4283, %v4289
        %v4291 = vcombine.low %v4274, %v4282
        %v4293 = vunpack.c.l.s4 1934713408
        %v4294 = vunpack.c.0.s8 %v4293
        %v4295 = vlaneseq
        %v4296 = vshrl.u32 %v4295, 7
        %v4297 = vsub.s32 %v4294, %v4296
        %v4298 = vrot.slane %v4291, %v4297
        %v4299 = vcombine.low %v4290, %v4298
        %v4300 = vcombine.high %v4290, %v4298
        %v4301 = vcombine.low %v309, %v321
        %v4303 = vunpack.c.l.s4 1983009808
        %v4304 = vunpack.c.0.s8 %v4303
        %v4305 = vlaneseq
        %v4306 = vshrl.u32 %v4305, 7
        %v4307 = vsub.s32 %v4304, %v4306
        %v4308 = vrot.slane %v4301, %v4307
        %v4309 = vcombine.low %v315, %v327
        %v4311 = vunpack.c.l.s4 1983009808
        %v4312 = vunpack.c.0.s8 %v4311
        %v4313 = vlaneseq
        %v4314 = vshrl.u32 %v4313, 7
        %v4315 = vsub.s32 %v4312, %v4314
        %v4316 = vrot.slane %v4309, %v4315
        %v4317 = vcombine.low %v333, %v344
        %v4319 = vunpack.c.l.s4 1983009808
        %v4320 = vunpack.c.0.s8 %v4319
        %v4321 = vlaneseq
        %v4322 = vshrl.u32 %v4321, 7
        %v4323 = vsub.s32 %v4320, %v4322
        %v4324 = vrot.slane %v4317, %v4323
        %v4325 = vcombine.low %v339, %v351
        %v4327 = vunpack.c.l.s4 1983009808
        %v4328 = vunpack.c.0.s8 %v4327
        %v4329 = vlaneseq
        %v4330 = vshrl.u32 %v4329, 7
        %v4331 = vsub.s32 %v4328, %v4330
        %v4332 = vrot.slane %v4325, %v4331
        %v4333 = vcombine.low %v4308, %v4316
        %v4335 = vunpack.c.l.s4 1934713408
        %v4336 = vunpack.c.0.s8 %v4335
        %v4337 = vlaneseq
        %v4338 = vshrl.u32 %v4337, 7
        %v4339 = vsub.s32 %v4336, %v4338
        %v4340 = vrot.slane %v4333, %v4339
        %v4341 = vcombine.low %v4324, %v4332
        %v4343 = vunpack.c.l.s4 1934713408
        %v4344 = vunpack.c.0.s8 %v4343
        %v4345 = vlaneseq
        %v4346 = vshrl.u32 %v4345, 7
        %v4347 = vsub.s32 %v4344, %v4346
        %v4348 = vrot.slane %v4341, %v4347
        %v4349 = vcombine.low %v4340, %v4348
        %v4350 = vcombine.high %v4340, %v4348
        %v4351 = vcombine.low %v685, %v693
        %v4353 = vunpack.c.l.s4 1983009808
        %v4354 = vunpack.c.0.s8 %v4353
        %v4355 = vlaneseq
        %v4356 = vshrl.u32 %v4355, 7
        %v4357 = vsub.s32 %v4354, %v4356
        %v4358 = vrot.slane %v4351, %v4357
        %v4359 = vcombine.low %v689, %v697
        %v4361 = vunpack.c.l.s4 1983009808
        %v4362 = vunpack.c.0.s8 %v4361
        %v4363 = vlaneseq
        %v4364 = vshrl.u32 %v4363, 7
        %v4365 = vsub.s32 %v4362, %v4364
        %v4366 = vrot.slane %v4359, %v4365
        %v4367 = vcombine.low %v701, %v709
        %v4369 = vunpack.c.l.s4 1983009808
        %v4370 = vunpack.c.0.s8 %v4369
        %v4371 = vlaneseq
        %v4372 = vshrl.u32 %v4371, 7
        %v4373 = vsub.s32 %v4370, %v4372
        %v4374 = vrot.slane %v4367, %v4373
        %v4375 = vcombine.low %v705, %v713
        %v4377 = vunpack.c.l.s4 1983009808
        %v4378 = vunpack.c.0.s8 %v4377
        %v4379 = vlaneseq
        %v4380 = vshrl.u32 %v4379, 7
        %v4381 = vsub.s32 %v4378, %v4380
        %v4382 = vrot.slane %v4375, %v4381
        %v4383 = vcombine.low %v4358, %v4366
        %v4385 = vunpack.c.l.s4 1934713408
        %v4386 = vunpack.c.0.s8 %v4385
        %v4387 = vlaneseq
        %v4388 = vshrl.u32 %v4387, 7
        %v4389 = vsub.s32 %v4386, %v4388
        %v4390 = vrot.slane %v4383, %v4389
        %v4391 = vcombine.low %v4374, %v4382
        %v4393 = vunpack.c.l.s4 1934713408
        %v4394 = vunpack.c.0.s8 %v4393
        %v4395 = vlaneseq
        %v4396 = vshrl.u32 %v4395, 7
        %v4397 = vsub.s32 %v4394, %v4396
        %v4398 = vrot.slane %v4391, %v4397
        %v4399 = vcombine.low %v4390, %v4398
        %v4400 = vcombine.high %v4390, %v4398
        %v4401 = vcombine.low %v717, %v725
        %v4403 = vunpack.c.l.s4 1983009808
        %v4404 = vunpack.c.0.s8 %v4403
        %v4405 = vlaneseq
        %v4406 = vshrl.u32 %v4405, 7
        %v4407 = vsub.s32 %v4404, %v4406
        %v4408 = vrot.slane %v4401, %v4407
        %v4409 = vcombine.low %v721, %v729
        %v4411 = vunpack.c.l.s4 1983009808
        %v4412 = vunpack.c.0.s8 %v4411
        %v4413 = vlaneseq
        %v4414 = vshrl.u32 %v4413, 7
        %v4415 = vsub.s32 %v4412, %v4414
        %v4416 = vrot.slane %v4409, %v4415
        %v4417 = vcombine.low %v733, %v741
        %v4419 = vunpack.c.l.s4 1983009808
        %v4420 = vunpack.c.0.s8 %v4419
        %v4421 = vlaneseq
        %v4422 = vshrl.u32 %v4421, 7
        %v4423 = vsub.s32 %v4420, %v4422
        %v4424 = vrot.slane %v4417, %v4423
        %v4425 = vcombine.low %v737, %v745
        %v4427 = vunpack.c.l.s4 1983009808
        %v4428 = vunpack.c.0.s8 %v4427
        %v4429 = vlaneseq
        %v4430 = vshrl.u32 %v4429, 7
        %v4431 = vsub.s32 %v4428, %v4430
        %v4432 = vrot.slane %v4425, %v4431
        %v4433 = vcombine.low %v4408, %v4416
        %v4435 = vunpack.c.l.s4 1934713408
        %v4436 = vunpack.c.0.s8 %v4435
        %v4437 = vlaneseq
        %v4438 = vshrl.u32 %v4437, 7
        %v4439 = vsub.s32 %v4436, %v4438
        %v4440 = vrot.slane %v4433, %v4439
        %v4441 = vcombine.low %v4424, %v4432
        %v4443 = vunpack.c.l.s4 1934713408
        %v4444 = vunpack.c.0.s8 %v4443
        %v4445 = vlaneseq
        %v4446 = vshrl.u32 %v4445, 7
        %v4447 = vsub.s32 %v4444, %v4446
        %v4448 = vrot.slane %v4441, %v4447
        %v4449 = vcombine.low %v4440, %v4448
        %v4450 = vcombine.high %v4440, %v4448
        %v4451 = vcombine.low %v829, %v837
        %v4453 = vunpack.c.l.s4 1983009808
        %v4454 = vunpack.c.0.s8 %v4453
        %v4455 = vlaneseq
        %v4456 = vshrl.u32 %v4455, 7
        %v4457 = vsub.s32 %v4454, %v4456
        %v4458 = vrot.slane %v4451, %v4457
        %v4459 = vcombine.low %v833, %v841
        %v4461 = vunpack.c.l.s4 1983009808
        %v4462 = vunpack.c.0.s8 %v4461
        %v4463 = vlaneseq
        %v4464 = vshrl.u32 %v4463, 7
        %v4465 = vsub.s32 %v4462, %v4464
        %v4466 = vrot.slane %v4459, %v4465
        %v4467 = vcombine.low %v845, %v853
        %v4469 = vunpack.c.l.s4 1983009808
        %v4470 = vunpack.c.0.s8 %v4469
        %v4471 = vlaneseq
        %v4472 = vshrl.u32 %v4471, 7
        %v4473 = vsub.s32 %v4470, %v4472
        %v4474 = vrot.slane %v4467, %v4473
        %v4475 = vcombine.low %v849, %v857
        %v4477 = vunpack.c.l.s4 1983009808
        %v4478 = vunpack.c.0.s8 %v4477
        %v4479 = vlaneseq
        %v4480 = vshrl.u32 %v4479, 7
        %v4481 = vsub.s32 %v4478, %v4480
        %v4482 = vrot.slane %v4475, %v4481
        %v4483 = vcombine.low %v4458, %v4466
        %v4485 = vunpack.c.l.s4 1934713408
        %v4486 = vunpack.c.0.s8 %v4485
        %v4487 = vlaneseq
        %v4488 = vshrl.u32 %v4487, 7
        %v4489 = vsub.s32 %v4486, %v4488
        %v4490 = vrot.slane %v4483, %v4489
        %v4491 = vcombine.low %v4474, %v4482
        %v4493 = vunpack.c.l.s4 1934713408
        %v4494 = vunpack.c.0.s8 %v4493
        %v4495 = vlaneseq
        %v4496 = vshrl.u32 %v4495, 7
        %v4497 = vsub.s32 %v4494, %v4496
        %v4498 = vrot.slane %v4491, %v4497
        %v4499 = vcombine.low %v4490, %v4498
        %v4500 = vcombine.high %v4490, %v4498
        %v4501 = vcombine.low %v861, %v869
        %v4503 = vunpack.c.l.s4 1983009808
        %v4504 = vunpack.c.0.s8 %v4503
        %v4505 = vlaneseq
        %v4506 = vshrl.u32 %v4505, 7
        %v4507 = vsub.s32 %v4504, %v4506
        %v4508 = vrot.slane %v4501, %v4507
        %v4509 = vcombine.low %v865, %v873
        %v4511 = vunpack.c.l.s4 1983009808
        %v4512 = vunpack.c.0.s8 %v4511
        %v4513 = vlaneseq
        %v4514 = vshrl.u32 %v4513, 7
        %v4515 = vsub.s32 %v4512, %v4514
        %v4516 = vrot.slane %v4509, %v4515
        %v4517 = vcombine.low %v877, %v885
        %v4519 = vunpack.c.l.s4 1983009808
        %v4520 = vunpack.c.0.s8 %v4519
        %v4521 = vlaneseq
        %v4522 = vshrl.u32 %v4521, 7
        %v4523 = vsub.s32 %v4520, %v4522
        %v4524 = vrot.slane %v4517, %v4523
        %v4525 = vcombine.low %v881, %v889
        %v4527 = vunpack.c.l.s4 1983009808
        %v4528 = vunpack.c.0.s8 %v4527
        %v4529 = vlaneseq
        %v4530 = vshrl.u32 %v4529, 7
        %v4531 = vsub.s32 %v4528, %v4530
        %v4532 = vrot.slane %v4525, %v4531
        %v4533 = vcombine.low %v4508, %v4516
        %v4535 = vunpack.c.l.s4 1934713408
        %v4536 = vunpack.c.0.s8 %v4535
        %v4537 = vlaneseq
        %v4538 = vshrl.u32 %v4537, 7
        %v4539 = vsub.s32 %v4536, %v4538
        %v4540 = vrot.slane %v4533, %v4539
        %v4541 = vcombine.low %v4524, %v4532
        %v4543 = vunpack.c.l.s4 1934713408
        %v4544 = vunpack.c.0.s8 %v4543
        %v4545 = vlaneseq
        %v4546 = vshrl.u32 %v4545, 7
        %v4547 = vsub.s32 %v4544, %v4546
        %v4548 = vrot.slane %v4541, %v4547
        %v4549 = vcombine.low %v4540, %v4548
        %v4550 = vcombine.high %v4540, %v4548
        %v4551 = vcombine.low %v974, %v982
        %v4553 = vunpack.c.l.s4 1983009808
        %v4554 = vunpack.c.0.s8 %v4553
        %v4555 = vlaneseq
        %v4556 = vshrl.u32 %v4555, 7
        %v4557 = vsub.s32 %v4554, %v4556
        %v4558 = vrot.slane %v4551, %v4557
        %v4559 = vcombine.low %v978, %v986
        %v4561 = vunpack.c.l.s4 1983009808
        %v4562 = vunpack.c.0.s8 %v4561
        %v4563 = vlaneseq
        %v4564 = vshrl.u32 %v4563, 7
        %v4565 = vsub.s32 %v4562, %v4564
        %v4566 = vrot.slane %v4559, %v4565
        %v4567 = vcombine.low %v990, %v998
        %v4569 = vunpack.c.l.s4 1983009808
        %v4570 = vunpack.c.0.s8 %v4569
        %v4571 = vlaneseq
        %v4572 = vshrl.u32 %v4571, 7
        %v4573 = vsub.s32 %v4570, %v4572
        %v4574 = vrot.slane %v4567, %v4573
        %v4575 = vcombine.low %v994, %v1002
        %v4577 = vunpack.c.l.s4 1983009808
        %v4578 = vunpack.c.0.s8 %v4577
        %v4579 = vlaneseq
        %v4580 = vshrl.u32 %v4579, 7
        %v4581 = vsub.s32 %v4578, %v4580
        %v4582 = vrot.slane %v4575, %v4581
        %v4583 = vcombine.low %v4558, %v4566
        %v4585 = vunpack.c.l.s4 1934713408
        %v4586 = vunpack.c.0.s8 %v4585
        %v4587 = vlaneseq
        %v4588 = vshrl.u32 %v4587, 7
        %v4589 = vsub.s32 %v4586, %v4588
        %v4590 = vrot.slane %v4583, %v4589
        %v4591 = vcombine.low %v4574, %v4582
        %v4593 = vunpack.c.l.s4 1934713408
        %v4594 = vunpack.c.0.s8 %v4593
        %v4595 = vlaneseq
        %v4596 = vshrl.u32 %v4595, 7
        %v4597 = vsub.s32 %v4594, %v4596
        %v4598 = vrot.slane %v4591, %v4597
        %v4599 = vcombine.low %v4590, %v4598
        %v4600 = vcombine.high %v4590, %v4598
        %v4601 = vcombine.low %v1006, %v1014
        %v4603 = vunpack.c.l.s4 1983009808
        %v4604 = vunpack.c.0.s8 %v4603
        %v4605 = vlaneseq
        %v4606 = vshrl.u32 %v4605, 7
        %v4607 = vsub.s32 %v4604, %v4606
        %v4608 = vrot.slane %v4601, %v4607
        %v4609 = vcombine.low %v1010, %v1018
        %v4611 = vunpack.c.l.s4 1983009808
        %v4612 = vunpack.c.0.s8 %v4611
        %v4613 = vlaneseq
        %v4614 = vshrl.u32 %v4613, 7
        %v4615 = vsub.s32 %v4612, %v4614
        %v4616 = vrot.slane %v4609, %v4615
        %v4617 = vcombine.low %v1022, %v1030
        %v4619 = vunpack.c.l.s4 1983009808
        %v4620 = vunpack.c.0.s8 %v4619
        %v4621 = vlaneseq
        %v4622 = vshrl.u32 %v4621, 7
        %v4623 = vsub.s32 %v4620, %v4622
        %v4624 = vrot.slane %v4617, %v4623
        %v4625 = vcombine.low %v1026, %v1034
        %v4627 = vunpack.c.l.s4 1983009808
        %v4628 = vunpack.c.0.s8 %v4627
        %v4629 = vlaneseq
        %v4630 = vshrl.u32 %v4629, 7
        %v4631 = vsub.s32 %v4628, %v4630
        %v4632 = vrot.slane %v4625, %v4631
        %v4633 = vcombine.low %v4608, %v4616
        %v4635 = vunpack.c.l.s4 1934713408
        %v4636 = vunpack.c.0.s8 %v4635
        %v4637 = vlaneseq
        %v4638 = vshrl.u32 %v4637, 7
        %v4639 = vsub.s32 %v4636, %v4638
        %v4640 = vrot.slane %v4633, %v4639
        %v4641 = vcombine.low %v4624, %v4632
        %v4643 = vunpack.c.l.s4 1934713408
        %v4644 = vunpack.c.0.s8 %v4643
        %v4645 = vlaneseq
        %v4646 = vshrl.u32 %v4645, 7
        %v4647 = vsub.s32 %v4644, %v4646
        %v4648 = vrot.slane %v4641, %v4647
        %v4649 = vcombine.low %v4640, %v4648
        %v4650 = vcombine.high %v4640, %v4648
        %v4651 = vcombine.low %v503, %v1119
        %v4653 = vunpack.c.l.s4 1983009808
        %v4654 = vunpack.c.0.s8 %v4653
        %v4655 = vlaneseq
        %v4656 = vshrl.u32 %v4655, 7
        %v4657 = vsub.s32 %v4654, %v4656
        %v4658 = vrot.slane %v4651, %v4657
        %v4659 = vcombine.low %v1115, %v1123
        %v4661 = vunpack.c.l.s4 1983009808
        %v4662 = vunpack.c.0.s8 %v4661
        %v4663 = vlaneseq
        %v4664 = vshrl.u32 %v4663, 7
        %v4665 = vsub.s32 %v4662, %v4664
        %v4666 = vrot.slane %v4659, %v4665
        %v4667 = vcombine.low %v1127, %v1135
        %v4669 = vunpack.c.l.s4 1983009808
        %v4670 = vunpack.c.0.s8 %v4669
        %v4671 = vlaneseq
        %v4672 = vshrl.u32 %v4671, 7
        %v4673 = vsub.s32 %v4670, %v4672
        %v4674 = vrot.slane %v4667, %v4673
        %v4675 = vcombine.low %v1131, %v1139
        %v4677 = vunpack.c.l.s4 1983009808
        %v4678 = vunpack.c.0.s8 %v4677
        %v4679 = vlaneseq
        %v4680 = vshrl.u32 %v4679, 7
        %v4681 = vsub.s32 %v4678, %v4680
        %v4682 = vrot.slane %v4675, %v4681
        %v4683 = vcombine.low %v4658, %v4666
        %v4685 = vunpack.c.l.s4 1934713408
        %v4686 = vunpack.c.0.s8 %v4685
        %v4687 = vlaneseq
        %v4688 = vshrl.u32 %v4687, 7
        %v4689 = vsub.s32 %v4686, %v4688
        %v4690 = vrot.slane %v4683, %v4689
        %v4691 = vcombine.low %v4674, %v4682
        %v4693 = vunpack.c.l.s4 1934713408
        %v4694 = vunpack.c.0.s8 %v4693
        %v4695 = vlaneseq
        %v4696 = vshrl.u32 %v4695, 7
        %v4697 = vsub.s32 %v4694, %v4696
        %v4698 = vrot.slane %v4691, %v4697
        %v4699 = vcombine.low %v4690, %v4698
        %v4700 = vcombine.high %v4690, %v4698
        %v4701 = vcombine.low %v1143, %v1151
        %v4703 = vunpack.c.l.s4 1983009808
        %v4704 = vunpack.c.0.s8 %v4703
        %v4705 = vlaneseq
        %v4706 = vshrl.u32 %v4705, 7
        %v4707 = vsub.s32 %v4704, %v4706
        %v4708 = vrot.slane %v4701, %v4707
        %v4709 = vcombine.low %v1147, %v1155
        %v4711 = vunpack.c.l.s4 1983009808
        %v4712 = vunpack.c.0.s8 %v4711
        %v4713 = vlaneseq
        %v4714 = vshrl.u32 %v4713, 7
        %v4715 = vsub.s32 %v4712, %v4714
        %v4716 = vrot.slane %v4709, %v4715
        %v4717 = vcombine.low %v1159, %v1167
        %v4719 = vunpack.c.l.s4 1983009808
        %v4720 = vunpack.c.0.s8 %v4719
        %v4721 = vlaneseq
        %v4722 = vshrl.u32 %v4721, 7
        %v4723 = vsub.s32 %v4720, %v4722
        %v4724 = vrot.slane %v4717, %v4723
        %v4725 = vcombine.low %v1163, %v1171
        %v4727 = vunpack.c.l.s4 1983009808
        %v4728 = vunpack.c.0.s8 %v4727
        %v4729 = vlaneseq
        %v4730 = vshrl.u32 %v4729, 7
        %v4731 = vsub.s32 %v4728, %v4730
        %v4732 = vrot.slane %v4725, %v4731
        %v4733 = vcombine.low %v4708, %v4716
        %v4735 = vunpack.c.l.s4 1934713408
        %v4736 = vunpack.c.0.s8 %v4735
        %v4737 = vlaneseq
        %v4738 = vshrl.u32 %v4737, 7
        %v4739 = vsub.s32 %v4736, %v4738
        %v4740 = vrot.slane %v4733, %v4739
        %v4741 = vcombine.low %v4724, %v4732
        %v4743 = vunpack.c.l.s4 1934713408
        %v4744 = vunpack.c.0.s8 %v4743
        %v4745 = vlaneseq
        %v4746 = vshrl.u32 %v4745, 7
        %v4747 = vsub.s32 %v4744, %v4746
        %v4748 = vrot.slane %v4741, %v4747
        %v4749 = vcombine.low %v4740, %v4748
        %v4750 = vcombine.high %v4740, %v4748
        %v4751 = vcombine.low %v1252, %v1260
        %v4753 = vunpack.c.l.s4 1983009808
        %v4754 = vunpack.c.0.s8 %v4753
        %v4755 = vlaneseq
        %v4756 = vshrl.u32 %v4755, 7
        %v4757 = vsub.s32 %v4754, %v4756
        %v4758 = vrot.slane %v4751, %v4757
        %v4759 = vcombine.low %v1256, %v1264
        %v4761 = vunpack.c.l.s4 1983009808
        %v4762 = vunpack.c.0.s8 %v4761
        %v4763 = vlaneseq
        %v4764 = vshrl.u32 %v4763, 7
        %v4765 = vsub.s32 %v4762, %v4764
        %v4766 = vrot.slane %v4759, %v4765
        %v4767 = vcombine.low %v1268, %v1276
        %v4769 = vunpack.c.l.s4 1983009808
        %v4770 = vunpack.c.0.s8 %v4769
        %v4771 = vlaneseq
        %v4772 = vshrl.u32 %v4771, 7
        %v4773 = vsub.s32 %v4770, %v4772
        %v4774 = vrot.slane %v4767, %v4773
        %v4775 = vcombine.low %v1272, %v1280
        %v4777 = vunpack.c.l.s4 1983009808
        %v4778 = vunpack.c.0.s8 %v4777
        %v4779 = vlaneseq
        %v4780 = vshrl.u32 %v4779, 7
        %v4781 = vsub.s32 %v4778, %v4780
        %v4782 = vrot.slane %v4775, %v4781
        %v4783 = vcombine.low %v4758, %v4766
        %v4785 = vunpack.c.l.s4 1934713408
        %v4786 = vunpack.c.0.s8 %v4785
        %v4787 = vlaneseq
        %v4788 = vshrl.u32 %v4787, 7
        %v4789 = vsub.s32 %v4786, %v4788
        %v4790 = vrot.slane %v4783, %v4789
        %v4791 = vcombine.low %v4774, %v4782
        %v4793 = vunpack.c.l.s4 1934713408
        %v4794 = vunpack.c.0.s8 %v4793
        %v4795 = vlaneseq
        %v4796 = vshrl.u32 %v4795, 7
        %v4797 = vsub.s32 %v4794, %v4796
        %v4798 = vrot.slane %v4791, %v4797
        %v4799 = vcombine.low %v4790, %v4798
        %v4800 = vcombine.high %v4790, %v4798
        %v4801 = vcombine.low %v1284, %v1292
        %v4803 = vunpack.c.l.s4 1983009808
        %v4804 = vunpack.c.0.s8 %v4803
        %v4805 = vlaneseq
        %v4806 = vshrl.u32 %v4805, 7
        %v4807 = vsub.s32 %v4804, %v4806
        %v4808 = vrot.slane %v4801, %v4807
        %v4809 = vcombine.low %v1288, %v1296
        %v4811 = vunpack.c.l.s4 1983009808
        %v4812 = vunpack.c.0.s8 %v4811
        %v4813 = vlaneseq
        %v4814 = vshrl.u32 %v4813, 7
        %v4815 = vsub.s32 %v4812, %v4814
        %v4816 = vrot.slane %v4809, %v4815
        %v4817 = vcombine.low %v1300, %v1308
        %v4819 = vunpack.c.l.s4 1983009808
        %v4820 = vunpack.c.0.s8 %v4819
        %v4821 = vlaneseq
        %v4822 = vshrl.u32 %v4821, 7
        %v4823 = vsub.s32 %v4820, %v4822
        %v4824 = vrot.slane %v4817, %v4823
        %v4825 = vcombine.low %v1304, %v1312
        %v4827 = vunpack.c.l.s4 1983009808
        %v4828 = vunpack.c.0.s8 %v4827
        %v4829 = vlaneseq
        %v4830 = vshrl.u32 %v4829, 7
        %v4831 = vsub.s32 %v4828, %v4830
        %v4832 = vrot.slane %v4825, %v4831
        %v4833 = vcombine.low %v4808, %v4816
        %v4835 = vunpack.c.l.s4 1934713408
        %v4836 = vunpack.c.0.s8 %v4835
        %v4837 = vlaneseq
        %v4838 = vshrl.u32 %v4837, 7
        %v4839 = vsub.s32 %v4836, %v4838
        %v4840 = vrot.slane %v4833, %v4839
        %v4841 = vcombine.low %v4824, %v4832
        %v4843 = vunpack.c.l.s4 1934713408
        %v4844 = vunpack.c.0.s8 %v4843
        %v4845 = vlaneseq
        %v4846 = vshrl.u32 %v4845, 7
        %v4847 = vsub.s32 %v4844, %v4846
        %v4848 = vrot.slane %v4841, %v4847
        %v4849 = vcombine.low %v4840, %v4848
        %v4850 = vcombine.high %v4840, %v4848
        %v4851 = vcombine.low %v1396, %v1404
        %v4853 = vunpack.c.l.s4 1983009808
        %v4854 = vunpack.c.0.s8 %v4853
        %v4855 = vlaneseq
        %v4856 = vshrl.u32 %v4855, 7
        %v4857 = vsub.s32 %v4854, %v4856
        %v4858 = vrot.slane %v4851, %v4857
        %v4859 = vcombine.low %v1400, %v1408
        %v4861 = vunpack.c.l.s4 1983009808
        %v4862 = vunpack.c.0.s8 %v4861
        %v4863 = vlaneseq
        %v4864 = vshrl.u32 %v4863, 7
        %v4865 = vsub.s32 %v4862, %v4864
        %v4866 = vrot.slane %v4859, %v4865
        %v4867 = vcombine.low %v1412, %v1420
        %v4869 = vunpack.c.l.s4 1983009808
        %v4870 = vunpack.c.0.s8 %v4869
        %v4871 = vlaneseq
        %v4872 = vshrl.u32 %v4871, 7
        %v4873 = vsub.s32 %v4870, %v4872
        %v4874 = vrot.slane %v4867, %v4873
        %v4875 = vcombine.low %v1416, %v1424
        %v4877 = vunpack.c.l.s4 1983009808
        %v4878 = vunpack.c.0.s8 %v4877
        %v4879 = vlaneseq
        %v4880 = vshrl.u32 %v4879, 7
        %v4881 = vsub.s32 %v4878, %v4880
        %v4882 = vrot.slane %v4875, %v4881
        %v4883 = vcombine.low %v4858, %v4866
        %v4885 = vunpack.c.l.s4 1934713408
        %v4886 = vunpack.c.0.s8 %v4885
        %v4887 = vlaneseq
        %v4888 = vshrl.u32 %v4887, 7
        %v4889 = vsub.s32 %v4886, %v4888
        %v4890 = vrot.slane %v4883, %v4889
        %v4891 = vcombine.low %v4874, %v4882
        %v4893 = vunpack.c.l.s4 1934713408
        %v4894 = vunpack.c.0.s8 %v4893
        %v4895 = vlaneseq
        %v4896 = vshrl.u32 %v4895, 7
        %v4897 = vsub.s32 %v4894, %v4896
        %v4898 = vrot.slane %v4891, %v4897
        %v4899 = vcombine.low %v4890, %v4898
        %v4900 = vcombine.high %v4890, %v4898
        %v4901 = vcombine.low %v1428, %v1436
        %v4903 = vunpack.c.l.s4 1983009808
        %v4904 = vunpack.c.0.s8 %v4903
        %v4905 = vlaneseq
        %v4906 = vshrl.u32 %v4905, 7
        %v4907 = vsub.s32 %v4904, %v4906
        %v4908 = vrot.slane %v4901, %v4907
        %v4909 = vcombine.low %v1432, %v1440
        %v4911 = vunpack.c.l.s4 1983009808
        %v4912 = vunpack.c.0.s8 %v4911
        %v4913 = vlaneseq
        %v4914 = vshrl.u32 %v4913, 7
        %v4915 = vsub.s32 %v4912, %v4914
        %v4916 = vrot.slane %v4909, %v4915
        %v4917 = vcombine.low %v1444, %v1452
        %v4919 = vunpack.c.l.s4 1983009808
        %v4920 = vunpack.c.0.s8 %v4919
        %v4921 = vlaneseq
        %v4922 = vshrl.u32 %v4921, 7
        %v4923 = vsub.s32 %v4920, %v4922
        %v4924 = vrot.slane %v4917, %v4923
        %v4925 = vcombine.low %v1448, %v1456
        %v4927 = vunpack.c.l.s4 1983009808
        %v4928 = vunpack.c.0.s8 %v4927
        %v4929 = vlaneseq
        %v4930 = vshrl.u32 %v4929, 7
        %v4931 = vsub.s32 %v4928, %v4930
        %v4932 = vrot.slane %v4925, %v4931
        %v4933 = vcombine.low %v4908, %v4916
        %v4935 = vunpack.c.l.s4 1934713408
        %v4936 = vunpack.c.0.s8 %v4935
        %v4937 = vlaneseq
        %v4938 = vshrl.u32 %v4937, 7
        %v4939 = vsub.s32 %v4936, %v4938
        %v4940 = vrot.slane %v4933, %v4939
        %v4941 = vcombine.low %v4924, %v4932
        %v4943 = vunpack.c.l.s4 1934713408
        %v4944 = vunpack.c.0.s8 %v4943
        %v4945 = vlaneseq
        %v4946 = vshrl.u32 %v4945, 7
        %v4947 = vsub.s32 %v4944, %v4946
        %v4948 = vrot.slane %v4941, %v4947
        %v4949 = vcombine.low %v4940, %v4948
        %v4950 = vcombine.high %v4940, %v4948
        %v4951 = vcombine.low %v519, %v1493
        %v4953 = vunpack.c.l.s4 1983009808
        %v4954 = vunpack.c.0.s8 %v4953
        %v4955 = vlaneseq
        %v4956 = vshrl.u32 %v4955, 7
        %v4957 = vsub.s32 %v4954, %v4956
        %v4958 = vrot.slane %v4951, %v4957
        %v4959 = vcombine.low %v1490, %v1496
        %v4961 = vunpack.c.l.s4 1983009808
        %v4962 = vunpack.c.0.s8 %v4961
        %v4963 = vlaneseq
        %v4964 = vshrl.u32 %v4963, 7
        %v4965 = vsub.s32 %v4962, %v4964
        %v4966 = vrot.slane %v4959, %v4965
        %v4967 = vcombine.low %v1499, %v1505
        %v4969 = vunpack.c.l.s4 1983009808
        %v4970 = vunpack.c.0.s8 %v4969
        %v4971 = vlaneseq
        %v4972 = vshrl.u32 %v4971, 7
        %v4973 = vsub.s32 %v4970, %v4972
        %v4974 = vrot.slane %v4967, %v4973
        %v4975 = vcombine.low %v1502, %v1508
        %v4977 = vunpack.c.l.s4 1983009808
        %v4978 = vunpack.c.0.s8 %v4977
        %v4979 = vlaneseq
        %v4980 = vshrl.u32 %v4979, 7
        %v4981 = vsub.s32 %v4978, %v4980
        %v4982 = vrot.slane %v4975, %v4981
        %v4983 = vcombine.low %v4958, %v4966
        %v4985 = vunpack.c.l.s4 1934713408
        %v4986 = vunpack.c.0.s8 %v4985
        %v4987 = vlaneseq
        %v4988 = vshrl.u32 %v4987, 7
        %v4989 = vsub.s32 %v4986, %v4988
        %v4990 = vrot.slane %v4983, %v4989
        %v4991 = vcombine.low %v4974, %v4982
        %v4993 = vunpack.c.l.s4 1934713408
        %v4994 = vunpack.c.0.s8 %v4993
        %v4995 = vlaneseq
        %v4996 = vshrl.u32 %v4995, 7
        %v4997 = vsub.s32 %v4994, %v4996
        %v4998 = vrot.slane %v4991, %v4997
        %v4999 = vcombine.low %v4990, %v4998
        %v5000 = vcombine.high %v4990, %v4998
        %v5001 = vcombine.low %v1511, %v1517
        %v5003 = vunpack.c.l.s4 1983009808
        %v5004 = vunpack.c.0.s8 %v5003
        %v5005 = vlaneseq
        %v5006 = vshrl.u32 %v5005, 7
        %v5007 = vsub.s32 %v5004, %v5006
        %v5008 = vrot.slane %v5001, %v5007
        %v5009 = vcombine.low %v1514, %v1520
        %v5011 = vunpack.c.l.s4 1983009808
        %v5012 = vunpack.c.0.s8 %v5011
        %v5013 = vlaneseq
        %v5014 = vshrl.u32 %v5013, 7
        %v5015 = vsub.s32 %v5012, %v5014
        %v5016 = vrot.slane %v5009, %v5015
        %v5017 = vcombine.low %v1523, %v1529
        %v5019 = vunpack.c.l.s4 1983009808
        %v5020 = vunpack.c.0.s8 %v5019
        %v5021 = vlaneseq
        %v5022 = vshrl.u32 %v5021, 7
        %v5023 = vsub.s32 %v5020, %v5022
        %v5024 = vrot.slane %v5017, %v5023
        %v5025 = vcombine.low %v1526, %v1532
        %v5027 = vunpack.c.l.s4 1983009808
        %v5028 = vunpack.c.0.s8 %v5027
        %v5029 = vlaneseq
        %v5030 = vshrl.u32 %v5029, 7
        %v5031 = vsub.s32 %v5028, %v5030
        %v5032 = vrot.slane %v5025, %v5031
        %v5033 = vcombine.low %v5008, %v5016
        %v5035 = vunpack.c.l.s4 1934713408
        %v5036 = vunpack.c.0.s8 %v5035
        %v5037 = vlaneseq
        %v5038 = vshrl.u32 %v5037, 7
        %v5039 = vsub.s32 %v5036, %v5038
        %v5040 = vrot.slane %v5033, %v5039
        %v5041 = vcombine.low %v5024, %v5032
        %v5043 = vunpack.c.l.s4 1934713408
        %v5044 = vunpack.c.0.s8 %v5043
        %v5045 = vlaneseq
        %v5046 = vshrl.u32 %v5045, 7
        %v5047 = vsub.s32 %v5044, %v5046
        %v5048 = vrot.slane %v5041, %v5047
        %v5049 = vcombine.low %v5040, %v5048
        %v5050 = vcombine.high %v5040, %v5048
        %v5051 = vcombine.low %v1617, %v1625
        %v5053 = vunpack.c.l.s4 1983009808
        %v5054 = vunpack.c.0.s8 %v5053
        %v5055 = vlaneseq
        %v5056 = vshrl.u32 %v5055, 7
        %v5057 = vsub.s32 %v5054, %v5056
        %v5058 = vrot.slane %v5051, %v5057
        %v5059 = vcombine.low %v1621, %v1629
        %v5061 = vunpack.c.l.s4 1983009808
        %v5062 = vunpack.c.0.s8 %v5061
        %v5063 = vlaneseq
        %v5064 = vshrl.u32 %v5063, 7
        %v5065 = vsub.s32 %v5062, %v5064
        %v5066 = vrot.slane %v5059, %v5065
        %v5067 = vcombine.low %v1633, %v1641
        %v5069 = vunpack.c.l.s4 1983009808
        %v5070 = vunpack.c.0.s8 %v5069
        %v5071 = vlaneseq
        %v5072 = vshrl.u32 %v5071, 7
        %v5073 = vsub.s32 %v5070, %v5072
        %v5074 = vrot.slane %v5067, %v5073
        %v5075 = vcombine.low %v1637, %v1645
        %v5077 = vunpack.c.l.s4 1983009808
        %v5078 = vunpack.c.0.s8 %v5077
        %v5079 = vlaneseq
        %v5080 = vshrl.u32 %v5079, 7
        %v5081 = vsub.s32 %v5078, %v5080
        %v5082 = vrot.slane %v5075, %v5081
        %v5083 = vcombine.low %v5058, %v5066
        %v5085 = vunpack.c.l.s4 1934713408
        %v5086 = vunpack.c.0.s8 %v5085
        %v5087 = vlaneseq
        %v5088 = vshrl.u32 %v5087, 7
        %v5089 = vsub.s32 %v5086, %v5088
        %v5090 = vrot.slane %v5083, %v5089
        %v5091 = vcombine.low %v5074, %v5082
        %v5093 = vunpack.c.l.s4 1934713408
        %v5094 = vunpack.c.0.s8 %v5093
        %v5095 = vlaneseq
        %v5096 = vshrl.u32 %v5095, 7
        %v5097 = vsub.s32 %v5094, %v5096
        %v5098 = vrot.slane %v5091, %v5097
        %v5099 = vcombine.low %v5090, %v5098
        %v5100 = vcombine.high %v5090, %v5098
        %v5101 = vcombine.low %v1649, %v1657
        %v5103 = vunpack.c.l.s4 1983009808
        %v5104 = vunpack.c.0.s8 %v5103
        %v5105 = vlaneseq
        %v5106 = vshrl.u32 %v5105, 7
        %v5107 = vsub.s32 %v5104, %v5106
        %v5108 = vrot.slane %v5101, %v5107
        %v5109 = vcombine.low %v1653, %v1661
        %v5111 = vunpack.c.l.s4 1983009808
        %v5112 = vunpack.c.0.s8 %v5111
        %v5113 = vlaneseq
        %v5114 = vshrl.u32 %v5113, 7
        %v5115 = vsub.s32 %v5112, %v5114
        %v5116 = vrot.slane %v5109, %v5115
        %v5117 = vcombine.low %v1665, %v1673
        %v5119 = vunpack.c.l.s4 1983009808
        %v5120 = vunpack.c.0.s8 %v5119
        %v5121 = vlaneseq
        %v5122 = vshrl.u32 %v5121, 7
        %v5123 = vsub.s32 %v5120, %v5122
        %v5124 = vrot.slane %v5117, %v5123
        %v5125 = vcombine.low %v1669, %v1677
        %v5127 = vunpack.c.l.s4 1983009808
        %v5128 = vunpack.c.0.s8 %v5127
        %v5129 = vlaneseq
        %v5130 = vshrl.u32 %v5129, 7
        %v5131 = vsub.s32 %v5128, %v5130
        %v5132 = vrot.slane %v5125, %v5131
        %v5133 = vcombine.low %v5108, %v5116
        %v5135 = vunpack.c.l.s4 1934713408
        %v5136 = vunpack.c.0.s8 %v5135
        %v5137 = vlaneseq
        %v5138 = vshrl.u32 %v5137, 7
        %v5139 = vsub.s32 %v5136, %v5138
        %v5140 = vrot.slane %v5133, %v5139
        %v5141 = vcombine.low %v5124, %v5132
        %v5143 = vunpack.c.l.s4 1934713408
        %v5144 = vunpack.c.0.s8 %v5143
        %v5145 = vlaneseq
        %v5146 = vshrl.u32 %v5145, 7
        %v5147 = vsub.s32 %v5144, %v5146
        %v5148 = vrot.slane %v5141, %v5147
        %v5149 = vcombine.low %v5140, %v5148
        %v5150 = vcombine.high %v5140, %v5148
        %v5151 = vcombine.low %v1722, %v1730
        %v5153 = vunpack.c.l.s4 1983009808
        %v5154 = vunpack.c.0.s8 %v5153
        %v5155 = vlaneseq
        %v5156 = vshrl.u32 %v5155, 7
        %v5157 = vsub.s32 %v5154, %v5156
        %v5158 = vrot.slane %v5151, %v5157
        %v5160 = vcombine.low %v5158, %v1726
        %v5162 = vunpack.c.l.s4 1934713408
        %v5163 = vunpack.c.0.s8 %v5162
        %v5164 = vlaneseq
        %v5165 = vshrl.u32 %v5164, 7
        %v5166 = vsub.s32 %v5163, %v5165
        %v5167 = vrot.slane %v5160, %v5166
        %v5168 = vcombine.high %v5167, 0.0
        %5188 = vrot.lane.b32.xlu0 %v1865, 10
        %v5189 = vpop.permute.xlu0 %5188
        %5190 = vrot.lane.b32.xlu0 %v2001, 10
        %v5191 = vpop.permute.xlu0 %5190
        %5192 = vrot.lane.b32.xlu0 %v2137, 10
        %v5193 = vpop.permute.xlu0 %5192
        %5194 = vrot.lane.b32.xlu0 %v2273, 10
        %v5195 = vpop.permute.xlu0 %5194
        %5196 = vrot.lane.b32.xlu0 %v2409, 10
        %v5197 = vpop.permute.xlu0 %5196
        %5198 = vrot.lane.b32.xlu0 %v2545, 10
        %v5199 = vpop.permute.xlu0 %5198
        %5200 = vrot.lane.b32.xlu0 %v2681, 10
        %v5201 = vpop.permute.xlu0 %5200
        %5202 = vrot.lane.b32.xlu0 %v2817, 10
        %v5203 = vpop.permute.xlu0 %5202
        %5204 = vrot.lane.b32.xlu0 %v2953, 10
        %v5205 = vpop.permute.xlu0 %5204
        %5206 = vrot.lane.b32.xlu0 %v3089, 10
        %v5207 = vpop.permute.xlu0 %5206
        %5208 = vrot.lane.b32.xlu0 %v3225, 10
        %v5209 = vpop.permute.xlu0 %5208
        %5210 = vrot.lane.b32.xlu0 %v3361, 10
        %v5211 = vpop.permute.xlu0 %5210
        %5212 = vrot.lane.b32.xlu0 %v3497, 10
        %v5213 = vpop.permute.xlu0 %5212
        %5214 = vrot.lane.b32.xlu0 %v3633, 10
        %v5215 = vpop.permute.xlu0 %5214
        %5216 = vrot.lane.b32.xlu0 %v3769, 10
        %v5217 = vpop.permute.xlu0 %5216
        %5218 = vrot.lane.b32.xlu0 %v3905, 10
        %v5219 = vpop.permute.xlu0 %5218
        %5220 = vrot.lane.b32.xlu0 %v4041, 10
        %v5221 = vpop.permute.xlu0 %5220
        %5222 = vrot.lane.b32.xlu0 %v4177, 10
        %v5223 = vpop.permute.xlu0 %5222
        %5224 = vrot.lane.b32.xlu0 %v4247, 10
        %v5225 = vpop.permute.xlu0 %5224
        %5264 = vrot.lane.b32.xlu0 %v1866, 20
        %v5265 = vpop.permute.xlu0 %5264
        %5266 = vrot.lane.b32.xlu0 %v2002, 20
        %v5267 = vpop.permute.xlu0 %5266
        %5268 = vrot.lane.b32.xlu0 %v2138, 20
        %v5269 = vpop.permute.xlu0 %5268
        %5270 = vrot.lane.b32.xlu0 %v2274, 20
        %v5271 = vpop.permute.xlu0 %5270
        %5272 = vrot.lane.b32.xlu0 %v2410, 20
        %v5273 = vpop.permute.xlu0 %5272
        %5274 = vrot.lane.b32.xlu0 %v2546, 20
        %v5275 = vpop.permute.xlu0 %5274
        %5276 = vrot.lane.b32.xlu0 %v2682, 20
        %v5277 = vpop.permute.xlu0 %5276
        %5278 = vrot.lane.b32.xlu0 %v2818, 20
        %v5279 = vpop.permute.xlu0 %5278
        %5280 = vrot.lane.b32.xlu0 %v2954, 20
        %v5281 = vpop.permute.xlu0 %5280
        %5282 = vrot.lane.b32.xlu0 %v3090, 20
        %v5283 = vpop.permute.xlu0 %5282
        %5284 = vrot.lane.b32.xlu0 %v3226, 20
        %v5285 = vpop.permute.xlu0 %5284
        %5286 = vrot.lane.b32.xlu0 %v3362, 20
        %v5287 = vpop.permute.xlu0 %5286
        %5288 = vrot.lane.b32.xlu0 %v3498, 20
        %v5289 = vpop.permute.xlu0 %5288
        %5290 = vrot.lane.b32.xlu0 %v3634, 20
        %v5291 = vpop.permute.xlu0 %5290
        %5292 = vrot.lane.b32.xlu0 %v3770, 20
        %v5293 = vpop.permute.xlu0 %5292
        %5294 = vrot.lane.b32.xlu0 %v3906, 20
        %v5295 = vpop.permute.xlu0 %5294
        %5296 = vrot.lane.b32.xlu0 %v4042, 20
        %v5297 = vpop.permute.xlu0 %5296
        %5298 = vrot.lane.b32.xlu0 %v4178, 20
        %v5299 = vpop.permute.xlu0 %5298
        %5300 = vrot.lane.b32.xlu0 %v4230, 20
        %v5301 = vpop.permute.xlu0 %5300
        %5340 = vrot.lane.b32.xlu0 %v1867, 30
        %v5341 = vpop.permute.xlu0 %5340
        %5342 = vrot.lane.b32.xlu0 %v2003, 30
        %v5343 = vpop.permute.xlu0 %5342
        %5344 = vrot.lane.b32.xlu0 %v2139, 30
        %v5345 = vpop.permute.xlu0 %5344
        %5346 = vrot.lane.b32.xlu0 %v2275, 30
        %v5347 = vpop.permute.xlu0 %5346
        %5348 = vrot.lane.b32.xlu0 %v2411, 30
        %v5349 = vpop.permute.xlu0 %5348
        %5350 = vrot.lane.b32.xlu0 %v2547, 30
        %v5351 = vpop.permute.xlu0 %5350
        %5352 = vrot.lane.b32.xlu0 %v2683, 30
        %v5353 = vpop.permute.xlu0 %5352
        %5354 = vrot.lane.b32.xlu0 %v2819, 30
        %v5355 = vpop.permute.xlu0 %5354
        %5356 = vrot.lane.b32.xlu0 %v2955, 30
        %v5357 = vpop.permute.xlu0 %5356
        %5358 = vrot.lane.b32.xlu0 %v3091, 30
        %v5359 = vpop.permute.xlu0 %5358
        %5360 = vrot.lane.b32.xlu0 %v3227, 30
        %v5361 = vpop.permute.xlu0 %5360
        %5362 = vrot.lane.b32.xlu0 %v3363, 30
        %v5363 = vpop.permute.xlu0 %5362
        %5364 = vrot.lane.b32.xlu0 %v3499, 30
        %v5365 = vpop.permute.xlu0 %5364
        %5366 = vrot.lane.b32.xlu0 %v3635, 30
        %v5367 = vpop.permute.xlu0 %5366
        %5368 = vrot.lane.b32.xlu0 %v3771, 30
        %v5369 = vpop.permute.xlu0 %5368
        %5370 = vrot.lane.b32.xlu0 %v3907, 30
        %v5371 = vpop.permute.xlu0 %5370
        %5372 = vrot.lane.b32.xlu0 %v4043, 30
        %v5373 = vpop.permute.xlu0 %5372
        %5374 = vrot.lane.b32.xlu0 %v4179, 30
        %v5375 = vpop.permute.xlu0 %5374
        %5376 = vrot.lane.b32.xlu0 %v4248, 30
        %v5377 = vpop.permute.xlu0 %5376
        %5416 = vrot.lane.b32.xlu0 %v1868, 40
        %v5417 = vpop.permute.xlu0 %5416
        %5418 = vrot.lane.b32.xlu0 %v2004, 40
        %v5419 = vpop.permute.xlu0 %5418
        %5420 = vrot.lane.b32.xlu0 %v2140, 40
        %v5421 = vpop.permute.xlu0 %5420
        %5422 = vrot.lane.b32.xlu0 %v2276, 40
        %v5423 = vpop.permute.xlu0 %5422
        %5424 = vrot.lane.b32.xlu0 %v2412, 40
        %v5425 = vpop.permute.xlu0 %5424
        %5426 = vrot.lane.b32.xlu0 %v2548, 40
        %v5427 = vpop.permute.xlu0 %5426
        %5428 = vrot.lane.b32.xlu0 %v2684, 40
        %v5429 = vpop.permute.xlu0 %5428
        %5430 = vrot.lane.b32.xlu0 %v2820, 40
        %v5431 = vpop.permute.xlu0 %5430
        %5432 = vrot.lane.b32.xlu0 %v2956, 40
        %v5433 = vpop.permute.xlu0 %5432
        %5434 = vrot.lane.b32.xlu0 %v3092, 40
        %v5435 = vpop.permute.xlu0 %5434
        %5436 = vrot.lane.b32.xlu0 %v3228, 40
        %v5437 = vpop.permute.xlu0 %5436
        %5438 = vrot.lane.b32.xlu0 %v3364, 40
        %v5439 = vpop.permute.xlu0 %5438
        %5440 = vrot.lane.b32.xlu0 %v3500, 40
        %v5441 = vpop.permute.xlu0 %5440
        %5442 = vrot.lane.b32.xlu0 %v3636, 40
        %v5443 = vpop.permute.xlu0 %5442
        %5444 = vrot.lane.b32.xlu0 %v3772, 40
        %v5445 = vpop.permute.xlu0 %5444
        %5446 = vrot.lane.b32.xlu0 %v3908, 40
        %v5447 = vpop.permute.xlu0 %5446
        %5448 = vrot.lane.b32.xlu0 %v4044, 40
        %v5449 = vpop.permute.xlu0 %5448
        %5450 = vrot.lane.b32.xlu0 %v4180, 40
        %v5451 = vpop.permute.xlu0 %5450
        %5452 = vrot.lane.b32.xlu0 %v4239, 40
        %v5453 = vpop.permute.xlu0 %5452
        %5492 = vrot.lane.b32.xlu0 %v1869, 50
        %v5493 = vpop.permute.xlu0 %5492
        %5494 = vrot.lane.b32.xlu0 %v2005, 50
        %v5495 = vpop.permute.xlu0 %5494
        %5496 = vrot.lane.b32.xlu0 %v2141, 50
        %v5497 = vpop.permute.xlu0 %5496
        %5498 = vrot.lane.b32.xlu0 %v2277, 50
        %v5499 = vpop.permute.xlu0 %5498
        %5500 = vrot.lane.b32.xlu0 %v2413, 50
        %v5501 = vpop.permute.xlu0 %5500
        %5502 = vrot.lane.b32.xlu0 %v2549, 50
        %v5503 = vpop.permute.xlu0 %5502
        %5504 = vrot.lane.b32.xlu0 %v2685, 50
        %v5505 = vpop.permute.xlu0 %5504
        %5506 = vrot.lane.b32.xlu0 %v2821, 50
        %v5507 = vpop.permute.xlu0 %5506
        %5508 = vrot.lane.b32.xlu0 %v2957, 50
        %v5509 = vpop.permute.xlu0 %5508
        %5510 = vrot.lane.b32.xlu0 %v3093, 50
        %v5511 = vpop.permute.xlu0 %5510
        %5512 = vrot.lane.b32.xlu0 %v3229, 50
        %v5513 = vpop.permute.xlu0 %5512
        %5514 = vrot.lane.b32.xlu0 %v3365, 50
        %v5515 = vpop.permute.xlu0 %5514
        %5516 = vrot.lane.b32.xlu0 %v3501, 50
        %v5517 = vpop.permute.xlu0 %5516
        %5518 = vrot.lane.b32.xlu0 %v3637, 50
        %v5519 = vpop.permute.xlu0 %5518
        %5520 = vrot.lane.b32.xlu0 %v3773, 50
        %v5521 = vpop.permute.xlu0 %5520
        %5522 = vrot.lane.b32.xlu0 %v3909, 50
        %v5523 = vpop.permute.xlu0 %5522
        %5524 = vrot.lane.b32.xlu0 %v4045, 50
        %v5525 = vpop.permute.xlu0 %5524
        %5526 = vrot.lane.b32.xlu0 %v4181, 50
        %v5527 = vpop.permute.xlu0 %5526
        %5528 = vrot.lane.b32.xlu0 %v4249, 50
        %v5529 = vpop.permute.xlu0 %5528
        %5568 = vrot.lane.b32.xlu0 %v1870, 60
        %v5569 = vpop.permute.xlu0 %5568
        %5570 = vrot.lane.b32.xlu0 %v2006, 60
        %v5571 = vpop.permute.xlu0 %5570
        %5572 = vrot.lane.b32.xlu0 %v2142, 60
        %v5573 = vpop.permute.xlu0 %5572
        %5574 = vrot.lane.b32.xlu0 %v2278, 60
        %v5575 = vpop.permute.xlu0 %5574
        %5576 = vrot.lane.b32.xlu0 %v2414, 60
        %v5577 = vpop.permute.xlu0 %5576
        %5578 = vrot.lane.b32.xlu0 %v2550, 60
        %v5579 = vpop.permute.xlu0 %5578
        %5580 = vrot.lane.b32.xlu0 %v2686, 60
        %v5581 = vpop.permute.xlu0 %5580
        %5582 = vrot.lane.b32.xlu0 %v2822, 60
        %v5583 = vpop.permute.xlu0 %5582
        %5584 = vrot.lane.b32.xlu0 %v2958, 60
        %v5585 = vpop.permute.xlu0 %5584
        %5586 = vrot.lane.b32.xlu0 %v3094, 60
        %v5587 = vpop.permute.xlu0 %5586
        %5588 = vrot.lane.b32.xlu0 %v3230, 60
        %v5589 = vpop.permute.xlu0 %5588
        %5590 = vrot.lane.b32.xlu0 %v3366, 60
        %v5591 = vpop.permute.xlu0 %5590
        %5592 = vrot.lane.b32.xlu0 %v3502, 60
        %v5593 = vpop.permute.xlu0 %5592
        %5594 = vrot.lane.b32.xlu0 %v3638, 60
        %v5595 = vpop.permute.xlu0 %5594
        %5596 = vrot.lane.b32.xlu0 %v3774, 60
        %v5597 = vpop.permute.xlu0 %5596
        %5598 = vrot.lane.b32.xlu0 %v3910, 60
        %v5599 = vpop.permute.xlu0 %5598
        %5600 = vrot.lane.b32.xlu0 %v4046, 60
        %v5601 = vpop.permute.xlu0 %5600
        %5602 = vrot.lane.b32.xlu0 %v4182, 60
        %v5603 = vpop.permute.xlu0 %5602
        %5604 = vrot.lane.b32.xlu0 %v4246, 60
        %v5605 = vpop.permute.xlu0 %5604
        %5644 = vrot.lane.b32.xlu0 %v1871, 70
        %v5645 = vpop.permute.xlu0 %5644
        %5646 = vrot.lane.b32.xlu0 %v2007, 70
        %v5647 = vpop.permute.xlu0 %5646
        %5648 = vrot.lane.b32.xlu0 %v2143, 70
        %v5649 = vpop.permute.xlu0 %5648
        %5650 = vrot.lane.b32.xlu0 %v2279, 70
        %v5651 = vpop.permute.xlu0 %5650
        %5652 = vrot.lane.b32.xlu0 %v2415, 70
        %v5653 = vpop.permute.xlu0 %5652
        %5654 = vrot.lane.b32.xlu0 %v2551, 70
        %v5655 = vpop.permute.xlu0 %5654
        %5656 = vrot.lane.b32.xlu0 %v2687, 70
        %v5657 = vpop.permute.xlu0 %5656
        %5658 = vrot.lane.b32.xlu0 %v2823, 70
        %v5659 = vpop.permute.xlu0 %5658
        %5660 = vrot.lane.b32.xlu0 %v2959, 70
        %v5661 = vpop.permute.xlu0 %5660
        %5662 = vrot.lane.b32.xlu0 %v3095, 70
        %v5663 = vpop.permute.xlu0 %5662
        %5664 = vrot.lane.b32.xlu0 %v3231, 70
        %v5665 = vpop.permute.xlu0 %5664
        %5666 = vrot.lane.b32.xlu0 %v3367, 70
        %v5667 = vpop.permute.xlu0 %5666
        %5668 = vrot.lane.b32.xlu0 %v3503, 70
        %v5669 = vpop.permute.xlu0 %5668
        %5670 = vrot.lane.b32.xlu0 %v3639, 70
        %v5671 = vpop.permute.xlu0 %5670
        %5672 = vrot.lane.b32.xlu0 %v3775, 70
        %v5673 = vpop.permute.xlu0 %5672
        %5674 = vrot.lane.b32.xlu0 %v3911, 70
        %v5675 = vpop.permute.xlu0 %5674
        %5676 = vrot.lane.b32.xlu0 %v4047, 70
        %v5677 = vpop.permute.xlu0 %5676
        %5678 = vrot.lane.b32.xlu0 %v4183, 70
        %v5679 = vpop.permute.xlu0 %5678
        %5680 = vrot.lane.b32.xlu0 %v4250, 70
        %v5681 = vpop.permute.xlu0 %5680
        %5720 = vrot.lane.b32.xlu0 %v4299, 80
        %v5721 = vpop.permute.xlu0 %5720
        %5722 = vrot.lane.b32.xlu0 %v4349, 80
        %v5723 = vpop.permute.xlu0 %5722
        %5724 = vrot.lane.b32.xlu0 %v4399, 80
        %v5725 = vpop.permute.xlu0 %5724
        %5726 = vrot.lane.b32.xlu0 %v4449, 80
        %v5727 = vpop.permute.xlu0 %5726
        %5728 = vrot.lane.b32.xlu0 %v4499, 80
        %v5729 = vpop.permute.xlu0 %5728
        %5730 = vrot.lane.b32.xlu0 %v4549, 80
        %v5731 = vpop.permute.xlu0 %5730
        %5732 = vrot.lane.b32.xlu0 %v4599, 80
        %v5733 = vpop.permute.xlu0 %5732
        %5734 = vrot.lane.b32.xlu0 %v4649, 80
        %v5735 = vpop.permute.xlu0 %5734
        %5736 = vrot.lane.b32.xlu0 %v4699, 80
        %v5737 = vpop.permute.xlu0 %5736
        %5738 = vrot.lane.b32.xlu0 %v4749, 80
        %v5739 = vpop.permute.xlu0 %5738
        %5740 = vrot.lane.b32.xlu0 %v4799, 80
        %v5741 = vpop.permute.xlu0 %5740
        %5742 = vrot.lane.b32.xlu0 %v4849, 80
        %v5743 = vpop.permute.xlu0 %5742
        %5744 = vrot.lane.b32.xlu0 %v4899, 80
        %v5745 = vpop.permute.xlu0 %5744
        %5746 = vrot.lane.b32.xlu0 %v4949, 80
        %v5747 = vpop.permute.xlu0 %5746
        %5748 = vrot.lane.b32.xlu0 %v4999, 80
        %v5749 = vpop.permute.xlu0 %5748
        %5750 = vrot.lane.b32.xlu0 %v5049, 80
        %v5751 = vpop.permute.xlu0 %5750
        %5752 = vrot.lane.b32.xlu0 %v5099, 80
        %v5753 = vpop.permute.xlu0 %5752
        %5754 = vrot.lane.b32.xlu0 %v5149, 80
        %v5755 = vpop.permute.xlu0 %5754
        %5756 = vrot.lane.b32.xlu0 %v5167, 80
        %v5757 = vpop.permute.xlu0 %5756
        %5796 = vrot.lane.b32.xlu0 %v4300, 90
        %v5797 = vpop.permute.xlu0 %5796
        %5798 = vrot.lane.b32.xlu0 %v4350, 90
        %v5799 = vpop.permute.xlu0 %5798
        %5800 = vrot.lane.b32.xlu0 %v4400, 90
        %v5801 = vpop.permute.xlu0 %5800
        %5802 = vrot.lane.b32.xlu0 %v4450, 90
        %v5803 = vpop.permute.xlu0 %5802
        %5804 = vrot.lane.b32.xlu0 %v4500, 90
        %v5805 = vpop.permute.xlu0 %5804
        %5806 = vrot.lane.b32.xlu0 %v4550, 90
        %v5807 = vpop.permute.xlu0 %5806
        %5808 = vrot.lane.b32.xlu0 %v4600, 90
        %v5809 = vpop.permute.xlu0 %5808
        %5810 = vrot.lane.b32.xlu0 %v4650, 90
        %v5811 = vpop.permute.xlu0 %5810
        %5812 = vrot.lane.b32.xlu0 %v4700, 90
        %v5813 = vpop.permute.xlu0 %5812
        %5814 = vrot.lane.b32.xlu0 %v4750, 90
        %v5815 = vpop.permute.xlu0 %5814
        %5816 = vrot.lane.b32.xlu0 %v4800, 90
        %v5817 = vpop.permute.xlu0 %5816
        %5818 = vrot.lane.b32.xlu0 %v4850, 90
        %v5819 = vpop.permute.xlu0 %5818
        %5820 = vrot.lane.b32.xlu0 %v4900, 90
        %v5821 = vpop.permute.xlu0 %5820
        %5822 = vrot.lane.b32.xlu0 %v4950, 90
        %v5823 = vpop.permute.xlu0 %5822
        %5824 = vrot.lane.b32.xlu0 %v5000, 90
        %v5825 = vpop.permute.xlu0 %5824
        %5826 = vrot.lane.b32.xlu0 %v5050, 90
        %v5827 = vpop.permute.xlu0 %5826
        %5828 = vrot.lane.b32.xlu0 %v5100, 90
        %v5829 = vpop.permute.xlu0 %5828
        %5830 = vrot.lane.b32.xlu0 %v5150, 90
        %v5831 = vpop.permute.xlu0 %5830
        %5832 = vrot.lane.b32.xlu0 %v5168, 90
        %v5833 = vpop.permute.xlu0 %5832
        %vm5853 = vcmask 80896
        %v5854 = vsel %vm5853, %v1864, %v5189
        %v5855 = vsel %vm5853, %v2000, %v5191
        %v5856 = vsel %vm5853, %v2136, %v5193
        %v5857 = vsel %vm5853, %v2272, %v5195
        %v5858 = vsel %vm5853, %v2408, %v5197
        %v5859 = vsel %vm5853, %v2544, %v5199
        %v5860 = vsel %vm5853, %v2680, %v5201
        %v5861 = vsel %vm5853, %v2816, %v5203
        %v5862 = vsel %vm5853, %v2952, %v5205
        %v5863 = vsel %vm5853, %v3088, %v5207
        %v5864 = vsel %vm5853, %v3224, %v5209
        %v5865 = vsel %vm5853, %v3360, %v5211
        %v5866 = vsel %vm5853, %v3496, %v5213
        %v5867 = vsel %vm5853, %v3632, %v5215
        %v5868 = vsel %vm5853, %v3768, %v5217
        %v5869 = vsel %vm5853, %v3904, %v5219
        %v5870 = vsel %vm5853, %v4040, %v5221
        %v5871 = vsel %vm5853, %v4176, %v5223
        %v5872 = vsel %vm5853, %v4223, %v5225
        %vm5873 = vcmask 162816
        %v5874 = vsel %vm5873, %v5854, %v5265
        %v5875 = vsel %vm5873, %v5855, %v5267
        %v5876 = vsel %vm5873, %v5856, %v5269
        %v5877 = vsel %vm5873, %v5857, %v5271
        %v5878 = vsel %vm5873, %v5858, %v5273
        %v5879 = vsel %vm5873, %v5859, %v5275
        %v5880 = vsel %vm5873, %v5860, %v5277
        %v5881 = vsel %vm5873, %v5861, %v5279
        %v5882 = vsel %vm5873, %v5862, %v5281
        %v5883 = vsel %vm5873, %v5863, %v5283
        %v5884 = vsel %vm5873, %v5864, %v5285
        %v5885 = vsel %vm5873, %v5865, %v5287
        %v5886 = vsel %vm5873, %v5866, %v5289
        %v5887 = vsel %vm5873, %v5867, %v5291
        %v5888 = vsel %vm5873, %v5868, %v5293
        %v5889 = vsel %vm5873, %v5869, %v5295
        %v5890 = vsel %vm5873, %v5870, %v5297
        %v5891 = vsel %vm5873, %v5871, %v5299
        %v5892 = vsel %vm5873, %v5872, %v5301
        %vm5893 = vcmask 244736
        %v5894 = vsel %vm5893, %v5874, %v5341
        %v5895 = vsel %vm5893, %v5875, %v5343
        %v5896 = vsel %vm5893, %v5876, %v5345
        %v5897 = vsel %vm5893, %v5877, %v5347
        %v5898 = vsel %vm5893, %v5878, %v5349
        %v5899 = vsel %vm5893, %v5879, %v5351
        %v5900 = vsel %vm5893, %v5880, %v5353
        %v5901 = vsel %vm5893, %v5881, %v5355
        %v5902 = vsel %vm5893, %v5882, %v5357
        %v5903 = vsel %vm5893, %v5883, %v5359
        %v5904 = vsel %vm5893, %v5884, %v5361
        %v5905 = vsel %vm5893, %v5885, %v5363
        %v5906 = vsel %vm5893, %v5886, %v5365
        %v5907 = vsel %vm5893, %v5887, %v5367
        %v5908 = vsel %vm5893, %v5888, %v5369
        %v5909 = vsel %vm5893, %v5889, %v5371
        %v5910 = vsel %vm5893, %v5890, %v5373
        %v5911 = vsel %vm5893, %v5891, %v5375
        %v5912 = vsel %vm5893, %v5892, %v5377
        %vm5913 = vcmask 326656
        %v5914 = vsel %vm5913, %v5894, %v5417
        %v5915 = vsel %vm5913, %v5895, %v5419
        %v5916 = vsel %vm5913, %v5896, %v5421
        %v5917 = vsel %vm5913, %v5897, %v5423
        %v5918 = vsel %vm5913, %v5898, %v5425
        %v5919 = vsel %vm5913, %v5899, %v5427
        %v5920 = vsel %vm5913, %v5900, %v5429
        %v5921 = vsel %vm5913, %v5901, %v5431
        %v5922 = vsel %vm5913, %v5902, %v5433
        %v5923 = vsel %vm5913, %v5903, %v5435
        %v5924 = vsel %vm5913, %v5904, %v5437
        %v5925 = vsel %vm5913, %v5905, %v5439
        %v5926 = vsel %vm5913, %v5906, %v5441
        %v5927 = vsel %vm5913, %v5907, %v5443
        %v5928 = vsel %vm5913, %v5908, %v5445
        %v5929 = vsel %vm5913, %v5909, %v5447
        %v5930 = vsel %vm5913, %v5910, %v5449
        %v5931 = vsel %vm5913, %v5911, %v5451
        %v5932 = vsel %vm5913, %v5912, %v5453
        %vm5933 = vcmask 408576
        %v5934 = vsel %vm5933, %v5914, %v5493
        %v5935 = vsel %vm5933, %v5915, %v5495
        %v5936 = vsel %vm5933, %v5916, %v5497
        %v5937 = vsel %vm5933, %v5917, %v5499
        %v5938 = vsel %vm5933, %v5918, %v5501
        %v5939 = vsel %vm5933, %v5919, %v5503
        %v5940 = vsel %vm5933, %v5920, %v5505
        %v5941 = vsel %vm5933, %v5921, %v5507
        %v5942 = vsel %vm5933, %v5922, %v5509
        %v5943 = vsel %vm5933, %v5923, %v5511
        %v5944 = vsel %vm5933, %v5924, %v5513
        %v5945 = vsel %vm5933, %v5925, %v5515
        %v5946 = vsel %vm5933, %v5926, %v5517
        %v5947 = vsel %vm5933, %v5927, %v5519
        %v5948 = vsel %vm5933, %v5928, %v5521
        %v5949 = vsel %vm5933, %v5929, %v5523
        %v5950 = vsel %vm5933, %v5930, %v5525
        %v5951 = vsel %vm5933, %v5931, %v5527
        %v5952 = vsel %vm5933, %v5932, %v5529
        %vm5953 = vcmask 490496
        %v5954 = vsel %vm5953, %v5934, %v5569
        %v5955 = vsel %vm5953, %v5935, %v5571
        %v5956 = vsel %vm5953, %v5936, %v5573
        %v5957 = vsel %vm5953, %v5937, %v5575
        %v5958 = vsel %vm5953, %v5938, %v5577
        %v5959 = vsel %vm5953, %v5939, %v5579
        %v5960 = vsel %vm5953, %v5940, %v5581
        %v5961 = vsel %vm5953, %v5941, %v5583
        %v5962 = vsel %vm5953, %v5942, %v5585
        %v5963 = vsel %vm5953, %v5943, %v5587
        %v5964 = vsel %vm5953, %v5944, %v5589
        %v5965 = vsel %vm5953, %v5945, %v5591
        %v5966 = vsel %vm5953, %v5946, %v5593
        %v5967 = vsel %vm5953, %v5947, %v5595
        %v5968 = vsel %vm5953, %v5948, %v5597
        %v5969 = vsel %vm5953, %v5949, %v5599
        %v5970 = vsel %vm5953, %v5950, %v5601
        %v5971 = vsel %vm5953, %v5951, %v5603
        %v5972 = vsel %vm5953, %v5952, %v5605
        %vm5973 = vcmask 572416
        %v5974 = vsel %vm5973, %v5954, %v5645
        %v5975 = vsel %vm5973, %v5955, %v5647
        %v5976 = vsel %vm5973, %v5956, %v5649
        %v5977 = vsel %vm5973, %v5957, %v5651
        %v5978 = vsel %vm5973, %v5958, %v5653
        %v5979 = vsel %vm5973, %v5959, %v5655
        %v5980 = vsel %vm5973, %v5960, %v5657
        %v5981 = vsel %vm5973, %v5961, %v5659
        %v5982 = vsel %vm5973, %v5962, %v5661
        %v5983 = vsel %vm5973, %v5963, %v5663
        %v5984 = vsel %vm5973, %v5964, %v5665
        %v5985 = vsel %vm5973, %v5965, %v5667
        %v5986 = vsel %vm5973, %v5966, %v5669
        %v5987 = vsel %vm5973, %v5967, %v5671
        %v5988 = vsel %vm5973, %v5968, %v5673
        %v5989 = vsel %vm5973, %v5969, %v5675
        %v5990 = vsel %vm5973, %v5970, %v5677
        %v5991 = vsel %vm5973, %v5971, %v5679
        %v5992 = vsel %vm5973, %v5972, %v5681
        %vm5993 = vcmask 654336
        %v5994 = vsel %vm5993, %v5974, %v5721
        %v5995 = vsel %vm5993, %v5975, %v5723
        %v5996 = vsel %vm5993, %v5976, %v5725
        %v5997 = vsel %vm5993, %v5977, %v5727
        %v5998 = vsel %vm5993, %v5978, %v5729
        %v5999 = vsel %vm5993, %v5979, %v5731
        %v6000 = vsel %vm5993, %v5980, %v5733
        %v6001 = vsel %vm5993, %v5981, %v5735
        %v6002 = vsel %vm5993, %v5982, %v5737
        %v6003 = vsel %vm5993, %v5983, %v5739
        %v6004 = vsel %vm5993, %v5984, %v5741
        %v6005 = vsel %vm5993, %v5985, %v5743
        %v6006 = vsel %vm5993, %v5986, %v5745
        %v6007 = vsel %vm5993, %v5987, %v5747
        %v6008 = vsel %vm5993, %v5988, %v5749
        %v6009 = vsel %vm5993, %v5989, %v5751
        %v6010 = vsel %vm5993, %v5990, %v5753
        %v6011 = vsel %vm5993, %v5991, %v5755
        %v6012 = vsel %vm5993, %v5992, %v5757
        %vm6013 = vcmask 736256
        %v6014 = vsel %vm6013, %v5994, %v5797
        %v6015 = vsel %vm6013, %v5995, %v5799
        %v6016 = vsel %vm6013, %v5996, %v5801
        %v6017 = vsel %vm6013, %v5997, %v5803
        %v6018 = vsel %vm6013, %v5998, %v5805
        %v6019 = vsel %vm6013, %v5999, %v5807
        %v6020 = vsel %vm6013, %v6000, %v5809
        %v6021 = vsel %vm6013, %v6001, %v5811
        %v6022 = vsel %vm6013, %v6002, %v5813
        %v6023 = vsel %vm6013, %v6003, %v5815
        %v6024 = vsel %vm6013, %v6004, %v5817
        %v6025 = vsel %vm6013, %v6005, %v5819
        %v6026 = vsel %vm6013, %v6006, %v5821
        %v6027 = vsel %vm6013, %v6007, %v5823
        %v6028 = vsel %vm6013, %v6008, %v5825
        %v6029 = vsel %vm6013, %v6009, %v5827
        %v6030 = vsel %vm6013, %v6010, %v5829
        %v6031 = vsel %vm6013, %v6011, %v5831
        %v6032 = vsel %vm6013, %v6012, %v5833
        %v6033 = vld [vmem:[%s1] sm:$0xff]
        %v6034 = vld [vmem:[%s1 + $0x8] sm:$0xff]
        %v6035 = vld [vmem:[%s2] sm:$0xff]
        %6037 = vset.pattern.permute.xlu0 0
        %6038 = vperm.xlu0 %6037, %v6035
        %v6039 = vpop.permute.xlu0 %6038
        %vm6041 = vcmask 154624
        %v6043 = vsel %vm6041, %v6034, 0
        %vm6045 = vcmask 1042432
        %v6047 = vsel %vm6045, %v6032, 0
        %6049 = vmatprep.subr.mxu0 0.0
        %6050 = vmatpush1.msra.mxu0 %v6029
        %6051 = vmatprep.subr.mxu0 0.0
        %6052 = vmatpush1.msra.mxu0 %v6028
        %6053 = vmatprep.subr.mxu0 0.0
        %6054 = vmatpush1.msra.mxu0 %v6027
        %6055 = vmatprep.subr.mxu0 0.0
        %6056 = vmatpush1.msra.mxu0 %v6026
        %6057 = vmatprep.subr.mxu0 0.0
        %6058 = vmatpush1.msra.mxu0 %v6025
        %6059 = vmatprep.subr.mxu0 0.0
        %6060 = vmatpush1.msra.mxu0 %v6024
        %6061 = vmatprep.subr.mxu0 0.0
        %6062 = vmatpush1.msra.mxu0 %v6023
        %6063 = vmatprep.subr.mxu0 0.0
        %6064 = vmatpush1.msra.mxu0 %v6022
        %6065 = vmatprep.subr.mxu0 0.0
        %6066 = vmatpush1.msra.mxu0 %v6021
        %6067 = vmatprep.subr.mxu0 0.0
        %6068 = vmatpush1.msra.mxu0 %v6020
        %6069 = vmatprep.subr.mxu0 0.0
        %6070 = vmatpush1.msra.mxu0 %v6019
        %6071 = vmatprep.subr.mxu0 0.0
        %6072 = vmatpush1.msra.mxu0 %v6018
        %6073 = vmatprep.subr.mxu0 0.0
        %6074 = vmatpush1.msra.mxu0 %v6017
        %6075 = vmatprep.subr.mxu0 0.0
        %6076 = vmatpush1.msra.mxu0 %v6016
        %6077 = vmatprep.subr.mxu0 0.0
        %6078 = vmatpush1.msra.mxu0 %v6015
        %6079 = vmatprep.subr.mxu0 0.0
        %6080 = vmatpush1.msra.mxu0 %v6014
        %6081 = vmatprep.subr.mxu0 0.0
        %6082 = vmatpush2.msra.mxu0 0.0
        %6083 = vmatprep.subr.mxu0 0.0
        %6084 = vmatpush2.msra.mxu0 0.0
        %6085 = vmatprep.subr.mxu0 0.0
        %6086 = vmatpush2.msra.mxu0 0.0
        %6087 = vmatprep.subr.mxu0 0.0
        %6088 = vmatpush2.msra.mxu0 0.0
        %6089 = vmatprep.subr.mxu0 0.0
        %6090 = vmatpush2.msra.mxu0 0.0
        %6091 = vmatprep.subr.mxu0 0.0
        %6092 = vmatpush2.msra.mxu0 0.0
        %6093 = vmatprep.subr.mxu0 0.0
        %6094 = vmatpush2.msra.mxu0 0.0
        %6095 = vmatprep.subr.mxu0 0.0
        %6096 = vmatpush2.msra.mxu0 0.0
        %6097 = vmatprep.subr.mxu0 0.0
        %6098 = vmatpush2.msra.mxu0 0.0
        %6099 = vmatprep.subr.mxu0 0.0
        %6100 = vmatpush2.msra.mxu0 0.0
        %6101 = vmatprep.subr.mxu0 0.0
        %6102 = vmatpush2.msra.mxu0 0.0
        %6103 = vmatprep.subr.mxu0 0.0
        %6104 = vmatpush2.msra.mxu0 0.0
        %6105 = vmatprep.subr.mxu0 0.0
        %6106 = vmatpush2.msra.mxu0 0.0
        %6107 = vmatprep.subr.mxu0 0.0
        %6108 = vmatpush2.msra.mxu0 %v6047
        %6109 = vmatprep.subr.mxu0 0.0
        %6110 = vmatpush2.msra.mxu0 %v6031
        %6111 = vmatprep.subr.mxu0 0.0
        %6112 = vmatpush2.msra.mxu0 %v6030
        %6113 = vmatprep.mubr.f32.mxu0 %v6043
        %6114 = vmatmul.mubr.f32.gmra.mxu0 %v6033
        %v6115 = vpop.f32.mrf.mxu0
        %v6116 = vadd.f32 %v6039, %v6115
        %v6117 = vpop.f32.mrf.mxu0
        %6118 = vdwg.mxu0
        %v6119 = vmax.f32 %v6116, 0.4226538
        %v6120 = vmin.f32 %v6119, 0.3873087
        %v6121 = vld [vmem:[#allocation5] sm:$0xff]
        %v6122 = vld [vmem:[%s4] sm:$0xff]
        %6124 = vset.pattern.permute.xlu0 0
        %6125 = vperm.xlu0 %6124, %v6122
        %v6126 = vpop.permute.xlu0 %6125
        %vm6128 = vcmask 64512
        %v6130 = vsel %vm6128, %v6121, 0
        %6132 = vmatprep.subr.mxu0 0.0
        %6133 = vmatpush1.msra.mxu0 0.0
        %6134 = vmatprep.subr.mxu0 0.0
        %6135 = vmatpush1.msra.mxu0 0.0
        %6136 = vmatprep.subr.mxu0 0.0
        %6137 = vmatpush1.msra.mxu0 0.0
        %6138 = vmatprep.subr.mxu0 0.0
        %6139 = vmatpush1.msra.mxu0 0.0
        %6140 = vmatprep.subr.mxu0 0.0
        %6141 = vmatpush1.msra.mxu0 0.0
        %6142 = vmatprep.subr.mxu0 0.0
        %6143 = vmatpush1.msra.mxu0 0.0
        %6144 = vmatprep.subr.mxu0 0.0
        %6145 = vmatpush1.msra.mxu0 0.0
        %6146 = vmatprep.subr.mxu0 0.0
        %6147 = vmatpush1.msra.mxu0 0.0
        %6148 = vmatprep.subr.mxu0 0.0
        %6149 = vmatpush1.msra.mxu0 0.0
        %6150 = vmatprep.subr.mxu0 0.0
        %6151 = vmatpush1.msra.mxu0 0.0
        %6152 = vmatprep.subr.mxu0 0.0
        %6153 = vmatpush1.msra.mxu0 0.0
        %6154 = vmatprep.subr.mxu0 0.0
        %6155 = vmatpush1.msra.mxu0 0.0
        %6156 = vmatprep.subr.mxu0 0.0
        %6157 = vmatpush1.msra.mxu0 0.0
        %6158 = vmatprep.subr.mxu0 0.0
        %6159 = vmatpush1.msra.mxu0 0.0
        %6160 = vmatprep.subr.mxu0 0.0
        %6161 = vmatpush1.msra.mxu0 0.0
        %6162 = vmatprep.subr.mxu0 0.0
        %6163 = vmatpush1.msra.mxu0 %v6120
        %6164 = vmatprep.subr.mxu0 0.0
        %6165 = vmatpush2.msra.mxu0 0.0
        %6166 = vmatprep.subr.mxu0 0.0
        %6167 = vmatpush2.msra.mxu0 0.0
        %6168 = vmatprep.subr.mxu0 0.0
        %6169 = vmatpush2.msra.mxu0 0.0
        %6170 = vmatprep.subr.mxu0 0.0
        %6171 = vmatpush2.msra.mxu0 0.0
        %6172 = vmatprep.subr.mxu0 0.0
        %6173 = vmatpush2.msra.mxu0 0.0
        %6174 = vmatprep.subr.mxu0 0.0
        %6175 = vmatpush2.msra.mxu0 0.0
        %6176 = vmatprep.subr.mxu0 0.0
        %6177 = vmatpush2.msra.mxu0 0.0
        %6178 = vmatprep.subr.mxu0 0.0
        %6179 = vmatpush2.msra.mxu0 0.0
        %6180 = vmatprep.subr.mxu0 0.0
        %6181 = vmatpush2.msra.mxu0 0.0
        %6182 = vmatprep.subr.mxu0 0.0
        %6183 = vmatpush2.msra.mxu0 0.0
        %6184 = vmatprep.subr.mxu0 0.0
        %6185 = vmatpush2.msra.mxu0 0.0
        %6186 = vmatprep.subr.mxu0 0.0
        %6187 = vmatpush2.msra.mxu0 0.0
        %6188 = vmatprep.subr.mxu0 0.0
        %6189 = vmatpush2.msra.mxu0 0.0
        %6190 = vmatprep.subr.mxu0 0.0
        %6191 = vmatpush2.msra.mxu0 0.0
        %6192 = vmatprep.subr.mxu0 0.0
        %6193 = vmatpush2.msra.mxu0 0.0
        %6194 = vmatprep.subr.mxu0 0.0
        %6195 = vmatpush2.msra.mxu0 0.0
        %6196 = vmatprep.mubr.f32.mxu0 0.0
        %6197 = vmatmul.mubr.f32.gmra.mxu0 %v6130
        %v6198 = vpop.f32.mrf.mxu0
        %v6199 = vadd.f32 %v6126, %v6198
        %v6200 = vpop.f32.mrf.mxu0
        %6201 = vdwg.mxu0
        %v6202 = vmax.f32 %v6199, 0.855276
        %v6203 = vmin.f32 %v6202, 0.45974174
        %vm6204 = vcmask 818176
        %6205 = vst.msk [vmem:[%s255] sm:$0xff] %vm6204, %v6203
        %s6206 = sand.u32 %s141, 1
        %s6207 = scalar_lea.sflag [#allocation4], %s6206
        %s6208 = sand.u32 %s141, 1
        %s6209 = smul.addr %s6208, 8
        %s6210 = scalar_lea.vmem [#allocation7], %s6209
        // Predicated region
        $region49: #{tpu_custom_call.1} parent=39 // pred_check
          %p6211 = pneg %p151
        $region50: #{tpu_custom_call.1} parent=39 // pred_check_branch
          %6213 = sbr.rel (%p6211) target = $region52
        $region51: #{tpu_custom_call.1} parent=39 // pred_region
          %s6215 = ssub.s32 128, 128
          %6216 = vsyncadd %s6207, %s6215
          %s6217 = smul.addr %s23, 128
          %s6218 = scalar_lea.hbm %s5, %s6217
          %s6220 = sshll.u32 %s6210, 4
          %s6221 = int_to_ptr.vmem [resolvable:$true] %s6220
          %6223 = dma.vmem_to_hbm [thread:$0]  %s6221, 128, %s6218, %s6207
        $region52: #{tpu_custom_call.1} parent=39 // pred_fallthru
          _
      $region40: #{tpu_custom_call.1} parent=5 // pred_fallthru
        _
      %p6224 = scmp.le.s32.totalorder 2, %s18
      // Predicated region
      $region53: #{tpu_custom_call.1} parent=5 // pred_check
        %p6225 = pneg %p6224
      $region54: #{tpu_custom_call.1} parent=5 // pred_check_branch
        %6227 = sbr.rel (%p6225) target = $region56
      $region55: #{tpu_custom_call.1} parent=5 // pred_region
        %s6228 = ssub.s32 %s18, 2
        // Predicated region
        $region57: #{tpu_custom_call.1} parent=55 // pred_check
          %p6229 = pneg %p157
        $region58: #{tpu_custom_call.1} parent=55 // pred_check_branch
          %6231 = sbr.rel (%p6229) target = $region60
        $region59: #{tpu_custom_call.1} parent=55 // pred_region
          %s6232 = sand.u32 %s142, 1
          %s6233 = scalar_lea.sflag [#allocation4], %s6232
          %s6234 = sand.u32 %s142, 1
          %s6235 = smul.addr %s6234, 8
          %s6236 = scalar_lea.vmem [#allocation7], %s6235
          %6237 = dma.done %s6233, 128
        $region60: #{tpu_custom_call.1} parent=55 // pred_fallthru
          _
      $region56: #{tpu_custom_call.1} parent=5 // pred_fallthru
        _
    $region6: #{tpu_custom_call.1} parent=1 // loop_footer
      %s22 = sadd.s32 1, %s18
    $region7: #{tpu_custom_call.1} parent=1 // loop_footer_branch
      %17 = sbr.rel target = $region3
    $region8: #{tpu_custom_call.1} parent=1 // loop_exit
      _
    %6238 = vsyncpa [#allocation3], 1
    %s6239 = scalar_lea.sflag [#allocation3], 1
    %6240 = vsyncpa %s6239, 1
    %6241 = vsyncpa [#allocation6], 1
    %6242 = vsyncpa [#allocation4], 1
    %s6243 = scalar_lea.sflag [#allocation4], 1
    %6244 = vsyncpa %s6243, 1

</llo_original>
